<compile_context>
chip_gen: v7x
topology: tpu7x:2x2x1
jax: 0.10.0
libtpu: 0.0.40
codegen_flags: <defaults>
</compile_context>

<pallas_src>
import functools
import math

import jax
import jax.numpy as jnp
import numpy as np
from jax import lax
from jax.experimental import pallas as pl
from jax.experimental.pallas import tpu as pltpu

DIM_IN, DIM_SH, DIM_OUT = 5, 4, 8
EDGE_ATTR_DIM = 8          # also the radial-MLP hidden width (ScalarMLP(hidden=[edge_attr_dim]))
WEIGHT_NUMEL = 12
# feature-major edge slab rows: edge_attr(8) | x_src(5) | sh(4)  ->  17 rows
F_SLAB = EDGE_ATTR_DIM + DIM_IN + DIM_SH
INV_SQRT3 = 1.0 / math.sqrt(3.0)


def conv_edge_kernel(start_ref, count_ref, feat_ref, aux_ref,
                     w1_ref, b1_ref, w2_ref, b2_ref, out_ref, *, scatter_dtype):
    """Per (node-tile, edge-tile-offset) step: radial MLP -> weighted TP -> scatter-mean.

    Layout is feature-major: features on sublanes, edges / nodes on the 128-lane axis.
      start_ref/count_ref : SMEM [num_node_tiles] int32  per-node-tile edge-tile ranges
      feat_ref : [17, tile_e] bf16  rows = [edge_attr(8), x0(2), x1(3), s0(1), s1(3)]
      aux_ref  : [ 2, tile_e] f32   rows = [dst (as f32), 1/in-degree(dst)]
      out_ref  : [ 8, tile_n] f32   lane-dense accumulator, resident across the edge axis
    """
    nk = pl.program_id(0)          # node-tile index ("parallel")
    ek = pl.program_id(1)          # edge-tile offset within this node tile ("arbitrary")

    @pl.when(ek == 0)
    def _():
        out_ref[...] = jnp.zeros_like(out_ref)

    @pl.when(ek < count_ref[nk])   # skip padded / empty edge-tile slots
    def _():
        feat = feat_ref[...].astype(jnp.float32)            # [17, tE] (bf16 is DMA format only)
        aux = aux_ref[...]                                  # [ 2, tE] f32

        ea = feat[0:8]                                      # edge_attr: aligned 8-row MXU operand
        x0 = feat[8:10]                                     # 2x0e node scalars
        x1 = feat[10:13]                                    # 1x1o node vector
        s0 = feat[13:14]                                    # 1x0e sh scalar
        s1 = feat[14:17]                                    # 1x1o sh vector

        # ---- radial MLP: Linear -> SiLU -> Linear (biases as [·,1] broadcast adds) ----
        z = jnp.dot(w1_ref[...], ea, preferred_element_type=jnp.float32) + b1_ref[...]   # [8, tE]
        h = z * jax.nn.sigmoid(z)                                                         # SiLU (EUP)
        wts = jnp.dot(w2_ref[...], h, preferred_element_type=jnp.float32) + b2_ref[...]   # [12, tE]

        # ---- externally-weighted FullyConnectedTensorProduct (fixed irreps) ----
        # paths: A (0e x 0e -> 0e), B (0e x 1o -> 1o), C (1o x 0e -> 1o), D (1o x 1o -> 0e)
        w_A = wts[0:2] * x0[0:1] + wts[2:4] * x0[1:2]       # [2, tE]
        w_B = wts[4:6] * x0[0:1] + wts[6:8] * x0[1:2]       # [2, tE]
        w_C = wts[8:10]                                     # [2, tE]
        w_D = wts[10:12]                                    # [2, tE]

        x1_dot_s1 = jnp.sum(x1 * s1, axis=0, keepdims=True)  # [1, tE]  (XLU reduce)
        x1_s0 = x1 * s0                                      # [3, tE]
        inv = aux[1:2]                                       # [1, tE]  per-edge 1/in-degree(dst)

        # out_ij [8, tE], assembled as a value (no VMEM scratch round-trip), with the
        # mean-normalization folded in per edge.
        oij = jnp.concatenate([
            INV_SQRT3 * (w_A * s0) + (INV_SQRT3 * INV_SQRT3) * (w_D * x1_dot_s1),   # 2x0e
            INV_SQRT3 * (w_B[0:1] * s1 + w_C[0:1] * x1_s0),                         # 1x1o (out 0)
            INV_SQRT3 * (w_B[1:2] * s1 + w_C[1:2] * x1_s0),                         # 1x1o (out 1)
        ], axis=0) * inv                                                             # [8, tE]

        # ---- scatter-mean: cheap one-hot(dst) vs loop-invariant row iota, MXU accumulate ----
        tile_n = out_ref.shape[1]
        dst_local = aux[0:1].astype(jnp.int32) - nk * tile_n          # [1, tE] (pad dst=-1 never hits)
        row_ids = lax.broadcasted_iota(jnp.int32, (tile_n, 1), 0)     # [tN, 1] loop-invariant
        onehot = (row_ids == dst_local).astype(scatter_dtype)         # [tN, tE]

        # out[8, tN] += oij[8, tE] @ onehot^T   (NT contraction, f32 accumulation)
        out_ref[...] += lax.dot_general(
            oij.astype(scatter_dtype), onehot,
            dimension_numbers=(((1,), (1,)), ((), ())),
            preferred_element_type=jnp.float32)


def conv_forward(node_attr, edge_index, edge_attr, edge_sh, params, *,
                 tile_e=None, tile_n=128, stream_dtype=jnp.bfloat16,
                 scatter_in_bf16=False, max_edge_tiles_per_node_tile=None):
    """JAX wrapper: gather / degree / sort-by-dst glue, feature-major packing, tiled kernel.

    Edges are sorted by destination; per-node-tile edge-tile ranges are scalar-prefetched so
    each node tile only streams its own edges (O(E) total edge work).

    Returns out: [N, DIM_OUT] float32.  stream_dtype=jnp.float32 gives exact f32 streaming;
    scatter_in_bf16=True halves one-hot traffic / MXU pushes (~3e-3 rel per-edge rounding).
    max_edge_tiles_per_node_tile: static upper bound on edge tiles per node tile; required if
    this wrapper is jitted (otherwise it is derived from the data, which forces a host sync).
    """
    N = node_attr.shape[0]
    E = edge_attr.shape[0]
    src, dst = edge_index[0], edge_index[1]

    if tile_e is None:
        # small graphs: one edge tile; large graphs: sweep 1024-4096 (v5e: stay <= 4096).
        tile_e = min(2048, pl.cdiv(E, 128) * 128)
    E_pad = pl.cdiv(E, tile_e) * tile_e
    e_tiles = E_pad // tile_e
    num_n_tiles = pl.cdiv(N, tile_n)       # keep >= 2 node tiles where possible (v7x megacore)
    N_pad = num_n_tiles * tile_n
    pad_e = E_pad - E

    # ---- glue (plain JAX): per-edge 1/in-degree of destination, sort edges by dst ----
    counts = jax.ops.segment_sum(jnp.ones((E,), jnp.float32), dst, num_segments=N)
    inv_node = 1.0 / jnp.maximum(counts, 1.0)

    order = jnp.argsort(dst)
    src_s = src[order]
    dst_s = dst[order]
    x_src = node_attr[src_s].astype(jnp.float32)                                 # [E, 5]
    ea_s = edge_attr[order].astype(jnp.float32)                                  # [E, 8]
    sh_s = edge_sh[order].astype(jnp.float32)                                    # [E, 4]
    inv_s = inv_node[dst_s]                                                      # [E]

    # ---- per-node-tile edge-tile ranges (MoE-group-offset style scalar prefetch) ----
    tix = jnp.arange(num_n_tiles, dtype=jnp.int32)
    node_lo = jnp.searchsorted(dst_s, tix * tile_n, side='left')
    node_hi = jnp.searchsorted(dst_s, (tix + 1) * tile_n, side='left')
    tile_start = (node_lo // tile_e).astype(jnp.int32)
    tile_end = ((node_hi + tile_e - 1) // tile_e).astype(jnp.int32)
    tile_count = jnp.where(node_hi > node_lo, tile_end - tile_start, 0).astype(jnp.int32)

    if max_edge_tiles_per_node_tile is None:
        # data-dependent grid extent; needs concrete inputs (host sync).  Pass an explicit
        # static bound when jitting this wrapper.
        k_max = max(int(jnp.max(tile_count)), 1)
    else:
        k_max = int(max_edge_tiles_per_node_tile)

    # fused feature-major edge slab (one DMA stream), edge_attr first (aligned 8-row group):
    # [edge_attr; x_src; sh] -> [17, E_pad]
    feat = jnp.concatenate([ea_s, x_src, sh_s], axis=1).T                        # [17, E]
    feat = jnp.pad(feat, ((0, 0), (0, pad_e))).astype(stream_dtype)              # [17, E_pad]

    # aux slab (f32): destination index (as f32) and 1/in-degree; padded edges get dst = -1
    # (never matches any node row) and inv = 0.
    # TODO(synk): dst rides the f32 aux slab (exact only for N < 2^24); switch it to a
    # separate int32 stream for very large graphs.
    dst_f = jnp.pad(dst_s.astype(jnp.float32), (0, pad_e), constant_values=-1.0)
    inv_f = jnp.pad(inv_s, (0, pad_e))
    aux = jnp.stack([dst_f, inv_f], axis=0)                                      # [2, E_pad]

    # radial-MLP params, transposed to feature-major; biases as [·, 1] broadcast columns.
    w1, b1, w2, b2 = params
    w1t = w1.T.astype(jnp.float32)                                               # [8, 8]
    b1c = jnp.reshape(b1, (-1, 1)).astype(jnp.float32)                           # [8, 1]
    w2t = w2.T.astype(jnp.float32)                                               # [12, 8]
    b2c = jnp.reshape(b2, (-1, 1)).astype(jnp.float32)                           # [12, 1]

    scatter_dtype = jnp.bfloat16 if scatter_in_bf16 else jnp.float32
    kernel = functools.partial(conv_edge_kernel, scatter_dtype=scatter_dtype)

    def edge_map(n, k, start_ref, count_ref):
        # visit only this node tile's edge tiles; clamp for the pl.when-skipped slots.
        return (0, jnp.minimum(start_ref[n] + k, e_tiles - 1))

    def const_map(n, k, start_ref, count_ref):
        return (0, 0)

    out_fm = pl.pallas_call(
        kernel,
        out_shape=jax.ShapeDtypeStruct((DIM_OUT, N_pad), jnp.float32),
        grid_spec=pltpu.PrefetchScalarGridSpec(
            num_scalar_prefetch=2,                     # tile_start, tile_count -> SMEM
            grid=(num_n_tiles, k_max),                 # (node tiles, edge tiles per node tile)
            in_specs=[
                pl.BlockSpec((F_SLAB, tile_e), edge_map),                        # fused edge slab
                pl.BlockSpec((2, tile_e), edge_map),                             # dst + 1/count
                pl.BlockSpec((EDGE_ATTR_DIM, EDGE_ATTR_DIM), const_map),         # w1^T
                pl.BlockSpec((EDGE_ATTR_DIM, 1), const_map),                     # b1
                pl.BlockSpec((WEIGHT_NUMEL, EDGE_ATTR_DIM), const_map),          # w2^T
                pl.BlockSpec((WEIGHT_NUMEL, 1), const_map),                      # b2
            ],
            out_specs=pl.BlockSpec((DIM_OUT, tile_n),
                                   lambda n, k, s, c: (0, n)),                   # lane-dense acc
        ),
        compiler_params=pltpu.CompilerParams(
            dimension_semantics=("parallel", "arbitrary")),
    )(tile_start, tile_count, feat, aux, w1t, b1c, w2t, b2c)

    return out_fm[:, :N].T                                                       # [N, 8]


# ---------------- pure-JAX reference (einsum over an explicit CG basis) -------------
def build_basis():
    basis = np.zeros((WEIGHT_NUMEL, DIM_IN, DIM_SH, DIM_OUT), np.float32)
    # A: 0e(x,u) x 0e(sh) -> 0e(out,w)
    for u in range(2):
        for wo in range(2):
            basis[u * 2 + wo, u, 0, wo] = INV_SQRT3
    # B: 0e(x,u) x 1o(sh) -> 1o(out,w)
    for u in range(2):
        for wo in range(2):
            for m in range(3):
                basis[4 + u * 2 + wo, u, 1 + m, 2 + wo * 3 + m] = INV_SQRT3
    # C: 1o(x) x 0e(sh) -> 1o(out,w)
    for wo in range(2):
        for m in range(3):
            basis[8 + wo, 2 + m, 0, 2 + wo * 3 + m] = INV_SQRT3
    # D: 1o(x) x 1o(sh) -> 0e(out,w)
    for wo in range(2):
        for m in range(3):
            basis[10 + wo, 2 + m, 1 + m, wo] = INV_SQRT3 * INV_SQRT3
    return jnp.asarray(basis)


def reference_forward(node_attr, edge_index, edge_attr, edge_sh, params):
    w1, b1, w2, b2 = params
    N = node_attr.shape[0]
    src, dst = edge_index[0], edge_index[1]
    x = node_attr[src]
    h = edge_attr @ w1 + b1
    h = h * jax.nn.sigmoid(h)
    wts = h @ w2 + b2
    out_ij = jnp.einsum('ew,ei,ej,wijk->ek', wts, x, edge_sh, build_basis())
    seg = jax.ops.segment_sum(out_ij, dst, num_segments=N)
    cnt = jax.ops.segment_sum(jnp.ones((src.shape[0],), jnp.float32), dst, num_segments=N)
    return seg / jnp.maximum(cnt, 1.0)[:, None]


if __name__ == "__main__":
    key = jax.random.PRNGKey(0)
    N, E = 150, 2000           # -> N_pad=256 (2 node tiles), tile_e auto=2048 (1 edge tile)
    k = jax.random.split(key, 10)

    # pre-quantize streamed inputs to bf16-representable values so the f32 reference and the
    # bf16-streaming kernel see bit-identical inputs (kernel math itself is all f32).
    def bf16_round(x):
        return x.astype(jnp.bfloat16).astype(jnp.float32)

    node_attr = bf16_round(jax.random.normal(k[0], (N, DIM_IN), jnp.float32))
    src = jax.random.randint(k[1], (E,), 0, N)
    dst = jax.random.randint(k[2], (E,), 0, N)
    edge_index = jnp.stack([src, dst])
    edge_attr = bf16_round(jax.random.normal(k[3], (E, EDGE_ATTR_DIM), jnp.float32))
    # spherical harmonics of random edge vectors ('component' norm: Y0=1, Y1=sqrt(3)*r_hat)
    vec = jax.random.normal(k[4], (E, 3), jnp.float32)
    rhat = vec / jnp.linalg.norm(vec, axis=-1, keepdims=True)
    edge_sh = bf16_round(
        jnp.concatenate([jnp.ones((E, 1), jnp.float32), math.sqrt(3.0) * rhat], axis=1))

    # radial-MLP parameters: Linear(A, A) -> SiLU -> Linear(A, weight_numel), with biases
    w1 = jax.random.normal(k[5], (EDGE_ATTR_DIM, EDGE_ATTR_DIM), jnp.float32) / math.sqrt(EDGE_ATTR_DIM)
    b1 = 0.1 * jax.random.normal(k[6], (1, EDGE_ATTR_DIM), jnp.float32)
    w2 = jax.random.normal(k[7], (EDGE_ATTR_DIM, WEIGHT_NUMEL), jnp.float32) / math.sqrt(EDGE_ATTR_DIM)
    b2 = 0.1 * jax.random.normal(k[8], (1, WEIGHT_NUMEL), jnp.float32)
    params = (w1, b1, w2, b2)

    out = conv_forward(node_attr, edge_index, edge_attr, edge_sh, params, tile_n=128)
    out = jax.block_until_ready(out)

    ref = reference_forward(node_attr, edge_index, edge_attr, edge_sh, params)
    assert out.shape == (N, DIM_OUT)
    max_err = float(jnp.max(jnp.abs(out - ref)))
    assert jnp.allclose(out, ref, atol=1e-4, rtol=1e-4), (max_err, out[:2], ref[:2])
    print("KERNEL_OK")
</pallas_src>

<mosaic_0001>
module attributes {stable_mosaic.version = 11 : i64} {
  func.func @conv_edge_kernel(%arg0: i32, %arg1: i32, %arg2: memref<2xi32, #tpu.memory_space<smem>>, %arg3: memref<2xi32, #tpu.memory_space<smem>>, %arg4: memref<17x2048xbf16, #tpu.memory_space<vmem>>, %arg5: memref<2x2048xf32, #tpu.memory_space<vmem>>, %arg6: memref<8x8xf32, #tpu.memory_space<vmem>>, %arg7: memref<8x1xf32, #tpu.memory_space<vmem>>, %arg8: memref<12x8xf32, #tpu.memory_space<vmem>>, %arg9: memref<12x1xf32, #tpu.memory_space<vmem>>, %arg10: memref<8x128xf32, #tpu.memory_space<vmem>>) attributes {dimension_semantics = [#tpu.dimension_semantics<parallel>, #tpu.dimension_semantics<arbitrary>], iteration_bounds = array<i64: 2, 1>, scalar_prefetch = 2 : i64, scratch_operands = 0 : i64, tpu.core_type = #tpu.core_type<tc>, window_params = [{transform_indices = @transform_0, window_bounds = array<i64: 17, 2048>}, {transform_indices = @transform_1, window_bounds = array<i64: 2, 2048>}, {pipeline_mode = #tpu.pipeline_mode<synchronous>, transform_indices = @transform_2, window_bounds = array<i64: 8, 8>}, {pipeline_mode = #tpu.pipeline_mode<synchronous>, transform_indices = @transform_3, window_bounds = array<i64: 8, 1>}, {pipeline_mode = #tpu.pipeline_mode<synchronous>, transform_indices = @transform_4, window_bounds = array<i64: 12, 8>}, {pipeline_mode = #tpu.pipeline_mode<synchronous>, transform_indices = @transform_5, window_bounds = array<i64: 12, 1>}, {transform_indices = @transform_6, window_bounds = array<i64: 8, 128>}]} {
    %c0_i32 = arith.constant 0 : i32
    %0 = arith.cmpi eq, %arg1, %c0_i32 : i32
    %1 = arith.extui %0 : i1 to i32
    %c0_i32_0 = arith.constant 0 : i32
    %2 = arith.cmpi ne, %1, %c0_i32_0 : i32
    scf.if %2 {
      %cst = arith.constant 0.000000e+00 : f32
      %8 = vector.broadcast %cst : f32 to vector<8x128xf32>
      %c0 = arith.constant 0 : index
      %c0_2 = arith.constant 0 : index
      %9 = vector.load %arg10[%c0, %c0_2] : memref<8x128xf32, #tpu.memory_space<vmem>>, vector<8x128xf32>
      tpu.vector_store %arg10[%c0, %c0_2], %8 {strides = array<i32>} : memref<8x128xf32, #tpu.memory_space<vmem>>, vector<8x128xf32>,
    } else {
    }
    %3 = arith.index_cast %arg0 : i32 to index
    %4 = memref.load %arg3[%3] : memref<2xi32, #tpu.memory_space<smem>>
    %5 = arith.cmpi slt, %arg1, %4 : i32
    %6 = arith.extui %5 : i1 to i32
    %c0_i32_1 = arith.constant 0 : i32
    %7 = arith.cmpi ne, %6, %c0_i32_1 : i32
    scf.if %7 {
      %c0 = arith.constant 0 : index
      %c0_2 = arith.constant 0 : index
      %8 = vector.load %arg4[%c0, %c0_2] : memref<17x2048xbf16, #tpu.memory_space<vmem>>, vector<17x2048xbf16>
      %9 = arith.extf %8 : vector<17x2048xbf16> to vector<17x2048xf32>
      %c0_3 = arith.constant 0 : index
      %c0_4 = arith.constant 0 : index
      %10 = vector.load %arg5[%c0_3, %c0_4] : memref<2x2048xf32, #tpu.memory_space<vmem>>, vector<2x2048xf32>
      %11 = vector.extract_strided_slice %9 {offsets = [0, 0], sizes = [8, 2048], strides = [1, 1]} : vector<17x2048xf32> to vector<8x2048xf32>
      %12 = vector.extract_strided_slice %9 {offsets = [8, 0], sizes = [2, 2048], strides = [1, 1]} : vector<17x2048xf32> to vector<2x2048xf32>
      %13 = vector.extract_strided_slice %9 {offsets = [10, 0], sizes = [3, 2048], strides = [1, 1]} : vector<17x2048xf32> to vector<3x2048xf32>
      %14 = vector.extract_strided_slice %9 {offsets = [13, 0], sizes = [1, 2048], strides = [1, 1]} : vector<17x2048xf32> to vector<1x2048xf32>
      %15 = vector.extract_strided_slice %9 {offsets = [14, 0], sizes = [3, 2048], strides = [1, 1]} : vector<17x2048xf32> to vector<3x2048xf32>
      %c0_5 = arith.constant 0 : index
      %c0_6 = arith.constant 0 : index
      %16 = vector.load %arg6[%c0_5, %c0_6] : memref<8x8xf32, #tpu.memory_space<vmem>>, vector<8x8xf32>
      %cst = arith.constant dense<0.000000e+00> : vector<8x2048xf32>
      %17 = tpu.matmul %16, %11, %cst {dimension_numbers = #tpu.dot_dimension_numbers<[1], [0], [0], [1], [0, 0, 1, 1], [], []>} : vector<8x8xf32>, vector<8x2048xf32>, vector<8x2048xf32> -> vector<8x2048xf32>
      %c0_7 = arith.constant 0 : index
      %c0_8 = arith.constant 0 : index
      %18 = vector.load %arg7[%c0_7, %c0_8] : memref<8x1xf32, #tpu.memory_space<vmem>>, vector<8x1xf32>
      %19 = vector.broadcast %18 : vector<8x1xf32> to vector<8x2048xf32>
      %20 = arith.addf %17, %19 : vector<8x2048xf32>
      %21 = arith.negf %20 : vector<8x2048xf32>
      %22 = math.exp %21 : vector<8x2048xf32>
      %cst_9 = arith.constant 1.000000e+00 : f32
      %23 = vector.broadcast %cst_9 : f32 to vector<8x2048xf32>
      %24 = arith.addf %23, %22 : vector<8x2048xf32>
      %25 = arith.divf %23, %24 : vector<8x2048xf32>
      %26 = arith.mulf %20, %25 : vector<8x2048xf32>
      %c0_10 = arith.constant 0 : index
      %c0_11 = arith.constant 0 : index
      %27 = vector.load %arg8[%c0_10, %c0_11] : memref<12x8xf32, #tpu.memory_space<vmem>>, vector<12x8xf32>
      %cst_12 = arith.constant dense<0.000000e+00> : vector<12x2048xf32>
      %28 = tpu.matmul %27, %26, %cst_12 {dimension_numbers = #tpu.dot_dimension_numbers<[1], [0], [0], [1], [0, 0, 1, 1], [], []>} : vector<12x8xf32>, vector<8x2048xf32>, vector<12x2048xf32> -> vector<12x2048xf32>
      %c0_13 = arith.constant 0 : index
      %c0_14 = arith.constant 0 : index
      %29 = vector.load %arg9[%c0_13, %c0_14] : memref<12x1xf32, #tpu.memory_space<vmem>>, vector<12x1xf32>
      %30 = vector.broadcast %29 : vector<12x1xf32> to vector<12x2048xf32>
      %31 = arith.addf %28, %30 : vector<12x2048xf32>
      %32 = vector.extract_strided_slice %31 {offsets = [0, 0], sizes = [2, 2048], strides = [1, 1]} : vector<12x2048xf32> to vector<2x2048xf32>
      %33 = vector.extract_strided_slice %12 {offsets = [0, 0], sizes = [1, 2048], strides = [1, 1]} : vector<2x2048xf32> to vector<1x2048xf32>
      %34 = vector.broadcast %33 : vector<1x2048xf32> to vector<2x2048xf32>
      %35 = arith.mulf %32, %34 : vector<2x2048xf32>
      %36 = vector.extract_strided_slice %31 {offsets = [2, 0], sizes = [2, 2048], strides = [1, 1]} : vector<12x2048xf32> to vector<2x2048xf32>
      %37 = vector.extract_strided_slice %12 {offsets = [1, 0], sizes = [1, 2048], strides = [1, 1]} : vector<2x2048xf32> to vector<1x2048xf32>
      %38 = vector.broadcast %37 : vector<1x2048xf32> to vector<2x2048xf32>
      %39 = arith.mulf %36, %38 : vector<2x2048xf32>
      %40 = arith.addf %35, %39 : vector<2x2048xf32>
      %41 = vector.extract_strided_slice %31 {offsets = [4, 0], sizes = [2, 2048], strides = [1, 1]} : vector<12x2048xf32> to vector<2x2048xf32>
      %42 = vector.extract_strided_slice %12 {offsets = [0, 0], sizes = [1, 2048], strides = [1, 1]} : vector<2x2048xf32> to vector<1x2048xf32>
      %43 = vector.broadcast %42 : vector<1x2048xf32> to vector<2x2048xf32>
      %44 = arith.mulf %41, %43 : vector<2x2048xf32>
      %45 = vector.extract_strided_slice %31 {offsets = [6, 0], sizes = [2, 2048], strides = [1, 1]} : vector<12x2048xf32> to vector<2x2048xf32>
      %46 = vector.extract_strided_slice %12 {offsets = [1, 0], sizes = [1, 2048], strides = [1, 1]} : vector<2x2048xf32> to vector<1x2048xf32>
      %47 = vector.broadcast %46 : vector<1x2048xf32> to vector<2x2048xf32>
      %48 = arith.mulf %45, %47 : vector<2x2048xf32>
      %49 = arith.addf %44, %48 : vector<2x2048xf32>
      %50 = vector.extract_strided_slice %31 {offsets = [8, 0], sizes = [2, 2048], strides = [1, 1]} : vector<12x2048xf32> to vector<2x2048xf32>
      %51 = vector.extract_strided_slice %31 {offsets = [10, 0], sizes = [2, 2048], strides = [1, 1]} : vector<12x2048xf32> to vector<2x2048xf32>
      %52 = arith.mulf %13, %15 : vector<3x2048xf32>
      %cst_15 = arith.constant dense<0.000000e+00> : vector<2048xf32>
      %53 = vector.multi_reduction <add>, %52, %cst_15 [0] : vector<3x2048xf32> to vector<2048xf32>
      %54 = vector.shape_cast %53 : vector<2048xf32> to vector<1x2048xf32>
      %55 = vector.broadcast %14 : vector<1x2048xf32> to vector<3x2048xf32>
      %56 = arith.mulf %13, %55 : vector<3x2048xf32>
      %57 = vector.extract_strided_slice %10 {offsets = [1, 0], sizes = [1, 2048], strides = [1, 1]} : vector<2x2048xf32> to vector<1x2048xf32>
      %58 = vector.broadcast %14 : vector<1x2048xf32> to vector<2x2048xf32>
      %59 = arith.mulf %40, %58 : vector<2x2048xf32>
      %cst_16 = arith.constant 0.577350259 : f32
      %60 = vector.broadcast %cst_16 : f32 to vector<2x2048xf32>
      %61 = arith.mulf %60, %59 : vector<2x2048xf32>
      %62 = vector.broadcast %54 : vector<1x2048xf32> to vector<2x2048xf32>
      %63 = arith.mulf %51, %62 : vector<2x2048xf32>
      %cst_17 = arith.constant 0.333333343 : f32
      %64 = vector.broadcast %cst_17 : f32 to vector<2x2048xf32>
      %65 = arith.mulf %64, %63 : vector<2x2048xf32>
      %66 = arith.addf %61, %65 : vector<2x2048xf32>
      %67 = vector.extract_strided_slice %49 {offsets = [0, 0], sizes = [1, 2048], strides = [1, 1]} : vector<2x2048xf32> to vector<1x2048xf32>
      %68 = vector.broadcast %67 : vector<1x2048xf32> to vector<3x2048xf32>
      %69 = arith.mulf %68, %15 : vector<3x2048xf32>
      %70 = vector.extract_strided_slice %50 {offsets = [0, 0], sizes = [1, 2048], strides = [1, 1]} : vector<2x2048xf32> to vector<1x2048xf32>
      %71 = vector.broadcast %70 : vector<1x2048xf32> to vector<3x2048xf32>
      %72 = arith.mulf %71, %56 : vector<3x2048xf32>
      %73 = arith.addf %69, %72 : vector<3x2048xf32>
      %cst_18 = arith.constant 0.577350259 : f32
      %74 = vector.broadcast %cst_18 : f32 to vector<3x2048xf32>
      %75 = arith.mulf %74, %73 : vector<3x2048xf32>
      %76 = vector.extract_strided_slice %49 {offsets = [1, 0], sizes = [1, 2048], strides = [1, 1]} : vector<2x2048xf32> to vector<1x2048xf32>
      %77 = vector.broadcast %76 : vector<1x2048xf32> to vector<3x2048xf32>
      %78 = arith.mulf %77, %15 : vector<3x2048xf32>
      %79 = vector.extract_strided_slice %50 {offsets = [1, 0], sizes = [1, 2048], strides = [1, 1]} : vector<2x2048xf32> to vector<1x2048xf32>
      %80 = vector.broadcast %79 : vector<1x2048xf32> to vector<3x2048xf32>
      %81 = arith.mulf %80, %56 : vector<3x2048xf32>
      %82 = arith.addf %78, %81 : vector<3x2048xf32>
      %cst_19 = arith.constant 0.577350259 : f32
      %83 = vector.broadcast %cst_19 : f32 to vector<3x2048xf32>
      %84 = arith.mulf %83, %82 : vector<3x2048xf32>
      %85 = tpu.concatenate %66, %75, %84 in 0 : vector<2x2048xf32>, vector<3x2048xf32>, vector<3x2048xf32> -> vector<8x2048xf32>
      %86 = vector.broadcast %57 : vector<1x2048xf32> to vector<8x2048xf32>
      %87 = arith.mulf %85, %86 : vector<8x2048xf32>
      %88 = vector.extract_strided_slice %10 {offsets = [0, 0], sizes = [1, 2048], strides = [1, 1]} : vector<2x2048xf32> to vector<1x2048xf32>
      %89 = arith.fptosi %88 : vector<1x2048xf32> to vector<1x2048xi32>
      %c128_i32 = arith.constant 128 : i32
      %90 = arith.muli %arg0, %c128_i32 : i32
      %91 = vector.broadcast %90 : i32 to vector<1x2048xi32>
      %92 = arith.subi %89, %91 : vector<1x2048xi32>
      %93 = tpu.iota {dimensions = array<i32: 0>} : vector<128x1xi32>
      %94 = vector.broadcast %93 : vector<128x1xi32> to vector<128x2048xi32>
      %95 = vector.broadcast %92 : vector<1x2048xi32> to vector<128x2048xi32>
      %96 = arith.cmpi eq, %94, %95 : vector<128x2048xi32>
      %97 = arith.extui %96 : vector<128x2048xi1> to vector<128x2048xi32>
      %98 = arith.sitofp %97 : vector<128x2048xi32> to vector<128x2048xf32>
      %c0_20 = arith.constant 0 : index
      %c0_21 = arith.constant 0 : index
      %99 = vector.load %arg10[%c0_20, %c0_21] : memref<8x128xf32, #tpu.memory_space<vmem>>, vector<8x128xf32>
      %cst_22 = arith.constant dense<0.000000e+00> : vector<8x128xf32>
      %100 = tpu.matmul %87, %98, %cst_22 {dimension_numbers = #tpu.dot_dimension_numbers<[1], [1], [0], [0], [0, 0, 1, 0], [], []>} : vector<8x2048xf32>, vector<128x2048xf32>, vector<8x128xf32> -> vector<8x128xf32>
      %101 = arith.addf %99, %100 : vector<8x128xf32>
      %c0_23 = arith.constant 0 : index
      %c0_24 = arith.constant 0 : index
      %102 = vector.load %arg10[%c0_23, %c0_24] : memref<8x128xf32, #tpu.memory_space<vmem>>, vector<8x128xf32>
      tpu.vector_store %arg10[%c0_23, %c0_24], %101 {strides = array<i32>} : memref<8x128xf32, #tpu.memory_space<vmem>>, vector<8x128xf32>,
    } else {
    }
    return
  }
  func.func @transform_0(%arg0: i32, %arg1: i32, %arg2: memref<2xi32, #tpu.memory_space<smem>>, %arg3: memref<2xi32, #tpu.memory_space<smem>>) -> (i32, i32) {
    %0 = arith.index_cast %arg0 : i32 to index
    %1 = memref.load %arg2[%0] : memref<2xi32, #tpu.memory_space<smem>>
    %2 = arith.addi %1, %arg1 : i32
    %c0_i32 = arith.constant 0 : i32
    %3 = arith.minsi %2, %c0_i32 : i32
    %c0_i32_0 = arith.constant 0 : i32
    %c0_i32_1 = arith.constant 0 : i32
    return %c0_i32_0, %3 : i32, i32
  }
  func.func @transform_1(%arg0: i32, %arg1: i32, %arg2: memref<2xi32, #tpu.memory_space<smem>>, %arg3: memref<2xi32, #tpu.memory_space<smem>>) -> (i32, i32) {
    %0 = arith.index_cast %arg0 : i32 to index
    %1 = memref.load %arg2[%0] : memref<2xi32, #tpu.memory_space<smem>>
    %2 = arith.addi %1, %arg1 : i32
    %c0_i32 = arith.constant 0 : i32
    %3 = arith.minsi %2, %c0_i32 : i32
    %c0_i32_0 = arith.constant 0 : i32
    %c0_i32_1 = arith.constant 0 : i32
    return %c0_i32_0, %3 : i32, i32
  }
  func.func @transform_2(%arg0: i32, %arg1: i32, %arg2: memref<2xi32, #tpu.memory_space<smem>>, %arg3: memref<2xi32, #tpu.memory_space<smem>>) -> (i32, i32) {
    %c0_i32 = arith.constant 0 : i32
    %c0_i32_0 = arith.constant 0 : i32
    %c0_i32_1 = arith.constant 0 : i32
    return %c0_i32, %c0_i32_0 : i32, i32
  }
  func.func @transform_3(%arg0: i32, %arg1: i32, %arg2: memref<2xi32, #tpu.memory_space<smem>>, %arg3: memref<2xi32, #tpu.memory_space<smem>>) -> (i32, i32) {
    %c0_i32 = arith.constant 0 : i32
    %c0_i32_0 = arith.constant 0 : i32
    %c0_i32_1 = arith.constant 0 : i32
    return %c0_i32, %c0_i32_0 : i32, i32
  }
  func.func @transform_4(%arg0: i32, %arg1: i32, %arg2: memref<2xi32, #tpu.memory_space<smem>>, %arg3: memref<2xi32, #tpu.memory_space<smem>>) -> (i32, i32) {
    %c0_i32 = arith.constant 0 : i32
    %c0_i32_0 = arith.constant 0 : i32
    %c0_i32_1 = arith.constant 0 : i32
    return %c0_i32, %c0_i32_0 : i32, i32
  }
  func.func @transform_5(%arg0: i32, %arg1: i32, %arg2: memref<2xi32, #tpu.memory_space<smem>>, %arg3: memref<2xi32, #tpu.memory_space<smem>>) -> (i32, i32) {
    %c0_i32 = arith.constant 0 : i32
    %c0_i32_0 = arith.constant 0 : i32
    %c0_i32_1 = arith.constant 0 : i32
    return %c0_i32, %c0_i32_0 : i32, i32
  }
  func.func @transform_6(%arg0: i32, %arg1: i32, %arg2: memref<2xi32, #tpu.memory_space<smem>>, %arg3: memref<2xi32, #tpu.memory_space<smem>>) -> (i32, i32) {
    %c0_i32 = arith.constant 0 : i32
    %c0_i32_0 = arith.constant 0 : i32
    return %c0_i32, %arg0 : i32, i32
  }
}

</mosaic_0001>

<llo_original>
// kernel: tpu_custom_call.1
$region0: #{tpu_custom_call.1}
  #allocation0 [shape = 'u32[]', space=smem, size = 0x4, offset = 0x4, fixed_abs, tag = 'smem constant byte address 0x4 - core index']
  #allocation1 [shape = 'u32[144,128]{1,0:T(1,128)}', space=vmem, size = 0x12000, scoped, tag = 'internal scratch']
  #allocation2 [shape = 's32[1]{0}', space=sflag, size = 0x4, scoped, tag = 'scoped memory for tpu_custom_call.1']
  #allocation3 [shape = 'u8[512]{0}', space=smem, size = 0x200, scoped, tag = 'prefetched SMEM operand 0']
  #allocation4 [shape = 'u8[512]{0}', space=smem, size = 0x200, scoped, tag = 'prefetched SMEM operand 1']
  %s0 = inlined_call_operand.vmem [shape: s32[2], index: 0, kind: input, shape index: {}]
  %s1 = inlined_call_operand.vmem [shape: s32[2], index: 1, kind: input, shape index: {}]
  %s2 = inlined_call_operand.hbm [shape: bf16[17,2048], index: 2, kind: input, shape index: {}]
  %s3 = inlined_call_operand.vmem [shape: f32[2,2048], index: 3, kind: input, shape index: {}]
  %s4 = inlined_call_operand.vmem [shape: f32[8,8], index: 4, kind: input, shape index: {}]
  %s5 = inlined_call_operand.vmem [shape: f32[8,1], index: 5, kind: input, shape index: {}]
  %s6 = inlined_call_operand.vmem [shape: f32[12,8], index: 6, kind: input, shape index: {}]
  %s7 = inlined_call_operand.vmem [shape: f32[12,1], index: 7, kind: input, shape index: {}]
  %s8 = inlined_call_operand.hbm [shape: f32[8,256], index: 8, kind: output, shape index: {}]
  %s9 = sld [smem:[#allocation0]]
  $region69: #{tpu_custom_call.1} parent=0
    _
  %s11 = ssub.s32 1, %s9
  %s12 = scalar_select 0, %s11, %s9
  %s13 = sshll.u32 %s0, 4
  %s14 = int_to_ptr.vmem [resolvable:$true] %s13
  %16 = dma.vmem_to_smem %s14, 16, [#allocation3], [#allocation2]
  %s17 = sshll.u32 %s1, 4
  %s18 = int_to_ptr.vmem [resolvable:$true] %s17
  %20 = dma.vmem_to_smem %s18, 16, [#allocation4], [#allocation2]
  %21 = dma.done [#allocation2], 32
  %22 = sfence
  $region1: #{tpu_custom_call.1} parent=0
    #allocation5 [shape = 'u8[196608]{0}', space=vmem, size = 0x30000, scoped, tag = 'input window, operand 2']
    #allocation6 [shape = 's32[2]{0}', space=sflag, size = 0x8, scoped, tag = 'scoped memory for tpu_custom_call.1']
    #allocation7 [shape = 's32[2]{0}', space=sflag, size = 0x8, scoped, tag = 'scoped memory for tpu_custom_call.1']
    #allocation8 [shape = 'u8[8192]{0}', space=vmem, size = 0x2000, scoped, tag = 'output window, operand 0']
    %23 = vsyncpa [#allocation6], 0
    %s24 = scalar_lea.sflag [#allocation6], 1
    %25 = vsyncpa %s24, 0
    %26 = vsyncpa [#allocation7], 0
    %s27 = scalar_lea.sflag [#allocation7], 1
    %28 = vsyncpa %s27, 0
    loop: start=0, step=1, limit=4
    $region2: #{tpu_custom_call.1} parent=1 // loop_pre_header
      _
    $region3: #{tpu_custom_call.1} parent=1 // loop_header
      %s30 = sphi 0, %s34
      %p31 = scmp.ge.s32.totalorder %s30, 4
      %s37 = sphi 0, %s49
      %s38 = sphi 0, %s45
      %s39 = sphi 0, %s37
      %s40 = sphi 0, %s38
      %s41 = sphi 0, %s39
      %s42 = sphi 0, %s40
      %s60 = sphi 0, %s62
      %s63 = sphi 0, %s60
      %s64 = sphi 0, %s63
      %s80 = sphi 0, %s64
      %s94 = sphi 0, %s96
      %s97 = sphi 0, %s94
      %s98 = sphi 0, %s97
      %s114 = sphi 0, %s98
      %s118 = sphi 0, %s118
      %s120 = sphi 0, %s118
      %s121 = sphi 0, %s120
      %s135 = sphi 0, %s121
      %s139 = sphi 0, %s139
      %s141 = sphi 0, %s139
      %s142 = sphi 0, %s141
      %s156 = sphi 0, %s142
      %s160 = sphi 0, %s160
      %s162 = sphi 0, %s160
      %s163 = sphi 0, %s162
      %s177 = sphi 0, %s163
      %s181 = sphi 0, %s181
      %s183 = sphi 0, %s181
      %s184 = sphi 0, %s183
      %s198 = sphi 0, %s184
      %s204 = sphi 0, %s206
      %s207 = sphi 0, %s204
      %s208 = sphi 0, %s207
      %s224 = sphi 0, %s208
    $region4: #{tpu_custom_call.1} parent=1 // loop_header_branch
      %33 = sbr.rel (%p31) target = $region8
    $region5: #{tpu_custom_call.1} parent=1 // loop_body
      %s35 = ssub.s32 %s30, 1
      %s36 = ssub.s32 %s30, 2
      %s43 = sadd.s32 1, %s38
      %p44 = scmp.ge.s32.totalorder %s43, 1
      %s45 = scalar_select %p44, 0, %s43
      %s46 = sadd.s32 1, %s37
      %s47 = scalar_select %p44, %s46, %s37
      %p48 = scmp.ge.s32.totalorder %s47, 2
      %s49 = scalar_select %p48, 0, %s47
      %s50 = sld [smem:[#allocation3 + %s37]]
      %s51 = sadd.s32 %s50, %s38
      %p52 = scmp.lt.s32.totalorder %s51, 0
      %s53 = scalar_select %p52, %s51, 0
      %s54 = sld [smem:[#allocation3 + %s49]]
      %s55 = sadd.s32 %s54, %s45
      %p56 = scmp.lt.s32.totalorder %s55, 0
      %s57 = scalar_select %p56, %s55, 0
      %s58 = ssub.s32 %s53, %s57
      %p59 = scmp.eq.s32.totalorder %s58, 0
      %s61 = sadd.s32 %s60, 1
      %s62 = scalar_select %p59, %s60, %s61
      %p65 = pneg %p59
      %p66 = scmp.eq.s32.totalorder %s30, 1
      %p67 = por %p65, %p66
      %p68 = scmp.ne.s32.totalorder %s60, %s63
      %p69 = scmp.eq.s32.totalorder %s30, 0
      %p70 = por %p68, %p69
      %p71 = scmp.ne.s32.totalorder %s60, %s63
      %p72 = scmp.eq.s32.totalorder %s35, 1
      %p73 = por %p71, %p72
      %p74 = scmp.ne.s32.totalorder %s63, %s64
      %p75 = scmp.eq.s32.totalorder %s35, 0
      %p76 = por %p74, %p75
      %p77 = scmp.ne.s32.totalorder %s63, %s64
      %p78 = scmp.eq.s32.totalorder %s36, 1
      %p79 = por %p77, %p78
      %p81 = scmp.ne.s32.totalorder %s64, %s80
      %p82 = scmp.eq.s32.totalorder %s36, 0
      %p83 = por %p81, %p82
      %s84 = sld [smem:[#allocation3 + %s37]]
      %s85 = sadd.s32 %s84, %s38
      %p86 = scmp.lt.s32.totalorder %s85, 0
      %s87 = scalar_select %p86, %s85, 0
      %s88 = sld [smem:[#allocation3 + %s49]]
      %s89 = sadd.s32 %s88, %s45
      %p90 = scmp.lt.s32.totalorder %s89, 0
      %s91 = scalar_select %p90, %s89, 0
      %s92 = ssub.s32 %s87, %s91
      %p93 = scmp.eq.s32.totalorder %s92, 0
      %s95 = sadd.s32 %s94, 1
      %s96 = scalar_select %p93, %s94, %s95
      %p99 = pneg %p93
      %p100 = scmp.eq.s32.totalorder %s30, 1
      %p101 = por %p99, %p100
      %p102 = scmp.ne.s32.totalorder %s94, %s97
      %p103 = scmp.eq.s32.totalorder %s30, 0
      %p104 = por %p102, %p103
      %p105 = scmp.ne.s32.totalorder %s94, %s97
      %p106 = scmp.eq.s32.totalorder %s35, 1
      %p107 = por %p105, %p106
      %p108 = scmp.ne.s32.totalorder %s97, %s98
      %p109 = scmp.eq.s32.totalorder %s35, 0
      %p110 = por %p108, %p109
      %p111 = scmp.ne.s32.totalorder %s97, %s98
      %p112 = scmp.eq.s32.totalorder %s36, 1
      %p113 = por %p111, %p112
      %p115 = scmp.ne.s32.totalorder %s98, %s114
      %p116 = scmp.eq.s32.totalorder %s36, 0
      %p117 = por %p115, %p116
      %s119 = sadd.s32 %s118, 1
      %p122 = scmp.eq.s32.totalorder %s30, 1
      %p123 = scmp.ne.s32.totalorder %s118, %s120
      %p124 = scmp.eq.s32.totalorder %s30, 0
      %p125 = por %p123, %p124
      %p126 = scmp.ne.s32.totalorder %s118, %s120
      %p127 = scmp.eq.s32.totalorder %s35, 1
      %p128 = por %p126, %p127
      %p129 = scmp.ne.s32.totalorder %s120, %s121
      %p130 = scmp.eq.s32.totalorder %s35, 0
      %p131 = por %p129, %p130
      %p132 = scmp.ne.s32.totalorder %s120, %s121
      %p133 = scmp.eq.s32.totalorder %s36, 1
      %p134 = por %p132, %p133
      %p136 = scmp.ne.s32.totalorder %s121, %s135
      %p137 = scmp.eq.s32.totalorder %s36, 0
      %p138 = por %p136, %p137
      %s140 = sadd.s32 %s139, 1
      %p143 = scmp.eq.s32.totalorder %s30, 1
      %p144 = scmp.ne.s32.totalorder %s139, %s141
      %p145 = scmp.eq.s32.totalorder %s30, 0
      %p146 = por %p144, %p145
      %p147 = scmp.ne.s32.totalorder %s139, %s141
      %p148 = scmp.eq.s32.totalorder %s35, 1
      %p149 = por %p147, %p148
      %p150 = scmp.ne.s32.totalorder %s141, %s142
      %p151 = scmp.eq.s32.totalorder %s35, 0
      %p152 = por %p150, %p151
      %p153 = scmp.ne.s32.totalorder %s141, %s142
      %p154 = scmp.eq.s32.totalorder %s36, 1
      %p155 = por %p153, %p154
      %p157 = scmp.ne.s32.totalorder %s142, %s156
      %p158 = scmp.eq.s32.totalorder %s36, 0
      %p159 = por %p157, %p158
      %s161 = sadd.s32 %s160, 1
      %p164 = scmp.eq.s32.totalorder %s30, 1
      %p165 = scmp.ne.s32.totalorder %s160, %s162
      %p166 = scmp.eq.s32.totalorder %s30, 0
      %p167 = por %p165, %p166
      %p168 = scmp.ne.s32.totalorder %s160, %s162
      %p169 = scmp.eq.s32.totalorder %s35, 1
      %p170 = por %p168, %p169
      %p171 = scmp.ne.s32.totalorder %s162, %s163
      %p172 = scmp.eq.s32.totalorder %s35, 0
      %p173 = por %p171, %p172
      %p174 = scmp.ne.s32.totalorder %s162, %s163
      %p175 = scmp.eq.s32.totalorder %s36, 1
      %p176 = por %p174, %p175
      %p178 = scmp.ne.s32.totalorder %s163, %s177
      %p179 = scmp.eq.s32.totalorder %s36, 0
      %p180 = por %p178, %p179
      %s182 = sadd.s32 %s181, 1
      %p185 = scmp.eq.s32.totalorder %s30, 1
      %p186 = scmp.ne.s32.totalorder %s181, %s183
      %p187 = scmp.eq.s32.totalorder %s30, 0
      %p188 = por %p186, %p187
      %p189 = scmp.ne.s32.totalorder %s181, %s183
      %p190 = scmp.eq.s32.totalorder %s35, 1
      %p191 = por %p189, %p190
      %p192 = scmp.ne.s32.totalorder %s183, %s184
      %p193 = scmp.eq.s32.totalorder %s35, 0
      %p194 = por %p192, %p193
      %p195 = scmp.ne.s32.totalorder %s183, %s184
      %p196 = scmp.eq.s32.totalorder %s36, 1
      %p197 = por %p195, %p196
      %p199 = scmp.ne.s32.totalorder %s184, %s198
      %p200 = scmp.eq.s32.totalorder %s36, 0
      %p201 = por %p199, %p200
      %s202 = ssub.s32 %s37, %s49
      %p203 = scmp.eq.s32.totalorder %s202, 0
      %s205 = sadd.s32 %s204, 1
      %s206 = scalar_select %p203, %s204, %s205
      %p209 = pneg %p203
      %p210 = scmp.eq.s32.totalorder %s30, 1
      %p211 = por %p209, %p210
      %p212 = scmp.ne.s32.totalorder %s204, %s207
      %p213 = scmp.eq.s32.totalorder %s30, 0
      %p214 = por %p212, %p213
      %p215 = scmp.ne.s32.totalorder %s204, %s207
      %p216 = scmp.eq.s32.totalorder %s35, 1
      %p217 = por %p215, %p216
      %p218 = scmp.ne.s32.totalorder %s207, %s208
      %p219 = scmp.eq.s32.totalorder %s35, 0
      %p220 = por %p218, %p219
      %p221 = scmp.ne.s32.totalorder %s207, %s208
      %p222 = scmp.eq.s32.totalorder %s36, 1
      %p223 = por %p221, %p222
      %p225 = scmp.ne.s32.totalorder %s208, %s224
      %p226 = scmp.eq.s32.totalorder %s36, 0
      %p227 = por %p225, %p226
      %p228 = scmp.le.s32.totalorder 1, %s30
      %p229 = scmp.lt.s32.totalorder %s30, 3
      %p230 = pnand %p228, %p229
      %p231 = pneg %p230
      // Predicated region
      $region9: #{tpu_custom_call.1} parent=5 // pred_check
        _
      $region10: #{tpu_custom_call.1} parent=5 // pred_check_branch
        %233 = sbr.rel (%p230) target = $region12
      $region11: #{tpu_custom_call.1} parent=5 // pred_region
        %s234 = ssub.s32 %s30, 1
        // Predicated region
        $region13: #{tpu_custom_call.1} parent=11 // pred_check
          %p235 = pneg %p131
        $region14: #{tpu_custom_call.1} parent=11 // pred_check_branch
          %237 = sbr.rel (%p235) target = $region16
        $region15: #{tpu_custom_call.1} parent=11 // pred_region
          _
        $region16: #{tpu_custom_call.1} parent=11 // pred_fallthru
          _
        // Predicated region
        $region17: #{tpu_custom_call.1} parent=11 // pred_check
          %p238 = pneg %p152
        $region18: #{tpu_custom_call.1} parent=11 // pred_check_branch
          %240 = sbr.rel (%p238) target = $region20
        $region19: #{tpu_custom_call.1} parent=11 // pred_region
          _
        $region20: #{tpu_custom_call.1} parent=11 // pred_fallthru
          _
        // Predicated region
        $region21: #{tpu_custom_call.1} parent=11 // pred_check
          %p241 = pneg %p173
        $region22: #{tpu_custom_call.1} parent=11 // pred_check_branch
          %243 = sbr.rel (%p241) target = $region24
        $region23: #{tpu_custom_call.1} parent=11 // pred_region
          _
        $region24: #{tpu_custom_call.1} parent=11 // pred_fallthru
          _
        // Predicated region
        $region25: #{tpu_custom_call.1} parent=11 // pred_check
          %p244 = pneg %p194
        $region26: #{tpu_custom_call.1} parent=11 // pred_check_branch
          %246 = sbr.rel (%p244) target = $region28
        $region27: #{tpu_custom_call.1} parent=11 // pred_region
          _
        $region28: #{tpu_custom_call.1} parent=11 // pred_fallthru
          _
      $region12: #{tpu_custom_call.1} parent=5 // pred_fallthru
        _
      %p247 = scmp.lt.s32.totalorder %s30, 2
      // Predicated region
      $region29: #{tpu_custom_call.1} parent=5 // pred_check
        %p248 = pneg %p247
      $region30: #{tpu_custom_call.1} parent=5 // pred_check_branch
        %250 = sbr.rel (%p248) target = $region32
      $region31: #{tpu_custom_call.1} parent=5 // pred_region
        // Predicated region
        $region33: #{tpu_custom_call.1} parent=31 // pred_check
          %p251 = pneg %p70
        $region34: #{tpu_custom_call.1} parent=31 // pred_check_branch
          %253 = sbr.rel (%p251) target = $region36
        $region35: #{tpu_custom_call.1} parent=31 // pred_region
          %s254 = sand.u32 %s60, 1
          %s255 = scalar_lea.sflag [#allocation6], %s254
          %s256 = sand.u32 %s60, 1
          %s257 = smul.addr %s256, 192
          %s258 = scalar_lea.vmem [#allocation5], %s257
          %s259 = sld [smem:[#allocation3 + %s37]]
          %s260 = sadd.s32 %s259, %s38
          %p261 = scmp.lt.s32.totalorder %s260, 0
          %s262 = scalar_select %p261, %s260, 0
          %s263 = smul.u32 16, %s262
          %s265 = ssub.s32 3072, 3072
          %266 = vsyncadd %s255, %s265
          %s267 = smul.addr %s263, 64
          %s268 = scalar_lea.hbm %s2, %s267
          %s269 = sshll.u32 %s258, 4
          %s270 = int_to_ptr.vmem [resolvable:$true] %s269
          %275 = dma.hbm_to_vmem [thread:$0]  %s268, 3072, %s270, %s255, 1024, 1024, 64
        $region36: #{tpu_custom_call.1} parent=31 // pred_fallthru
          _
        // Predicated region
        $region37: #{tpu_custom_call.1} parent=31 // pred_check
          %p276 = pneg %p104
        $region38: #{tpu_custom_call.1} parent=31 // pred_check_branch
          %278 = sbr.rel (%p276) target = $region40
        $region39: #{tpu_custom_call.1} parent=31 // pred_region
          %s279 = sld [smem:[#allocation3 + %s37]]
          %s280 = sadd.s32 %s279, %s38
          %p281 = scmp.lt.s32.totalorder %s280, 0
          %s282 = scalar_select %p281, %s280, 0
          %s283 = smul.u32 16, %s282
          %p284 = scmp.lt.s32.totalorder %s283, 15
          %s285 = scalar_select %p284, %s283, 15
          %s286 = smul.addr %s285, 2
          %s287 = scalar_lea.vmem %s3, %s286
          %s288 = sld [smem:[#allocation3 + %s37]]
          %s289 = sadd.s32 %s288, %s38
          %p290 = scmp.lt.s32.totalorder %s289, 0
          %s291 = scalar_select %p290, %s289, 0
          %s292 = smul.u32 16, %s291
        $region40: #{tpu_custom_call.1} parent=31 // pred_fallthru
          _
      $region32: #{tpu_custom_call.1} parent=5 // pred_fallthru
        _
      %p293 = scmp.le.s32.totalorder 1, %s30
      %p294 = scmp.lt.s32.totalorder %s30, 3
      %p295 = pnand %p293, %p294
      %p296 = pneg %p295
      // Predicated region
      $region41: #{tpu_custom_call.1} parent=5 // pred_check
        _
      $region42: #{tpu_custom_call.1} parent=5 // pred_check_branch
        %298 = sbr.rel (%p295) target = $region44
      $region43: #{tpu_custom_call.1} parent=5 // pred_region
        %s299 = ssub.s32 %s30, 1
        %s300 = sand.u32 %s63, 1
        %s301 = scalar_lea.sflag [#allocation6], %s300
        %s302 = sand.u32 %s63, 1
        %s303 = smul.addr %s302, 192
        %s304 = scalar_lea.vmem [#allocation5], %s303
        // Predicated region
        $region45: #{tpu_custom_call.1} parent=43 // pred_check
          %p305 = pneg %p76
        $region46: #{tpu_custom_call.1} parent=43 // pred_check_branch
          %307 = sbr.rel (%p305) target = $region48
        $region47: #{tpu_custom_call.1} parent=43 // pred_region
          %308 = dma.done %s301, 3072
        $region48: #{tpu_custom_call.1} parent=43 // pred_fallthru
          _
        %s309 = sand.u32 %s63, 1
        %s310 = scalar_lea.sflag [#allocation6], %s309
        %s311 = sand.u32 %s63, 1
        %s312 = smul.addr %s311, 192
        %s313 = scalar_lea.vmem [#allocation5], %s312
        %p314 = pneg %p76
        %p315 = pneg %p73
        %s316 = sld [smem:[#allocation3 + %s39]]
        %s317 = sadd.s32 %s316, %s40
        %p318 = scmp.lt.s32.totalorder %s317, 0
        %s319 = scalar_select %p318, %s317, 0
        %s320 = smul.u32 16, %s319
        %p321 = scmp.lt.s32.totalorder %s320, 15
        %s322 = scalar_select %p321, %s320, 15
        %s323 = smul.addr %s322, 2
        %s324 = scalar_lea.vmem %s3, %s323
        %p325 = pneg %p110
        %p326 = pneg %p107
        %p327 = pneg %p131
        %p328 = pneg %p128
        %p329 = pneg %p152
        %p330 = pneg %p149
        %p331 = pneg %p173
        %p332 = pneg %p170
        %p333 = pneg %p194
        %p334 = pneg %p191
        %p335 = pneg %p220
        %p336 = pneg %p217
        %s337 = sand.u32 %s207, 1
        %s338 = scalar_lea.sflag [#allocation7], %s337
        %s339 = sand.u32 %s207, 1
        %s340 = smul.addr %s339, 8
        %s341 = scalar_lea.vmem [#allocation8], %s340
        %s342 = sld [smem:[#allocation3 + %s39]]
        %s343 = sadd.s32 %s342, %s40
        %p344 = scmp.lt.s32.totalorder %s343, 0
        %s345 = scalar_select %p344, %s343, 0
        %s346 = smul.u32 16, %s345
        %s347 = sld [smem:[#allocation3 + %s39]]
        %s348 = sadd.s32 %s347, %s40
        %p349 = scmp.lt.s32.totalorder %s348, 0
        %s350 = scalar_select %p349, %s348, 0
        %s351 = smul.u32 16, %s350
        %p352 = scmp.lt.s32.totalorder %s351, 15
        %s353 = scalar_select %p352, %s351, 15
        %s354 = smul.addr %s353, 2
        %s355 = scalar_lea.vmem %s3, %s354
        %s356 = sld [smem:[#allocation3 + %s39]]
        %s357 = sadd.s32 %s356, %s40
        %p358 = scmp.lt.s32.totalorder %s357, 0
        %s359 = scalar_select %p358, %s357, 0
        %s360 = smul.u32 16, %s359
        %p361 = scmp.eq.s32.totalorder %s40, 0
        // Predicated region
        $region49: #{tpu_custom_call.1} parent=43 // pred_check
          %p362 = pneg %p361
        $region50: #{tpu_custom_call.1} parent=43 // pred_check_branch
          %364 = sbr.rel (%p362) target = $region52
        $region51: #{tpu_custom_call.1} parent=43 // pred_region
          %365 = vst [vmem:[%s341] sm:$0xff] 0.0
        $region52: #{tpu_custom_call.1} parent=43 // pred_fallthru
          _
        %s366 = sld [smem:[#allocation4 + %s39]]
        %p367 = scmp.lt.s32.totalorder %s40, %s366
        // Predicated region
        $region53: #{tpu_custom_call.1} parent=43 // pred_check
          %p368 = pneg %p367
        $region54: #{tpu_custom_call.1} parent=43 // pred_check_branch
          %370 = sbr.rel (%p368) target = $region56
        $region55: #{tpu_custom_call.1} parent=43 // pred_region
          %v371 = vld [vmem:[%s304] sm:$0xff]
          %v372 = vld [vmem:[%s304 + $0x8] sm:$0xff]
          %v373 = vld [vmem:[%s304 + $0x10] sm:$0xff]
          %v374 = vld [vmem:[%s304 + $0x18] sm:$0xff]
          %v375 = vld [vmem:[%s304 + $0x20] sm:$0xff]
          %v376 = vld [vmem:[%s304 + $0x28] sm:$0xff]
          %v377 = vld [vmem:[%s304 + $0x30] sm:$0xff]
          %v378 = vld [vmem:[%s304 + $0x38] sm:$0xff]
          %v379 = vld [vmem:[%s304 + $0x40] sm:$0xff]
          %v380 = vld [vmem:[%s304 + $0x48] sm:$0xff]
          %v381 = vld [vmem:[%s304 + $0x50] sm:$0xff]
          %v382 = vld [vmem:[%s304 + $0x58] sm:$0xff]
          %v383 = vld [vmem:[%s304 + $0x60] sm:$0xff]
          %v384 = vld [vmem:[%s304 + $0x68] sm:$0xff]
          %v385 = vld [vmem:[%s304 + $0x70] sm:$0xff]
          %v386 = vld [vmem:[%s304 + $0x78] sm:$0xff]
          %v387 = vld [vmem:[%s304 + $0x80] sm:$0x11]
          %v388 = vld [vmem:[%s304 + $0x88] sm:$0x11]
          %v389 = vld [vmem:[%s304 + $0x90] sm:$0x11]
          %v390 = vld [vmem:[%s304 + $0x98] sm:$0x11]
          %v391 = vld [vmem:[%s304 + $0xa0] sm:$0x11]
          %v392 = vld [vmem:[%s304 + $0xa8] sm:$0x11]
          %v393 = vld [vmem:[%s304 + $0xb0] sm:$0x11]
          %v394 = vld [vmem:[%s304 + $0xb8] sm:$0x11]
          %v395 = vunpack.c.l.bf16 %v371
          %v396 = vunpack.c.h.bf16 %v371
          %v397 = vunpack.c.l.bf16 %v372
          %v398 = vunpack.c.h.bf16 %v372
          %v399 = vunpack.c.l.bf16 %v373
          %v400 = vunpack.c.h.bf16 %v373
          %v401 = vunpack.c.l.bf16 %v374
          %v402 = vunpack.c.h.bf16 %v374
          %v403 = vunpack.c.l.bf16 %v375
          %v404 = vunpack.c.h.bf16 %v375
          %v405 = vunpack.c.l.bf16 %v376
          %v406 = vunpack.c.h.bf16 %v376
          %v407 = vunpack.c.l.bf16 %v377
          %v408 = vunpack.c.h.bf16 %v377
          %v409 = vunpack.c.l.bf16 %v378
          %v410 = vunpack.c.h.bf16 %v378
          %v411 = vunpack.c.l.bf16 %v379
          %v412 = vunpack.c.h.bf16 %v379
          %v413 = vunpack.c.l.bf16 %v380
          %v414 = vunpack.c.h.bf16 %v380
          %v415 = vunpack.c.l.bf16 %v381
          %v416 = vunpack.c.h.bf16 %v381
          %v417 = vunpack.c.l.bf16 %v382
          %v418 = vunpack.c.h.bf16 %v382
          %v419 = vunpack.c.l.bf16 %v383
          %v420 = vunpack.c.h.bf16 %v383
          %v421 = vunpack.c.l.bf16 %v384
          %v422 = vunpack.c.h.bf16 %v384
          %v423 = vunpack.c.l.bf16 %v385
          %v424 = vunpack.c.h.bf16 %v385
          %v425 = vunpack.c.l.bf16 %v386
          %v426 = vunpack.c.h.bf16 %v386
          %v427 = vunpack.c.l.bf16 %v387
          %v428 = vunpack.c.h.bf16 %v387
          %v429 = vunpack.c.l.bf16 %v388
          %v430 = vunpack.c.h.bf16 %v388
          %v431 = vunpack.c.l.bf16 %v389
          %v432 = vunpack.c.h.bf16 %v389
          %v433 = vunpack.c.l.bf16 %v390
          %v434 = vunpack.c.h.bf16 %v390
          %v435 = vunpack.c.l.bf16 %v391
          %v436 = vunpack.c.h.bf16 %v391
          %v437 = vunpack.c.l.bf16 %v392
          %v438 = vunpack.c.h.bf16 %v392
          %v439 = vunpack.c.l.bf16 %v393
          %v440 = vunpack.c.h.bf16 %v393
          %v441 = vunpack.c.l.bf16 %v394
          %v442 = vunpack.c.h.bf16 %v394
          %v443 = vld [vmem:[%s355] sm:$0xff]
          %v444 = vld [vmem:[%s355 + $0x8] sm:$0xff]
          %v445 = vld [vmem:[%s355 + $0x10] sm:$0xff]
          %v446 = vld [vmem:[%s355 + $0x18] sm:$0xff]
          %v447 = vld [vmem:[%s4] sm:$0xff]
          %v448 = vld [vmem:[%s5] sm:$0xff]
          %450 = vset.pattern.permute.xlu0 0
          %451 = vperm.xlu0 %450, %v448
          %v452 = vpop.permute.xlu0 %451
          %vm454 = vcmask 64512
          %v456 = vsel %vm454, %v447, 0
          %458 = vmatprep.subr.mxu0 %v396
          %459 = vmatpush1.msra.mxu0 %v395
          %460 = vmatprep.subr.mxu0 0.0
          %461 = vmatpush1.msra.mxu0 0.0
          %462 = vmatprep.subr.mxu0 0.0
          %463 = vmatpush1.msra.mxu0 0.0
          %464 = vmatprep.subr.mxu0 0.0
          %465 = vmatpush1.msra.mxu0 0.0
          %466 = vmatprep.subr.mxu0 0.0
          %467 = vmatpush1.msra.mxu0 0.0
          %468 = vmatprep.subr.mxu0 0.0
          %469 = vmatpush1.msra.mxu0 0.0
          %470 = vmatprep.subr.mxu0 0.0
          %471 = vmatpush1.msra.mxu0 0.0
          %472 = vmatprep.subr.mxu0 0.0
          %473 = vmatpush1.msra.mxu0 0.0
          %474 = vmatprep.subr.mxu0 0.0
          %475 = vmatpush1.msra.mxu0 0.0
          %476 = vmatprep.subr.mxu0 0.0
          %477 = vmatpush1.msra.mxu0 0.0
          %478 = vmatprep.subr.mxu0 0.0
          %479 = vmatpush1.msra.mxu0 0.0
          %480 = vmatprep.subr.mxu0 0.0
          %481 = vmatpush1.msra.mxu0 0.0
          %482 = vmatprep.subr.mxu0 0.0
          %483 = vmatpush1.msra.mxu0 0.0
          %484 = vmatprep.subr.mxu0 0.0
          %485 = vmatpush1.msra.mxu0 0.0
          %486 = vmatprep.subr.mxu0 0.0
          %487 = vmatpush1.msra.mxu0 0.0
          %488 = vmatprep.subr.mxu0 0.0
          %489 = vmatpush1.msra.mxu0 0.0
          %490 = vmatprep.subr.mxu0 0.0
          %491 = vmatpush1.msra.mxu0 0.0
          %492 = vmatprep.subr.mxu0 0.0
          %493 = vmatpush1.msra.mxu0 0.0
          %494 = vmatprep.subr.mxu0 0.0
          %495 = vmatpush1.msra.mxu0 0.0
          %496 = vmatprep.subr.mxu0 0.0
          %497 = vmatpush1.msra.mxu0 0.0
          %498 = vmatprep.subr.mxu0 0.0
          %499 = vmatpush1.msra.mxu0 0.0
          %500 = vmatprep.subr.mxu0 0.0
          %501 = vmatpush1.msra.mxu0 0.0
          %502 = vmatprep.subr.mxu0 0.0
          %503 = vmatpush1.msra.mxu0 0.0
          %504 = vmatprep.subr.mxu0 0.0
          %505 = vmatpush1.msra.mxu0 0.0
          %506 = vmatprep.subr.mxu0 0.0
          %507 = vmatpush1.msra.mxu0 0.0
          %508 = vmatprep.subr.mxu0 0.0
          %509 = vmatpush1.msra.mxu0 0.0
          %510 = vmatprep.subr.mxu0 0.0
          %511 = vmatpush1.msra.mxu0 0.0
          %512 = vmatprep.subr.mxu0 0.0
          %513 = vmatpush1.msra.mxu0 0.0
          %514 = vmatprep.subr.mxu0 0.0
          %515 = vmatpush1.msra.mxu0 0.0
          %516 = vmatprep.subr.mxu0 0.0
          %517 = vmatpush1.msra.mxu0 0.0
          %518 = vmatprep.subr.mxu0 0.0
          %519 = vmatpush1.msra.mxu0 0.0
          %520 = vmatprep.subr.mxu0 0.0
          %521 = vmatpush1.msra.mxu0 0.0
          %522 = vmatprep.mubr.f32.mxu0 0.0
          %523 = vmatmul.mubr.f32.gmra.mrb[0].mxu0 %v456
          %v524 = vpop.f32.mrb[0].mxu0
          %v525 = vadd.f32 %v452, %v524
          %v526 = vpop.f32.mrb[0].mxu0
          %v527 = vadd.f32 %v452, %v526
          %528 = vdwg.mxu0
          %529 = vmatprep.subr.mxu0 %v398
          %530 = vmatpush1.msra.mxu0 %v397
          %531 = vmatprep.subr.mxu0 0.0
          %532 = vmatpush1.msra.mxu0 0.0
          %533 = vmatprep.subr.mxu0 0.0
          %534 = vmatpush1.msra.mxu0 0.0
          %535 = vmatprep.subr.mxu0 0.0
          %536 = vmatpush1.msra.mxu0 0.0
          %537 = vmatprep.subr.mxu0 0.0
          %538 = vmatpush1.msra.mxu0 0.0
          %539 = vmatprep.subr.mxu0 0.0
          %540 = vmatpush1.msra.mxu0 0.0
          %541 = vmatprep.subr.mxu0 0.0
          %542 = vmatpush1.msra.mxu0 0.0
          %543 = vmatprep.subr.mxu0 0.0
          %544 = vmatpush1.msra.mxu0 0.0
          %545 = vmatprep.subr.mxu0 0.0
          %546 = vmatpush1.msra.mxu0 0.0
          %547 = vmatprep.subr.mxu0 0.0
          %548 = vmatpush1.msra.mxu0 0.0
          %549 = vmatprep.subr.mxu0 0.0
          %550 = vmatpush1.msra.mxu0 0.0
          %551 = vmatprep.subr.mxu0 0.0
          %552 = vmatpush1.msra.mxu0 0.0
          %553 = vmatprep.subr.mxu0 0.0
          %554 = vmatpush1.msra.mxu0 0.0
          %555 = vmatprep.subr.mxu0 0.0
          %556 = vmatpush1.msra.mxu0 0.0
          %557 = vmatprep.subr.mxu0 0.0
          %558 = vmatpush1.msra.mxu0 0.0
          %559 = vmatprep.subr.mxu0 0.0
          %560 = vmatpush1.msra.mxu0 0.0
          %561 = vmatprep.subr.mxu0 0.0
          %562 = vmatpush1.msra.mxu0 0.0
          %563 = vmatprep.subr.mxu0 0.0
          %564 = vmatpush1.msra.mxu0 0.0
          %565 = vmatprep.subr.mxu0 0.0
          %566 = vmatpush1.msra.mxu0 0.0
          %567 = vmatprep.subr.mxu0 0.0
          %568 = vmatpush1.msra.mxu0 0.0
          %569 = vmatprep.subr.mxu0 0.0
          %570 = vmatpush1.msra.mxu0 0.0
          %571 = vmatprep.subr.mxu0 0.0
          %572 = vmatpush1.msra.mxu0 0.0
          %573 = vmatprep.subr.mxu0 0.0
          %574 = vmatpush1.msra.mxu0 0.0
          %575 = vmatprep.subr.mxu0 0.0
          %576 = vmatpush1.msra.mxu0 0.0
          %577 = vmatprep.subr.mxu0 0.0
          %578 = vmatpush1.msra.mxu0 0.0
          %579 = vmatprep.subr.mxu0 0.0
          %580 = vmatpush1.msra.mxu0 0.0
          %581 = vmatprep.subr.mxu0 0.0
          %582 = vmatpush1.msra.mxu0 0.0
          %583 = vmatprep.subr.mxu0 0.0
          %584 = vmatpush1.msra.mxu0 0.0
          %585 = vmatprep.subr.mxu0 0.0
          %586 = vmatpush1.msra.mxu0 0.0
          %587 = vmatprep.subr.mxu0 0.0
          %588 = vmatpush1.msra.mxu0 0.0
          %589 = vmatprep.subr.mxu0 0.0
          %590 = vmatpush1.msra.mxu0 0.0
          %591 = vmatprep.subr.mxu0 0.0
          %592 = vmatpush1.msra.mxu0 0.0
          %593 = vmatprep.mubr.f32.mxu0 0.0
          %594 = vmatmul.mubr.f32.gmra.mrb[0].mxu0 %v456
          %v595 = vpop.f32.mrb[0].mxu0
          %v596 = vadd.f32 %v452, %v595
          %v597 = vpop.f32.mrb[0].mxu0
          %v598 = vadd.f32 %v452, %v597
          %599 = vdwg.mxu0
          %600 = vmatprep.subr.mxu0 %v400
          %601 = vmatpush1.msra.mxu0 %v399
          %602 = vmatprep.subr.mxu0 0.0
          %603 = vmatpush1.msra.mxu0 0.0
          %604 = vmatprep.subr.mxu0 0.0
          %605 = vmatpush1.msra.mxu0 0.0
          %606 = vmatprep.subr.mxu0 0.0
          %607 = vmatpush1.msra.mxu0 0.0
          %608 = vmatprep.subr.mxu0 0.0
          %609 = vmatpush1.msra.mxu0 0.0
          %610 = vmatprep.subr.mxu0 0.0
          %611 = vmatpush1.msra.mxu0 0.0
          %612 = vmatprep.subr.mxu0 0.0
          %613 = vmatpush1.msra.mxu0 0.0
          %614 = vmatprep.subr.mxu0 0.0
          %615 = vmatpush1.msra.mxu0 0.0
          %616 = vmatprep.subr.mxu0 0.0
          %617 = vmatpush1.msra.mxu0 0.0
          %618 = vmatprep.subr.mxu0 0.0
          %619 = vmatpush1.msra.mxu0 0.0
          %620 = vmatprep.subr.mxu0 0.0
          %621 = vmatpush1.msra.mxu0 0.0
          %622 = vmatprep.subr.mxu0 0.0
          %623 = vmatpush1.msra.mxu0 0.0
          %624 = vmatprep.subr.mxu0 0.0
          %625 = vmatpush1.msra.mxu0 0.0
          %626 = vmatprep.subr.mxu0 0.0
          %627 = vmatpush1.msra.mxu0 0.0
          %628 = vmatprep.subr.mxu0 0.0
          %629 = vmatpush1.msra.mxu0 0.0
          %630 = vmatprep.subr.mxu0 0.0
          %631 = vmatpush1.msra.mxu0 0.0
          %632 = vmatprep.subr.mxu0 0.0
          %633 = vmatpush1.msra.mxu0 0.0
          %634 = vmatprep.subr.mxu0 0.0
          %635 = vmatpush1.msra.mxu0 0.0
          %636 = vmatprep.subr.mxu0 0.0
          %637 = vmatpush1.msra.mxu0 0.0
          %638 = vmatprep.subr.mxu0 0.0
          %639 = vmatpush1.msra.mxu0 0.0
          %640 = vmatprep.subr.mxu0 0.0
          %641 = vmatpush1.msra.mxu0 0.0
          %642 = vmatprep.subr.mxu0 0.0
          %643 = vmatpush1.msra.mxu0 0.0
          %644 = vmatprep.subr.mxu0 0.0
          %645 = vmatpush1.msra.mxu0 0.0
          %646 = vmatprep.subr.mxu0 0.0
          %647 = vmatpush1.msra.mxu0 0.0
          %648 = vmatprep.subr.mxu0 0.0
          %649 = vmatpush1.msra.mxu0 0.0
          %650 = vmatprep.subr.mxu0 0.0
          %651 = vmatpush1.msra.mxu0 0.0
          %652 = vmatprep.subr.mxu0 0.0
          %653 = vmatpush1.msra.mxu0 0.0
          %654 = vmatprep.subr.mxu0 0.0
          %655 = vmatpush1.msra.mxu0 0.0
          %656 = vmatprep.subr.mxu0 0.0
          %657 = vmatpush1.msra.mxu0 0.0
          %658 = vmatprep.subr.mxu0 0.0
          %659 = vmatpush1.msra.mxu0 0.0
          %660 = vmatprep.subr.mxu0 0.0
          %661 = vmatpush1.msra.mxu0 0.0
          %662 = vmatprep.subr.mxu0 0.0
          %663 = vmatpush1.msra.mxu0 0.0
          %664 = vmatprep.mubr.f32.mxu0 0.0
          %665 = vmatmul.mubr.f32.gmra.mrb[0].mxu0 %v456
          %v666 = vpop.f32.mrb[0].mxu0
          %v667 = vadd.f32 %v452, %v666
          %v668 = vpop.f32.mrb[0].mxu0
          %v669 = vadd.f32 %v452, %v668
          %670 = vdwg.mxu0
          %671 = vmatprep.subr.mxu0 %v402
          %672 = vmatpush1.msra.mxu0 %v401
          %673 = vmatprep.subr.mxu0 0.0
          %674 = vmatpush1.msra.mxu0 0.0
          %675 = vmatprep.subr.mxu0 0.0
          %676 = vmatpush1.msra.mxu0 0.0
          %677 = vmatprep.subr.mxu0 0.0
          %678 = vmatpush1.msra.mxu0 0.0
          %679 = vmatprep.subr.mxu0 0.0
          %680 = vmatpush1.msra.mxu0 0.0
          %681 = vmatprep.subr.mxu0 0.0
          %682 = vmatpush1.msra.mxu0 0.0
          %683 = vmatprep.subr.mxu0 0.0
          %684 = vmatpush1.msra.mxu0 0.0
          %685 = vmatprep.subr.mxu0 0.0
          %686 = vmatpush1.msra.mxu0 0.0
          %687 = vmatprep.subr.mxu0 0.0
          %688 = vmatpush1.msra.mxu0 0.0
          %689 = vmatprep.subr.mxu0 0.0
          %690 = vmatpush1.msra.mxu0 0.0
          %691 = vmatprep.subr.mxu0 0.0
          %692 = vmatpush1.msra.mxu0 0.0
          %693 = vmatprep.subr.mxu0 0.0
          %694 = vmatpush1.msra.mxu0 0.0
          %695 = vmatprep.subr.mxu0 0.0
          %696 = vmatpush1.msra.mxu0 0.0
          %697 = vmatprep.subr.mxu0 0.0
          %698 = vmatpush1.msra.mxu0 0.0
          %699 = vmatprep.subr.mxu0 0.0
          %700 = vmatpush1.msra.mxu0 0.0
          %701 = vmatprep.subr.mxu0 0.0
          %702 = vmatpush1.msra.mxu0 0.0
          %703 = vmatprep.subr.mxu0 0.0
          %704 = vmatpush1.msra.mxu0 0.0
          %705 = vmatprep.subr.mxu0 0.0
          %706 = vmatpush1.msra.mxu0 0.0
          %707 = vmatprep.subr.mxu0 0.0
          %708 = vmatpush1.msra.mxu0 0.0
          %709 = vmatprep.subr.mxu0 0.0
          %710 = vmatpush1.msra.mxu0 0.0
          %711 = vmatprep.subr.mxu0 0.0
          %712 = vmatpush1.msra.mxu0 0.0
          %713 = vmatprep.subr.mxu0 0.0
          %714 = vmatpush1.msra.mxu0 0.0
          %715 = vmatprep.subr.mxu0 0.0
          %716 = vmatpush1.msra.mxu0 0.0
          %717 = vmatprep.subr.mxu0 0.0
          %718 = vmatpush1.msra.mxu0 0.0
          %719 = vmatprep.subr.mxu0 0.0
          %720 = vmatpush1.msra.mxu0 0.0
          %721 = vmatprep.subr.mxu0 0.0
          %722 = vmatpush1.msra.mxu0 0.0
          %723 = vmatprep.subr.mxu0 0.0
          %724 = vmatpush1.msra.mxu0 0.0
          %725 = vmatprep.subr.mxu0 0.0
          %726 = vmatpush1.msra.mxu0 0.0
          %727 = vmatprep.subr.mxu0 0.0
          %728 = vmatpush1.msra.mxu0 0.0
          %729 = vmatprep.subr.mxu0 0.0
          %730 = vmatpush1.msra.mxu0 0.0
          %731 = vmatprep.subr.mxu0 0.0
          %732 = vmatpush1.msra.mxu0 0.0
          %733 = vmatprep.subr.mxu0 0.0
          %734 = vmatpush1.msra.mxu0 0.0
          %735 = vmatprep.mubr.f32.mxu0 0.0
          %736 = vmatmul.mubr.f32.gmra.mrb[0].mxu0 %v456
          %v737 = vpop.f32.mrb[0].mxu0
          %v738 = vadd.f32 %v452, %v737
          %v739 = vpop.f32.mrb[0].mxu0
          %v740 = vadd.f32 %v452, %v739
          %741 = vdwg.mxu0
          %742 = vmatprep.subr.mxu0 %v404
          %743 = vmatpush1.msra.mxu0 %v403
          %744 = vmatprep.subr.mxu0 0.0
          %745 = vmatpush1.msra.mxu0 0.0
          %746 = vmatprep.subr.mxu0 0.0
          %747 = vmatpush1.msra.mxu0 0.0
          %748 = vmatprep.subr.mxu0 0.0
          %749 = vmatpush1.msra.mxu0 0.0
          %750 = vmatprep.subr.mxu0 0.0
          %751 = vmatpush1.msra.mxu0 0.0
          %752 = vmatprep.subr.mxu0 0.0
          %753 = vmatpush1.msra.mxu0 0.0
          %754 = vmatprep.subr.mxu0 0.0
          %755 = vmatpush1.msra.mxu0 0.0
          %756 = vmatprep.subr.mxu0 0.0
          %757 = vmatpush1.msra.mxu0 0.0
          %758 = vmatprep.subr.mxu0 0.0
          %759 = vmatpush1.msra.mxu0 0.0
          %760 = vmatprep.subr.mxu0 0.0
          %761 = vmatpush1.msra.mxu0 0.0
          %762 = vmatprep.subr.mxu0 0.0
          %763 = vmatpush1.msra.mxu0 0.0
          %764 = vmatprep.subr.mxu0 0.0
          %765 = vmatpush1.msra.mxu0 0.0
          %766 = vmatprep.subr.mxu0 0.0
          %767 = vmatpush1.msra.mxu0 0.0
          %768 = vmatprep.subr.mxu0 0.0
          %769 = vmatpush1.msra.mxu0 0.0
          %770 = vmatprep.subr.mxu0 0.0
          %771 = vmatpush1.msra.mxu0 0.0
          %772 = vmatprep.subr.mxu0 0.0
          %773 = vmatpush1.msra.mxu0 0.0
          %774 = vmatprep.subr.mxu0 0.0
          %775 = vmatpush1.msra.mxu0 0.0
          %776 = vmatprep.subr.mxu0 0.0
          %777 = vmatpush1.msra.mxu0 0.0
          %778 = vmatprep.subr.mxu0 0.0
          %779 = vmatpush1.msra.mxu0 0.0
          %780 = vmatprep.subr.mxu0 0.0
          %781 = vmatpush1.msra.mxu0 0.0
          %782 = vmatprep.subr.mxu0 0.0
          %783 = vmatpush1.msra.mxu0 0.0
          %784 = vmatprep.subr.mxu0 0.0
          %785 = vmatpush1.msra.mxu0 0.0
          %786 = vmatprep.subr.mxu0 0.0
          %787 = vmatpush1.msra.mxu0 0.0
          %788 = vmatprep.subr.mxu0 0.0
          %789 = vmatpush1.msra.mxu0 0.0
          %790 = vmatprep.subr.mxu0 0.0
          %791 = vmatpush1.msra.mxu0 0.0
          %792 = vmatprep.subr.mxu0 0.0
          %793 = vmatpush1.msra.mxu0 0.0
          %794 = vmatprep.subr.mxu0 0.0
          %795 = vmatpush1.msra.mxu0 0.0
          %796 = vmatprep.subr.mxu0 0.0
          %797 = vmatpush1.msra.mxu0 0.0
          %798 = vmatprep.subr.mxu0 0.0
          %799 = vmatpush1.msra.mxu0 0.0
          %800 = vmatprep.subr.mxu0 0.0
          %801 = vmatpush1.msra.mxu0 0.0
          %802 = vmatprep.subr.mxu0 0.0
          %803 = vmatpush1.msra.mxu0 0.0
          %804 = vmatprep.subr.mxu0 0.0
          %805 = vmatpush1.msra.mxu0 0.0
          %806 = vmatprep.mubr.f32.mxu0 0.0
          %807 = vmatmul.mubr.f32.gmra.mrb[0].mxu0 %v456
          %v808 = vpop.f32.mrb[0].mxu0
          %v809 = vadd.f32 %v452, %v808
          %v810 = vpop.f32.mrb[0].mxu0
          %v811 = vadd.f32 %v452, %v810
          %812 = vdwg.mxu0
          %813 = vmatprep.subr.mxu0 %v406
          %814 = vmatpush1.msra.mxu0 %v405
          %815 = vmatprep.subr.mxu0 0.0
          %816 = vmatpush1.msra.mxu0 0.0
          %817 = vmatprep.subr.mxu0 0.0
          %818 = vmatpush1.msra.mxu0 0.0
          %819 = vmatprep.subr.mxu0 0.0
          %820 = vmatpush1.msra.mxu0 0.0
          %821 = vmatprep.subr.mxu0 0.0
          %822 = vmatpush1.msra.mxu0 0.0
          %823 = vmatprep.subr.mxu0 0.0
          %824 = vmatpush1.msra.mxu0 0.0
          %825 = vmatprep.subr.mxu0 0.0
          %826 = vmatpush1.msra.mxu0 0.0
          %827 = vmatprep.subr.mxu0 0.0
          %828 = vmatpush1.msra.mxu0 0.0
          %829 = vmatprep.subr.mxu0 0.0
          %830 = vmatpush1.msra.mxu0 0.0
          %831 = vmatprep.subr.mxu0 0.0
          %832 = vmatpush1.msra.mxu0 0.0
          %833 = vmatprep.subr.mxu0 0.0
          %834 = vmatpush1.msra.mxu0 0.0
          %835 = vmatprep.subr.mxu0 0.0
          %836 = vmatpush1.msra.mxu0 0.0
          %837 = vmatprep.subr.mxu0 0.0
          %838 = vmatpush1.msra.mxu0 0.0
          %839 = vmatprep.subr.mxu0 0.0
          %840 = vmatpush1.msra.mxu0 0.0
          %841 = vmatprep.subr.mxu0 0.0
          %842 = vmatpush1.msra.mxu0 0.0
          %843 = vmatprep.subr.mxu0 0.0
          %844 = vmatpush1.msra.mxu0 0.0
          %845 = vmatprep.subr.mxu0 0.0
          %846 = vmatpush1.msra.mxu0 0.0
          %847 = vmatprep.subr.mxu0 0.0
          %848 = vmatpush1.msra.mxu0 0.0
          %849 = vmatprep.subr.mxu0 0.0
          %850 = vmatpush1.msra.mxu0 0.0
          %851 = vmatprep.subr.mxu0 0.0
          %852 = vmatpush1.msra.mxu0 0.0
          %853 = vmatprep.subr.mxu0 0.0
          %854 = vmatpush1.msra.mxu0 0.0
          %855 = vmatprep.subr.mxu0 0.0
          %856 = vmatpush1.msra.mxu0 0.0
          %857 = vmatprep.subr.mxu0 0.0
          %858 = vmatpush1.msra.mxu0 0.0
          %859 = vmatprep.subr.mxu0 0.0
          %860 = vmatpush1.msra.mxu0 0.0
          %861 = vmatprep.subr.mxu0 0.0
          %862 = vmatpush1.msra.mxu0 0.0
          %863 = vmatprep.subr.mxu0 0.0
          %864 = vmatpush1.msra.mxu0 0.0
          %865 = vmatprep.subr.mxu0 0.0
          %866 = vmatpush1.msra.mxu0 0.0
          %867 = vmatprep.subr.mxu0 0.0
          %868 = vmatpush1.msra.mxu0 0.0
          %869 = vmatprep.subr.mxu0 0.0
          %870 = vmatpush1.msra.mxu0 0.0
          %871 = vmatprep.subr.mxu0 0.0
          %872 = vmatpush1.msra.mxu0 0.0
          %873 = vmatprep.subr.mxu0 0.0
          %874 = vmatpush1.msra.mxu0 0.0
          %875 = vmatprep.subr.mxu0 0.0
          %876 = vmatpush1.msra.mxu0 0.0
          %877 = vmatprep.mubr.f32.mxu0 0.0
          %878 = vmatmul.mubr.f32.gmra.mrb[0].mxu0 %v456
          %v879 = vpop.f32.mrb[0].mxu0
          %v880 = vadd.f32 %v452, %v879
          %v881 = vpop.f32.mrb[0].mxu0
          %v882 = vadd.f32 %v452, %v881
          %883 = vdwg.mxu0
          %884 = vmatprep.subr.mxu0 %v408
          %885 = vmatpush1.msra.mxu0 %v407
          %886 = vmatprep.subr.mxu0 0.0
          %887 = vmatpush1.msra.mxu0 0.0
          %888 = vmatprep.subr.mxu0 0.0
          %889 = vmatpush1.msra.mxu0 0.0
          %890 = vmatprep.subr.mxu0 0.0
          %891 = vmatpush1.msra.mxu0 0.0
          %892 = vmatprep.subr.mxu0 0.0
          %893 = vmatpush1.msra.mxu0 0.0
          %894 = vmatprep.subr.mxu0 0.0
          %895 = vmatpush1.msra.mxu0 0.0
          %896 = vmatprep.subr.mxu0 0.0
          %897 = vmatpush1.msra.mxu0 0.0
          %898 = vmatprep.subr.mxu0 0.0
          %899 = vmatpush1.msra.mxu0 0.0
          %900 = vmatprep.subr.mxu0 0.0
          %901 = vmatpush1.msra.mxu0 0.0
          %902 = vmatprep.subr.mxu0 0.0
          %903 = vmatpush1.msra.mxu0 0.0
          %904 = vmatprep.subr.mxu0 0.0
          %905 = vmatpush1.msra.mxu0 0.0
          %906 = vmatprep.subr.mxu0 0.0
          %907 = vmatpush1.msra.mxu0 0.0
          %908 = vmatprep.subr.mxu0 0.0
          %909 = vmatpush1.msra.mxu0 0.0
          %910 = vmatprep.subr.mxu0 0.0
          %911 = vmatpush1.msra.mxu0 0.0
          %912 = vmatprep.subr.mxu0 0.0
          %913 = vmatpush1.msra.mxu0 0.0
          %914 = vmatprep.subr.mxu0 0.0
          %915 = vmatpush1.msra.mxu0 0.0
          %916 = vmatprep.subr.mxu0 0.0
          %917 = vmatpush1.msra.mxu0 0.0
          %918 = vmatprep.subr.mxu0 0.0
          %919 = vmatpush1.msra.mxu0 0.0
          %920 = vmatprep.subr.mxu0 0.0
          %921 = vmatpush1.msra.mxu0 0.0
          %922 = vmatprep.subr.mxu0 0.0
          %923 = vmatpush1.msra.mxu0 0.0
          %924 = vmatprep.subr.mxu0 0.0
          %925 = vmatpush1.msra.mxu0 0.0
          %926 = vmatprep.subr.mxu0 0.0
          %927 = vmatpush1.msra.mxu0 0.0
          %928 = vmatprep.subr.mxu0 0.0
          %929 = vmatpush1.msra.mxu0 0.0
          %930 = vmatprep.subr.mxu0 0.0
          %931 = vmatpush1.msra.mxu0 0.0
          %932 = vmatprep.subr.mxu0 0.0
          %933 = vmatpush1.msra.mxu0 0.0
          %934 = vmatprep.subr.mxu0 0.0
          %935 = vmatpush1.msra.mxu0 0.0
          %936 = vmatprep.subr.mxu0 0.0
          %937 = vmatpush1.msra.mxu0 0.0
          %938 = vmatprep.subr.mxu0 0.0
          %939 = vmatpush1.msra.mxu0 0.0
          %940 = vmatprep.subr.mxu0 0.0
          %941 = vmatpush1.msra.mxu0 0.0
          %942 = vmatprep.subr.mxu0 0.0
          %943 = vmatpush1.msra.mxu0 0.0
          %944 = vmatprep.subr.mxu0 0.0
          %945 = vmatpush1.msra.mxu0 0.0
          %946 = vmatprep.subr.mxu0 0.0
          %947 = vmatpush1.msra.mxu0 0.0
          %948 = vmatprep.mubr.f32.mxu0 0.0
          %949 = vmatmul.mubr.f32.gmra.mrb[0].mxu0 %v456
          %v950 = vpop.f32.mrb[0].mxu0
          %v951 = vadd.f32 %v452, %v950
          %v952 = vpop.f32.mrb[0].mxu0
          %v953 = vadd.f32 %v452, %v952
          %954 = vdwg.mxu0
          %955 = vmatprep.subr.mxu0 %v410
          %956 = vmatpush1.msra.mxu0 %v409
          %957 = vmatprep.subr.mxu0 0.0
          %958 = vmatpush1.msra.mxu0 0.0
          %959 = vmatprep.subr.mxu0 0.0
          %960 = vmatpush1.msra.mxu0 0.0
          %961 = vmatprep.subr.mxu0 0.0
          %962 = vmatpush1.msra.mxu0 0.0
          %963 = vmatprep.subr.mxu0 0.0
          %964 = vmatpush1.msra.mxu0 0.0
          %965 = vmatprep.subr.mxu0 0.0
          %966 = vmatpush1.msra.mxu0 0.0
          %967 = vmatprep.subr.mxu0 0.0
          %968 = vmatpush1.msra.mxu0 0.0
          %969 = vmatprep.subr.mxu0 0.0
          %970 = vmatpush1.msra.mxu0 0.0
          %971 = vmatprep.subr.mxu0 0.0
          %972 = vmatpush1.msra.mxu0 0.0
          %973 = vmatprep.subr.mxu0 0.0
          %974 = vmatpush1.msra.mxu0 0.0
          %975 = vmatprep.subr.mxu0 0.0
          %976 = vmatpush1.msra.mxu0 0.0
          %977 = vmatprep.subr.mxu0 0.0
          %978 = vmatpush1.msra.mxu0 0.0
          %979 = vmatprep.subr.mxu0 0.0
          %980 = vmatpush1.msra.mxu0 0.0
          %981 = vmatprep.subr.mxu0 0.0
          %982 = vmatpush1.msra.mxu0 0.0
          %983 = vmatprep.subr.mxu0 0.0
          %984 = vmatpush1.msra.mxu0 0.0
          %985 = vmatprep.subr.mxu0 0.0
          %986 = vmatpush1.msra.mxu0 0.0
          %987 = vmatprep.subr.mxu0 0.0
          %988 = vmatpush1.msra.mxu0 0.0
          %989 = vmatprep.subr.mxu0 0.0
          %990 = vmatpush1.msra.mxu0 0.0
          %991 = vmatprep.subr.mxu0 0.0
          %992 = vmatpush1.msra.mxu0 0.0
          %993 = vmatprep.subr.mxu0 0.0
          %994 = vmatpush1.msra.mxu0 0.0
          %995 = vmatprep.subr.mxu0 0.0
          %996 = vmatpush1.msra.mxu0 0.0
          %997 = vmatprep.subr.mxu0 0.0
          %998 = vmatpush1.msra.mxu0 0.0
          %999 = vmatprep.subr.mxu0 0.0
          %1000 = vmatpush1.msra.mxu0 0.0
          %1001 = vmatprep.subr.mxu0 0.0
          %1002 = vmatpush1.msra.mxu0 0.0
          %1003 = vmatprep.subr.mxu0 0.0
          %1004 = vmatpush1.msra.mxu0 0.0
          %1005 = vmatprep.subr.mxu0 0.0
          %1006 = vmatpush1.msra.mxu0 0.0
          %1007 = vmatprep.subr.mxu0 0.0
          %1008 = vmatpush1.msra.mxu0 0.0
          %1009 = vmatprep.subr.mxu0 0.0
          %1010 = vmatpush1.msra.mxu0 0.0
          %1011 = vmatprep.subr.mxu0 0.0
          %1012 = vmatpush1.msra.mxu0 0.0
          %1013 = vmatprep.subr.mxu0 0.0
          %1014 = vmatpush1.msra.mxu0 0.0
          %1015 = vmatprep.subr.mxu0 0.0
          %1016 = vmatpush1.msra.mxu0 0.0
          %1017 = vmatprep.subr.mxu0 0.0
          %1018 = vmatpush1.msra.mxu0 0.0
          %1019 = vmatprep.mubr.f32.mxu0 0.0
          %1020 = vmatmul.mubr.f32.gmra.mrb[0].mxu0 %v456
          %v1021 = vpop.f32.mrb[0].mxu0
          %v1022 = vadd.f32 %v452, %v1021
          %v1023 = vpop.f32.mrb[0].mxu0
          %v1024 = vadd.f32 %v452, %v1023
          %1025 = vdwg.mxu0
          %v1026 = vxor.u32 %v525, 2147483648
          %v1027 = vxor.u32 %v527, 2147483648
          %v1028 = vxor.u32 %v596, 2147483648
          %v1029 = vxor.u32 %v598, 2147483648
          %v1030 = vxor.u32 %v667, 2147483648
          %v1031 = vxor.u32 %v669, 2147483648
          %v1032 = vxor.u32 %v738, 2147483648
          %v1033 = vxor.u32 %v740, 2147483648
          %v1034 = vxor.u32 %v809, 2147483648
          %v1035 = vxor.u32 %v811, 2147483648
          %v1036 = vxor.u32 %v880, 2147483648
          %v1037 = vxor.u32 %v882, 2147483648
          %v1038 = vxor.u32 %v951, 2147483648
          %v1039 = vxor.u32 %v953, 2147483648
          %v1040 = vxor.u32 %v1022, 2147483648
          %v1041 = vxor.u32 %v1024, 2147483648
          %v1042 = vmul.f32 %v1026, 1.442695
          %v1043 = vpow.pop %v1042
          %v1044 = vmul.f32 %v1027, 1.442695
          %v1045 = vpow.pop %v1044
          %v1046 = vmul.f32 %v1028, 1.442695
          %v1047 = vpow.pop %v1046
          %v1048 = vmul.f32 %v1029, 1.442695
          %v1049 = vpow.pop %v1048
          %v1050 = vmul.f32 %v1030, 1.442695
          %v1051 = vpow.pop %v1050
          %v1052 = vmul.f32 %v1031, 1.442695
          %v1053 = vpow.pop %v1052
          %v1054 = vmul.f32 %v1032, 1.442695
          %v1055 = vpow.pop %v1054
          %v1056 = vmul.f32 %v1033, 1.442695
          %v1057 = vpow.pop %v1056
          %v1058 = vmul.f32 %v1034, 1.442695
          %v1059 = vpow.pop %v1058
          %v1060 = vmul.f32 %v1035, 1.442695
          %v1061 = vpow.pop %v1060
          %v1062 = vmul.f32 %v1036, 1.442695
          %v1063 = vpow.pop %v1062
          %v1064 = vmul.f32 %v1037, 1.442695
          %v1065 = vpow.pop %v1064
          %v1066 = vmul.f32 %v1038, 1.442695
          %v1067 = vpow.pop %v1066
          %v1068 = vmul.f32 %v1039, 1.442695
          %v1069 = vpow.pop %v1068
          %v1070 = vmul.f32 %v1040, 1.442695
          %v1071 = vpow.pop %v1070
          %v1072 = vmul.f32 %v1041, 1.442695
          %v1073 = vpow.pop %v1072
          %v1074 = vadd.f32 %v1043, 1.0
          %v1075 = vadd.f32 %v1045, 1.0
          %v1076 = vadd.f32 %v1047, 1.0
          %v1077 = vadd.f32 %v1049, 1.0
          %v1078 = vadd.f32 %v1051, 1.0
          %v1079 = vadd.f32 %v1053, 1.0
          %v1080 = vadd.f32 %v1055, 1.0
          %v1081 = vadd.f32 %v1057, 1.0
          %v1082 = vadd.f32 %v1059, 1.0
          %v1083 = vadd.f32 %v1061, 1.0
          %v1084 = vadd.f32 %v1063, 1.0
          %v1085 = vadd.f32 %v1065, 1.0
          %v1086 = vadd.f32 %v1067, 1.0
          %v1087 = vadd.f32 %v1069, 1.0
          %v1088 = vadd.f32 %v1071, 1.0
          %v1089 = vadd.f32 %v1073, 1.0
          %v1090 = vrcp.pop %v1074
          %v1091 = vmul.f32 1.0, %v1090
          %v1092 = vrcp.pop %v1075
          %v1093 = vmul.f32 1.0, %v1092
          %v1094 = vrcp.pop %v1076
          %v1095 = vmul.f32 1.0, %v1094
          %v1096 = vrcp.pop %v1077
          %v1097 = vmul.f32 1.0, %v1096
          %v1098 = vrcp.pop %v1078
          %v1099 = vmul.f32 1.0, %v1098
          %v1100 = vrcp.pop %v1079
          %v1101 = vmul.f32 1.0, %v1100
          %v1102 = vrcp.pop %v1080
          %v1103 = vmul.f32 1.0, %v1102
          %v1104 = vrcp.pop %v1081
          %v1105 = vmul.f32 1.0, %v1104
          %v1106 = vrcp.pop %v1082
          %v1107 = vmul.f32 1.0, %v1106
          %v1108 = vrcp.pop %v1083
          %v1109 = vmul.f32 1.0, %v1108
          %v1110 = vrcp.pop %v1084
          %v1111 = vmul.f32 1.0, %v1110
          %v1112 = vrcp.pop %v1085
          %v1113 = vmul.f32 1.0, %v1112
          %v1114 = vrcp.pop %v1086
          %v1115 = vmul.f32 1.0, %v1114
          %v1116 = vrcp.pop %v1087
          %v1117 = vmul.f32 1.0, %v1116
          %v1118 = vrcp.pop %v1088
          %v1119 = vmul.f32 1.0, %v1118
          %v1120 = vrcp.pop %v1089
          %v1121 = vmul.f32 1.0, %v1120
          %v1122 = vmul.f32 %v525, %v1091
          %v1123 = vmul.f32 %v527, %v1093
          %v1124 = vmul.f32 %v596, %v1095
          %v1125 = vmul.f32 %v598, %v1097
          %v1126 = vmul.f32 %v667, %v1099
          %v1127 = vmul.f32 %v669, %v1101
          %v1128 = vmul.f32 %v738, %v1103
          %v1129 = vmul.f32 %v740, %v1105
          %v1130 = vmul.f32 %v809, %v1107
          %v1131 = vmul.f32 %v811, %v1109
          %v1132 = vmul.f32 %v880, %v1111
          %v1133 = vmul.f32 %v882, %v1113
          %v1134 = vmul.f32 %v951, %v1115
          %v1135 = vmul.f32 %v953, %v1117
          %v1136 = vmul.f32 %v1022, %v1119
          %v1137 = vmul.f32 %v1024, %v1121
          %v1138 = vld [vmem:[%s6] sm:$0xff]
          %v1139 = vld [vmem:[%s6 + $0x8] sm:$0xf]
          %v1140 = vld [vmem:[%s7] sm:$0xff]
          %v1141 = vld [vmem:[%s7 + $0x8] sm:$0xf]
          %1143 = vset.pattern.permute.xlu0 0
          %1144 = vperm.xlu0 %1143, %v1140
          %v1145 = vpop.permute.xlu0 %1144
          %1148 = vset.pattern.permute.xlu0 0
          %1149 = vperm.xlu0 %1148, %v1141
          %v1150 = vpop.permute.xlu0 %1149
          %v1153 = vsel %vm454, %v1138, 0
          %v1156 = vsel %vm454, %v1139, 0
          %1158 = vmatprep.subr.mxu0 %v1123
          %1159 = vmatpush1.msra.mxu0 %v1122
          %1160 = vmatprep.subr.mxu0 0.0
          %1161 = vmatpush1.msra.mxu0 0.0
          %1162 = vmatprep.subr.mxu0 0.0
          %1163 = vmatpush1.msra.mxu0 0.0
          %1164 = vmatprep.subr.mxu0 0.0
          %1165 = vmatpush1.msra.mxu0 0.0
          %1166 = vmatprep.subr.mxu0 0.0
          %1167 = vmatpush1.msra.mxu0 0.0
          %1168 = vmatprep.subr.mxu0 0.0
          %1169 = vmatpush1.msra.mxu0 0.0
          %1170 = vmatprep.subr.mxu0 0.0
          %1171 = vmatpush1.msra.mxu0 0.0
          %1172 = vmatprep.subr.mxu0 0.0
          %1173 = vmatpush1.msra.mxu0 0.0
          %1174 = vmatprep.subr.mxu0 0.0
          %1175 = vmatpush1.msra.mxu0 0.0
          %1176 = vmatprep.subr.mxu0 0.0
          %1177 = vmatpush1.msra.mxu0 0.0
          %1178 = vmatprep.subr.mxu0 0.0
          %1179 = vmatpush1.msra.mxu0 0.0
          %1180 = vmatprep.subr.mxu0 0.0
          %1181 = vmatpush1.msra.mxu0 0.0
          %1182 = vmatprep.subr.mxu0 0.0
          %1183 = vmatpush1.msra.mxu0 0.0
          %1184 = vmatprep.subr.mxu0 0.0
          %1185 = vmatpush1.msra.mxu0 0.0
          %1186 = vmatprep.subr.mxu0 0.0
          %1187 = vmatpush1.msra.mxu0 0.0
          %1188 = vmatprep.subr.mxu0 0.0
          %1189 = vmatpush1.msra.mxu0 0.0
          %1190 = vmatprep.subr.mxu0 0.0
          %1191 = vmatpush1.msra.mxu0 0.0
          %1192 = vmatprep.subr.mxu0 0.0
          %1193 = vmatpush1.msra.mxu0 0.0
          %1194 = vmatprep.subr.mxu0 0.0
          %1195 = vmatpush1.msra.mxu0 0.0
          %1196 = vmatprep.subr.mxu0 0.0
          %1197 = vmatpush1.msra.mxu0 0.0
          %1198 = vmatprep.subr.mxu0 0.0
          %1199 = vmatpush1.msra.mxu0 0.0
          %1200 = vmatprep.subr.mxu0 0.0
          %1201 = vmatpush1.msra.mxu0 0.0
          %1202 = vmatprep.subr.mxu0 0.0
          %1203 = vmatpush1.msra.mxu0 0.0
          %1204 = vmatprep.subr.mxu0 0.0
          %1205 = vmatpush1.msra.mxu0 0.0
          %1206 = vmatprep.subr.mxu0 0.0
          %1207 = vmatpush1.msra.mxu0 0.0
          %1208 = vmatprep.subr.mxu0 0.0
          %1209 = vmatpush1.msra.mxu0 0.0
          %1210 = vmatprep.subr.mxu0 0.0
          %1211 = vmatpush1.msra.mxu0 0.0
          %1212 = vmatprep.subr.mxu0 0.0
          %1213 = vmatpush1.msra.mxu0 0.0
          %1214 = vmatprep.subr.mxu0 0.0
          %1215 = vmatpush1.msra.mxu0 0.0
          %1216 = vmatprep.subr.mxu0 0.0
          %1217 = vmatpush1.msra.mxu0 0.0
          %1218 = vmatprep.subr.mxu0 0.0
          %1219 = vmatpush1.msra.mxu0 0.0
          %1220 = vmatprep.subr.mxu0 0.0
          %1221 = vmatpush1.msra.mxu0 0.0
          %1222 = vmatprep.mubr.f32.mxu0 0.0
          %1223 = vmatmul.mubr.f32.gmra.mrb[0].mxu0 %v1153
          %v1224 = vpop.f32.mrb[0].mxu0
          %v1225 = vadd.f32 %v1145, %v1224
          %v1226 = vpop.f32.mrb[0].mxu0
          %v1227 = vadd.f32 %v1145, %v1226
          %1228 = vmatprep.mubr.f32.mxu0 0.0
          %1229 = vmatmul.mubr.f32.gmra.mrb[0].mxu0 %v1156
          %v1230 = vpop.f32.mrb[0].mxu0
          %v1231 = vadd.f32 %v1150, %v1230
          %v1232 = vpop.f32.mrb[0].mxu0
          %v1233 = vadd.f32 %v1150, %v1232
          %1234 = vdwg.mxu0
          %1235 = vmatprep.subr.mxu0 %v1125
          %1236 = vmatpush1.msra.mxu0 %v1124
          %1237 = vmatprep.subr.mxu0 0.0
          %1238 = vmatpush1.msra.mxu0 0.0
          %1239 = vmatprep.subr.mxu0 0.0
          %1240 = vmatpush1.msra.mxu0 0.0
          %1241 = vmatprep.subr.mxu0 0.0
          %1242 = vmatpush1.msra.mxu0 0.0
          %1243 = vmatprep.subr.mxu0 0.0
          %1244 = vmatpush1.msra.mxu0 0.0
          %1245 = vmatprep.subr.mxu0 0.0
          %1246 = vmatpush1.msra.mxu0 0.0
          %1247 = vmatprep.subr.mxu0 0.0
          %1248 = vmatpush1.msra.mxu0 0.0
          %1249 = vmatprep.subr.mxu0 0.0
          %1250 = vmatpush1.msra.mxu0 0.0
          %1251 = vmatprep.subr.mxu0 0.0
          %1252 = vmatpush1.msra.mxu0 0.0
          %1253 = vmatprep.subr.mxu0 0.0
          %1254 = vmatpush1.msra.mxu0 0.0
          %1255 = vmatprep.subr.mxu0 0.0
          %1256 = vmatpush1.msra.mxu0 0.0
          %1257 = vmatprep.subr.mxu0 0.0
          %1258 = vmatpush1.msra.mxu0 0.0
          %1259 = vmatprep.subr.mxu0 0.0
          %1260 = vmatpush1.msra.mxu0 0.0
          %1261 = vmatprep.subr.mxu0 0.0
          %1262 = vmatpush1.msra.mxu0 0.0
          %1263 = vmatprep.subr.mxu0 0.0
          %1264 = vmatpush1.msra.mxu0 0.0
          %1265 = vmatprep.subr.mxu0 0.0
          %1266 = vmatpush1.msra.mxu0 0.0
          %1267 = vmatprep.subr.mxu0 0.0
          %1268 = vmatpush1.msra.mxu0 0.0
          %1269 = vmatprep.subr.mxu0 0.0
          %1270 = vmatpush1.msra.mxu0 0.0
          %1271 = vmatprep.subr.mxu0 0.0
          %1272 = vmatpush1.msra.mxu0 0.0
          %1273 = vmatprep.subr.mxu0 0.0
          %1274 = vmatpush1.msra.mxu0 0.0
          %1275 = vmatprep.subr.mxu0 0.0
          %1276 = vmatpush1.msra.mxu0 0.0
          %1277 = vmatprep.subr.mxu0 0.0
          %1278 = vmatpush1.msra.mxu0 0.0
          %1279 = vmatprep.subr.mxu0 0.0
          %1280 = vmatpush1.msra.mxu0 0.0
          %1281 = vmatprep.subr.mxu0 0.0
          %1282 = vmatpush1.msra.mxu0 0.0
          %1283 = vmatprep.subr.mxu0 0.0
          %1284 = vmatpush1.msra.mxu0 0.0
          %1285 = vmatprep.subr.mxu0 0.0
          %1286 = vmatpush1.msra.mxu0 0.0
          %1287 = vmatprep.subr.mxu0 0.0
          %1288 = vmatpush1.msra.mxu0 0.0
          %1289 = vmatprep.subr.mxu0 0.0
          %1290 = vmatpush1.msra.mxu0 0.0
          %1291 = vmatprep.subr.mxu0 0.0
          %1292 = vmatpush1.msra.mxu0 0.0
          %1293 = vmatprep.subr.mxu0 0.0
          %1294 = vmatpush1.msra.mxu0 0.0
          %1295 = vmatprep.subr.mxu0 0.0
          %1296 = vmatpush1.msra.mxu0 0.0
          %1297 = vmatprep.subr.mxu0 0.0
          %1298 = vmatpush1.msra.mxu0 0.0
          %1299 = vmatprep.mubr.f32.mxu0 0.0
          %1300 = vmatmul.mubr.f32.gmra.mrb[0].mxu0 %v1153
          %v1301 = vpop.f32.mrb[0].mxu0
          %v1302 = vadd.f32 %v1145, %v1301
          %v1303 = vpop.f32.mrb[0].mxu0
          %v1304 = vadd.f32 %v1145, %v1303
          %1305 = vmatprep.mubr.f32.mxu0 0.0
          %1306 = vmatmul.mubr.f32.gmra.mrb[0].mxu0 %v1156
          %v1307 = vpop.f32.mrb[0].mxu0
          %v1308 = vadd.f32 %v1150, %v1307
          %v1309 = vpop.f32.mrb[0].mxu0
          %v1310 = vadd.f32 %v1150, %v1309
          %1311 = vdwg.mxu0
          %1312 = vmatprep.subr.mxu0 %v1127
          %1313 = vmatpush1.msra.mxu0 %v1126
          %1314 = vmatprep.subr.mxu0 0.0
          %1315 = vmatpush1.msra.mxu0 0.0
          %1316 = vmatprep.subr.mxu0 0.0
          %1317 = vmatpush1.msra.mxu0 0.0
          %1318 = vmatprep.subr.mxu0 0.0
          %1319 = vmatpush1.msra.mxu0 0.0
          %1320 = vmatprep.subr.mxu0 0.0
          %1321 = vmatpush1.msra.mxu0 0.0
          %1322 = vmatprep.subr.mxu0 0.0
          %1323 = vmatpush1.msra.mxu0 0.0
          %1324 = vmatprep.subr.mxu0 0.0
          %1325 = vmatpush1.msra.mxu0 0.0
          %1326 = vmatprep.subr.mxu0 0.0
          %1327 = vmatpush1.msra.mxu0 0.0
          %1328 = vmatprep.subr.mxu0 0.0
          %1329 = vmatpush1.msra.mxu0 0.0
          %1330 = vmatprep.subr.mxu0 0.0
          %1331 = vmatpush1.msra.mxu0 0.0
          %1332 = vmatprep.subr.mxu0 0.0
          %1333 = vmatpush1.msra.mxu0 0.0
          %1334 = vmatprep.subr.mxu0 0.0
          %1335 = vmatpush1.msra.mxu0 0.0
          %1336 = vmatprep.subr.mxu0 0.0
          %1337 = vmatpush1.msra.mxu0 0.0
          %1338 = vmatprep.subr.mxu0 0.0
          %1339 = vmatpush1.msra.mxu0 0.0
          %1340 = vmatprep.subr.mxu0 0.0
          %1341 = vmatpush1.msra.mxu0 0.0
          %1342 = vmatprep.subr.mxu0 0.0
          %1343 = vmatpush1.msra.mxu0 0.0
          %1344 = vmatprep.subr.mxu0 0.0
          %1345 = vmatpush1.msra.mxu0 0.0
          %1346 = vmatprep.subr.mxu0 0.0
          %1347 = vmatpush1.msra.mxu0 0.0
          %1348 = vmatprep.subr.mxu0 0.0
          %1349 = vmatpush1.msra.mxu0 0.0
          %1350 = vmatprep.subr.mxu0 0.0
          %1351 = vmatpush1.msra.mxu0 0.0
          %1352 = vmatprep.subr.mxu0 0.0
          %1353 = vmatpush1.msra.mxu0 0.0
          %1354 = vmatprep.subr.mxu0 0.0
          %1355 = vmatpush1.msra.mxu0 0.0
          %1356 = vmatprep.subr.mxu0 0.0
          %1357 = vmatpush1.msra.mxu0 0.0
          %1358 = vmatprep.subr.mxu0 0.0
          %1359 = vmatpush1.msra.mxu0 0.0
          %1360 = vmatprep.subr.mxu0 0.0
          %1361 = vmatpush1.msra.mxu0 0.0
          %1362 = vmatprep.subr.mxu0 0.0
          %1363 = vmatpush1.msra.mxu0 0.0
          %1364 = vmatprep.subr.mxu0 0.0
          %1365 = vmatpush1.msra.mxu0 0.0
          %1366 = vmatprep.subr.mxu0 0.0
          %1367 = vmatpush1.msra.mxu0 0.0
          %1368 = vmatprep.subr.mxu0 0.0
          %1369 = vmatpush1.msra.mxu0 0.0
          %1370 = vmatprep.subr.mxu0 0.0
          %1371 = vmatpush1.msra.mxu0 0.0
          %1372 = vmatprep.subr.mxu0 0.0
          %1373 = vmatpush1.msra.mxu0 0.0
          %1374 = vmatprep.subr.mxu0 0.0
          %1375 = vmatpush1.msra.mxu0 0.0
          %1376 = vmatprep.mubr.f32.mxu0 0.0
          %1377 = vmatmul.mubr.f32.gmra.mrb[0].mxu0 %v1153
          %v1378 = vpop.f32.mrb[0].mxu0
          %v1379 = vadd.f32 %v1145, %v1378
          %v1380 = vpop.f32.mrb[0].mxu0
          %v1381 = vadd.f32 %v1145, %v1380
          %1382 = vmatprep.mubr.f32.mxu0 0.0
          %1383 = vmatmul.mubr.f32.gmra.mrb[0].mxu0 %v1156
          %v1384 = vpop.f32.mrb[0].mxu0
          %v1385 = vadd.f32 %v1150, %v1384
          %v1386 = vpop.f32.mrb[0].mxu0
          %v1387 = vadd.f32 %v1150, %v1386
          %1388 = vdwg.mxu0
          %1389 = vmatprep.subr.mxu0 %v1129
          %1390 = vmatpush1.msra.mxu0 %v1128
          %1391 = vmatprep.subr.mxu0 0.0
          %1392 = vmatpush1.msra.mxu0 0.0
          %1393 = vmatprep.subr.mxu0 0.0
          %1394 = vmatpush1.msra.mxu0 0.0
          %1395 = vmatprep.subr.mxu0 0.0
          %1396 = vmatpush1.msra.mxu0 0.0
          %1397 = vmatprep.subr.mxu0 0.0
          %1398 = vmatpush1.msra.mxu0 0.0
          %1399 = vmatprep.subr.mxu0 0.0
          %1400 = vmatpush1.msra.mxu0 0.0
          %1401 = vmatprep.subr.mxu0 0.0
          %1402 = vmatpush1.msra.mxu0 0.0
          %1403 = vmatprep.subr.mxu0 0.0
          %1404 = vmatpush1.msra.mxu0 0.0
          %1405 = vmatprep.subr.mxu0 0.0
          %1406 = vmatpush1.msra.mxu0 0.0
          %1407 = vmatprep.subr.mxu0 0.0
          %1408 = vmatpush1.msra.mxu0 0.0
          %1409 = vmatprep.subr.mxu0 0.0
          %1410 = vmatpush1.msra.mxu0 0.0
          %1411 = vmatprep.subr.mxu0 0.0
          %1412 = vmatpush1.msra.mxu0 0.0
          %1413 = vmatprep.subr.mxu0 0.0
          %1414 = vmatpush1.msra.mxu0 0.0
          %1415 = vmatprep.subr.mxu0 0.0
          %1416 = vmatpush1.msra.mxu0 0.0
          %1417 = vmatprep.subr.mxu0 0.0
          %1418 = vmatpush1.msra.mxu0 0.0
          %1419 = vmatprep.subr.mxu0 0.0
          %1420 = vmatpush1.msra.mxu0 0.0
          %1421 = vmatprep.subr.mxu0 0.0
          %1422 = vmatpush1.msra.mxu0 0.0
          %1423 = vmatprep.subr.mxu0 0.0
          %1424 = vmatpush1.msra.mxu0 0.0
          %1425 = vmatprep.subr.mxu0 0.0
          %1426 = vmatpush1.msra.mxu0 0.0
          %1427 = vmatprep.subr.mxu0 0.0
          %1428 = vmatpush1.msra.mxu0 0.0
          %1429 = vmatprep.subr.mxu0 0.0
          %1430 = vmatpush1.msra.mxu0 0.0
          %1431 = vmatprep.subr.mxu0 0.0
          %1432 = vmatpush1.msra.mxu0 0.0
          %1433 = vmatprep.subr.mxu0 0.0
          %1434 = vmatpush1.msra.mxu0 0.0
          %1435 = vmatprep.subr.mxu0 0.0
          %1436 = vmatpush1.msra.mxu0 0.0
          %1437 = vmatprep.subr.mxu0 0.0
          %1438 = vmatpush1.msra.mxu0 0.0
          %1439 = vmatprep.subr.mxu0 0.0
          %1440 = vmatpush1.msra.mxu0 0.0
          %1441 = vmatprep.subr.mxu0 0.0
          %1442 = vmatpush1.msra.mxu0 0.0
          %1443 = vmatprep.subr.mxu0 0.0
          %1444 = vmatpush1.msra.mxu0 0.0
          %1445 = vmatprep.subr.mxu0 0.0
          %1446 = vmatpush1.msra.mxu0 0.0
          %1447 = vmatprep.subr.mxu0 0.0
          %1448 = vmatpush1.msra.mxu0 0.0
          %1449 = vmatprep.subr.mxu0 0.0
          %1450 = vmatpush1.msra.mxu0 0.0
          %1451 = vmatprep.subr.mxu0 0.0
          %1452 = vmatpush1.msra.mxu0 0.0
          %1453 = vmatprep.mubr.f32.mxu0 0.0
          %1454 = vmatmul.mubr.f32.gmra.mrb[0].mxu0 %v1153
          %v1455 = vpop.f32.mrb[0].mxu0
          %v1456 = vadd.f32 %v1145, %v1455
          %v1457 = vpop.f32.mrb[0].mxu0
          %v1458 = vadd.f32 %v1145, %v1457
          %1459 = vmatprep.mubr.f32.mxu0 0.0
          %1460 = vmatmul.mubr.f32.gmra.mrb[0].mxu0 %v1156
          %v1461 = vpop.f32.mrb[0].mxu0
          %v1462 = vadd.f32 %v1150, %v1461
          %v1463 = vpop.f32.mrb[0].mxu0
          %v1464 = vadd.f32 %v1150, %v1463
          %1465 = vdwg.mxu0
          %1466 = vmatprep.subr.mxu0 %v1131
          %1467 = vmatpush1.msra.mxu0 %v1130
          %1468 = vmatprep.subr.mxu0 0.0
          %1469 = vmatpush1.msra.mxu0 0.0
          %1470 = vmatprep.subr.mxu0 0.0
          %1471 = vmatpush1.msra.mxu0 0.0
          %1472 = vmatprep.subr.mxu0 0.0
          %1473 = vmatpush1.msra.mxu0 0.0
          %1474 = vmatprep.subr.mxu0 0.0
          %1475 = vmatpush1.msra.mxu0 0.0
          %1476 = vmatprep.subr.mxu0 0.0
          %1477 = vmatpush1.msra.mxu0 0.0
          %1478 = vmatprep.subr.mxu0 0.0
          %1479 = vmatpush1.msra.mxu0 0.0
          %1480 = vmatprep.subr.mxu0 0.0
          %1481 = vmatpush1.msra.mxu0 0.0
          %1482 = vmatprep.subr.mxu0 0.0
          %1483 = vmatpush1.msra.mxu0 0.0
          %1484 = vmatprep.subr.mxu0 0.0
          %1485 = vmatpush1.msra.mxu0 0.0
          %1486 = vmatprep.subr.mxu0 0.0
          %1487 = vmatpush1.msra.mxu0 0.0
          %1488 = vmatprep.subr.mxu0 0.0
          %1489 = vmatpush1.msra.mxu0 0.0
          %1490 = vmatprep.subr.mxu0 0.0
          %1491 = vmatpush1.msra.mxu0 0.0
          %1492 = vmatprep.subr.mxu0 0.0
          %1493 = vmatpush1.msra.mxu0 0.0
          %1494 = vmatprep.subr.mxu0 0.0
          %1495 = vmatpush1.msra.mxu0 0.0
          %1496 = vmatprep.subr.mxu0 0.0
          %1497 = vmatpush1.msra.mxu0 0.0
          %1498 = vmatprep.subr.mxu0 0.0
          %1499 = vmatpush1.msra.mxu0 0.0
          %1500 = vmatprep.subr.mxu0 0.0
          %1501 = vmatpush1.msra.mxu0 0.0
          %1502 = vmatprep.subr.mxu0 0.0
          %1503 = vmatpush1.msra.mxu0 0.0
          %1504 = vmatprep.subr.mxu0 0.0
          %1505 = vmatpush1.msra.mxu0 0.0
          %1506 = vmatprep.subr.mxu0 0.0
          %1507 = vmatpush1.msra.mxu0 0.0
          %1508 = vmatprep.subr.mxu0 0.0
          %1509 = vmatpush1.msra.mxu0 0.0
          %1510 = vmatprep.subr.mxu0 0.0
          %1511 = vmatpush1.msra.mxu0 0.0
          %1512 = vmatprep.subr.mxu0 0.0
          %1513 = vmatpush1.msra.mxu0 0.0
          %1514 = vmatprep.subr.mxu0 0.0
          %1515 = vmatpush1.msra.mxu0 0.0
          %1516 = vmatprep.subr.mxu0 0.0
          %1517 = vmatpush1.msra.mxu0 0.0
          %1518 = vmatprep.subr.mxu0 0.0
          %1519 = vmatpush1.msra.mxu0 0.0
          %1520 = vmatprep.subr.mxu0 0.0
          %1521 = vmatpush1.msra.mxu0 0.0
          %1522 = vmatprep.subr.mxu0 0.0
          %1523 = vmatpush1.msra.mxu0 0.0
          %1524 = vmatprep.subr.mxu0 0.0
          %1525 = vmatpush1.msra.mxu0 0.0
          %1526 = vmatprep.subr.mxu0 0.0
          %1527 = vmatpush1.msra.mxu0 0.0
          %1528 = vmatprep.subr.mxu0 0.0
          %1529 = vmatpush1.msra.mxu0 0.0
          %1530 = vmatprep.mubr.f32.mxu0 0.0
          %1531 = vmatmul.mubr.f32.gmra.mrb[0].mxu0 %v1153
          %v1532 = vpop.f32.mrb[0].mxu0
          %v1533 = vadd.f32 %v1145, %v1532
          %v1534 = vpop.f32.mrb[0].mxu0
          %v1535 = vadd.f32 %v1145, %v1534
          %1536 = vmatprep.mubr.f32.mxu0 0.0
          %1537 = vmatmul.mubr.f32.gmra.mrb[0].mxu0 %v1156
          %v1538 = vpop.f32.mrb[0].mxu0
          %v1539 = vadd.f32 %v1150, %v1538
          %v1540 = vpop.f32.mrb[0].mxu0
          %v1541 = vadd.f32 %v1150, %v1540
          %1542 = vdwg.mxu0
          %1543 = vmatprep.subr.mxu0 %v1133
          %1544 = vmatpush1.msra.mxu0 %v1132
          %1545 = vmatprep.subr.mxu0 0.0
          %1546 = vmatpush1.msra.mxu0 0.0
          %1547 = vmatprep.subr.mxu0 0.0
          %1548 = vmatpush1.msra.mxu0 0.0
          %1549 = vmatprep.subr.mxu0 0.0
          %1550 = vmatpush1.msra.mxu0 0.0
          %1551 = vmatprep.subr.mxu0 0.0
          %1552 = vmatpush1.msra.mxu0 0.0
          %1553 = vmatprep.subr.mxu0 0.0
          %1554 = vmatpush1.msra.mxu0 0.0
          %1555 = vmatprep.subr.mxu0 0.0
          %1556 = vmatpush1.msra.mxu0 0.0
          %1557 = vmatprep.subr.mxu0 0.0
          %1558 = vmatpush1.msra.mxu0 0.0
          %1559 = vmatprep.subr.mxu0 0.0
          %1560 = vmatpush1.msra.mxu0 0.0
          %1561 = vmatprep.subr.mxu0 0.0
          %1562 = vmatpush1.msra.mxu0 0.0
          %1563 = vmatprep.subr.mxu0 0.0
          %1564 = vmatpush1.msra.mxu0 0.0
          %1565 = vmatprep.subr.mxu0 0.0
          %1566 = vmatpush1.msra.mxu0 0.0
          %1567 = vmatprep.subr.mxu0 0.0
          %1568 = vmatpush1.msra.mxu0 0.0
          %1569 = vmatprep.subr.mxu0 0.0
          %1570 = vmatpush1.msra.mxu0 0.0
          %1571 = vmatprep.subr.mxu0 0.0
          %1572 = vmatpush1.msra.mxu0 0.0
          %1573 = vmatprep.subr.mxu0 0.0
          %1574 = vmatpush1.msra.mxu0 0.0
          %1575 = vmatprep.subr.mxu0 0.0
          %1576 = vmatpush1.msra.mxu0 0.0
          %1577 = vmatprep.subr.mxu0 0.0
          %1578 = vmatpush1.msra.mxu0 0.0
          %1579 = vmatprep.subr.mxu0 0.0
          %1580 = vmatpush1.msra.mxu0 0.0
          %1581 = vmatprep.subr.mxu0 0.0
          %1582 = vmatpush1.msra.mxu0 0.0
          %1583 = vmatprep.subr.mxu0 0.0
          %1584 = vmatpush1.msra.mxu0 0.0
          %1585 = vmatprep.subr.mxu0 0.0
          %1586 = vmatpush1.msra.mxu0 0.0
          %1587 = vmatprep.subr.mxu0 0.0
          %1588 = vmatpush1.msra.mxu0 0.0
          %1589 = vmatprep.subr.mxu0 0.0
          %1590 = vmatpush1.msra.mxu0 0.0
          %1591 = vmatprep.subr.mxu0 0.0
          %1592 = vmatpush1.msra.mxu0 0.0
          %1593 = vmatprep.subr.mxu0 0.0
          %1594 = vmatpush1.msra.mxu0 0.0
          %1595 = vmatprep.subr.mxu0 0.0
          %1596 = vmatpush1.msra.mxu0 0.0
          %1597 = vmatprep.subr.mxu0 0.0
          %1598 = vmatpush1.msra.mxu0 0.0
          %1599 = vmatprep.subr.mxu0 0.0
          %1600 = vmatpush1.msra.mxu0 0.0
          %1601 = vmatprep.subr.mxu0 0.0
          %1602 = vmatpush1.msra.mxu0 0.0
          %1603 = vmatprep.subr.mxu0 0.0
          %1604 = vmatpush1.msra.mxu0 0.0
          %1605 = vmatprep.subr.mxu0 0.0
          %1606 = vmatpush1.msra.mxu0 0.0
          %1607 = vmatprep.mubr.f32.mxu0 0.0
          %1608 = vmatmul.mubr.f32.gmra.mrb[0].mxu0 %v1153
          %v1609 = vpop.f32.mrb[0].mxu0
          %v1610 = vadd.f32 %v1145, %v1609
          %v1611 = vpop.f32.mrb[0].mxu0
          %v1612 = vadd.f32 %v1145, %v1611
          %1613 = vmatprep.mubr.f32.mxu0 0.0
          %1614 = vmatmul.mubr.f32.gmra.mrb[0].mxu0 %v1156
          %v1615 = vpop.f32.mrb[0].mxu0
          %v1616 = vadd.f32 %v1150, %v1615
          %v1617 = vpop.f32.mrb[0].mxu0
          %v1618 = vadd.f32 %v1150, %v1617
          %1619 = vdwg.mxu0
          %1620 = vmatprep.subr.mxu0 %v1135
          %1621 = vmatpush1.msra.mxu0 %v1134
          %1622 = vmatprep.subr.mxu0 0.0
          %1623 = vmatpush1.msra.mxu0 0.0
          %1624 = vmatprep.subr.mxu0 0.0
          %1625 = vmatpush1.msra.mxu0 0.0
          %1626 = vmatprep.subr.mxu0 0.0
          %1627 = vmatpush1.msra.mxu0 0.0
          %1628 = vmatprep.subr.mxu0 0.0
          %1629 = vmatpush1.msra.mxu0 0.0
          %1630 = vmatprep.subr.mxu0 0.0
          %1631 = vmatpush1.msra.mxu0 0.0
          %1632 = vmatprep.subr.mxu0 0.0
          %1633 = vmatpush1.msra.mxu0 0.0
          %1634 = vmatprep.subr.mxu0 0.0
          %1635 = vmatpush1.msra.mxu0 0.0
          %1636 = vmatprep.subr.mxu0 0.0
          %1637 = vmatpush1.msra.mxu0 0.0
          %1638 = vmatprep.subr.mxu0 0.0
          %1639 = vmatpush1.msra.mxu0 0.0
          %1640 = vmatprep.subr.mxu0 0.0
          %1641 = vmatpush1.msra.mxu0 0.0
          %1642 = vmatprep.subr.mxu0 0.0
          %1643 = vmatpush1.msra.mxu0 0.0
          %1644 = vmatprep.subr.mxu0 0.0
          %1645 = vmatpush1.msra.mxu0 0.0
          %1646 = vmatprep.subr.mxu0 0.0
          %1647 = vmatpush1.msra.mxu0 0.0
          %1648 = vmatprep.subr.mxu0 0.0
          %1649 = vmatpush1.msra.mxu0 0.0
          %1650 = vmatprep.subr.mxu0 0.0
          %1651 = vmatpush1.msra.mxu0 0.0
          %1652 = vmatprep.subr.mxu0 0.0
          %1653 = vmatpush1.msra.mxu0 0.0
          %1654 = vmatprep.subr.mxu0 0.0
          %1655 = vmatpush1.msra.mxu0 0.0
          %1656 = vmatprep.subr.mxu0 0.0
          %1657 = vmatpush1.msra.mxu0 0.0
          %1658 = vmatprep.subr.mxu0 0.0
          %1659 = vmatpush1.msra.mxu0 0.0
          %1660 = vmatprep.subr.mxu0 0.0
          %1661 = vmatpush1.msra.mxu0 0.0
          %1662 = vmatprep.subr.mxu0 0.0
          %1663 = vmatpush1.msra.mxu0 0.0
          %1664 = vmatprep.subr.mxu0 0.0
          %1665 = vmatpush1.msra.mxu0 0.0
          %1666 = vmatprep.subr.mxu0 0.0
          %1667 = vmatpush1.msra.mxu0 0.0
          %1668 = vmatprep.subr.mxu0 0.0
          %1669 = vmatpush1.msra.mxu0 0.0
          %1670 = vmatprep.subr.mxu0 0.0
          %1671 = vmatpush1.msra.mxu0 0.0
          %1672 = vmatprep.subr.mxu0 0.0
          %1673 = vmatpush1.msra.mxu0 0.0
          %1674 = vmatprep.subr.mxu0 0.0
          %1675 = vmatpush1.msra.mxu0 0.0
          %1676 = vmatprep.subr.mxu0 0.0
          %1677 = vmatpush1.msra.mxu0 0.0
          %1678 = vmatprep.subr.mxu0 0.0
          %1679 = vmatpush1.msra.mxu0 0.0
          %1680 = vmatprep.subr.mxu0 0.0
          %1681 = vmatpush1.msra.mxu0 0.0
          %1682 = vmatprep.subr.mxu0 0.0
          %1683 = vmatpush1.msra.mxu0 0.0
          %1684 = vmatprep.mubr.f32.mxu0 0.0
          %1685 = vmatmul.mubr.f32.gmra.mrb[0].mxu0 %v1153
          %v1686 = vpop.f32.mrb[0].mxu0
          %v1687 = vadd.f32 %v1145, %v1686
          %v1688 = vpop.f32.mrb[0].mxu0
          %v1689 = vadd.f32 %v1145, %v1688
          %1690 = vmatprep.mubr.f32.mxu0 0.0
          %1691 = vmatmul.mubr.f32.gmra.mrb[0].mxu0 %v1156
          %v1692 = vpop.f32.mrb[0].mxu0
          %v1693 = vadd.f32 %v1150, %v1692
          %v1694 = vpop.f32.mrb[0].mxu0
          %v1695 = vadd.f32 %v1150, %v1694
          %1696 = vdwg.mxu0
          %1697 = vmatprep.subr.mxu0 %v1137
          %1698 = vmatpush1.msra.mxu0 %v1136
          %1699 = vmatprep.subr.mxu0 0.0
          %1700 = vmatpush1.msra.mxu0 0.0
          %1701 = vmatprep.subr.mxu0 0.0
          %1702 = vmatpush1.msra.mxu0 0.0
          %1703 = vmatprep.subr.mxu0 0.0
          %1704 = vmatpush1.msra.mxu0 0.0
          %1705 = vmatprep.subr.mxu0 0.0
          %1706 = vmatpush1.msra.mxu0 0.0
          %1707 = vmatprep.subr.mxu0 0.0
          %1708 = vmatpush1.msra.mxu0 0.0
          %1709 = vmatprep.subr.mxu0 0.0
          %1710 = vmatpush1.msra.mxu0 0.0
          %1711 = vmatprep.subr.mxu0 0.0
          %1712 = vmatpush1.msra.mxu0 0.0
          %1713 = vmatprep.subr.mxu0 0.0
          %1714 = vmatpush1.msra.mxu0 0.0
          %1715 = vmatprep.subr.mxu0 0.0
          %1716 = vmatpush1.msra.mxu0 0.0
          %1717 = vmatprep.subr.mxu0 0.0
          %1718 = vmatpush1.msra.mxu0 0.0
          %1719 = vmatprep.subr.mxu0 0.0
          %1720 = vmatpush1.msra.mxu0 0.0
          %1721 = vmatprep.subr.mxu0 0.0
          %1722 = vmatpush1.msra.mxu0 0.0
          %1723 = vmatprep.subr.mxu0 0.0
          %1724 = vmatpush1.msra.mxu0 0.0
          %1725 = vmatprep.subr.mxu0 0.0
          %1726 = vmatpush1.msra.mxu0 0.0
          %1727 = vmatprep.subr.mxu0 0.0
          %1728 = vmatpush1.msra.mxu0 0.0
          %1729 = vmatprep.subr.mxu0 0.0
          %1730 = vmatpush1.msra.mxu0 0.0
          %1731 = vmatprep.subr.mxu0 0.0
          %1732 = vmatpush1.msra.mxu0 0.0
          %1733 = vmatprep.subr.mxu0 0.0
          %1734 = vmatpush1.msra.mxu0 0.0
          %1735 = vmatprep.subr.mxu0 0.0
          %1736 = vmatpush1.msra.mxu0 0.0
          %1737 = vmatprep.subr.mxu0 0.0
          %1738 = vmatpush1.msra.mxu0 0.0
          %1739 = vmatprep.subr.mxu0 0.0
          %1740 = vmatpush1.msra.mxu0 0.0
          %1741 = vmatprep.subr.mxu0 0.0
          %1742 = vmatpush1.msra.mxu0 0.0
          %1743 = vmatprep.subr.mxu0 0.0
          %1744 = vmatpush1.msra.mxu0 0.0
          %1745 = vmatprep.subr.mxu0 0.0
          %1746 = vmatpush1.msra.mxu0 0.0
          %1747 = vmatprep.subr.mxu0 0.0
          %1748 = vmatpush1.msra.mxu0 0.0
          %1749 = vmatprep.subr.mxu0 0.0
          %1750 = vmatpush1.msra.mxu0 0.0
          %1751 = vmatprep.subr.mxu0 0.0
          %1752 = vmatpush1.msra.mxu0 0.0
          %1753 = vmatprep.subr.mxu0 0.0
          %1754 = vmatpush1.msra.mxu0 0.0
          %1755 = vmatprep.subr.mxu0 0.0
          %1756 = vmatpush1.msra.mxu0 0.0
          %1757 = vmatprep.subr.mxu0 0.0
          %1758 = vmatpush1.msra.mxu0 0.0
          %1759 = vmatprep.subr.mxu0 0.0
          %1760 = vmatpush1.msra.mxu0 0.0
          %1761 = vmatprep.mubr.f32.mxu0 0.0
          %1762 = vmatmul.mubr.f32.gmra.mrb[0].mxu0 %v1153
          %v1763 = vpop.f32.mrb[0].mxu0
          %v1764 = vadd.f32 %v1145, %v1763
          %v1765 = vpop.f32.mrb[0].mxu0
          %v1766 = vadd.f32 %v1145, %v1765
          %1767 = vmatprep.mubr.f32.mxu0 0.0
          %1768 = vmatmul.mubr.f32.gmra.mrb[0].mxu0 %v1156
          %v1769 = vpop.f32.mrb[0].mxu0
          %v1770 = vadd.f32 %v1150, %v1769
          %v1771 = vpop.f32.mrb[0].mxu0
          %v1772 = vadd.f32 %v1150, %v1771
          %1773 = vdwg.mxu0
          %v1774 = vlaneseq
          %v1775 = vshrl.u32 %v1774, 7
          %v1776 = vsub.s32 0, %v1775
          %v1777 = vrot.slane %v411, %v1776
          %v1778 = vlaneseq
          %v1779 = vshrl.u32 %v1778, 7
          %v1780 = vsub.s32 0, %v1779
          %v1781 = vrot.slane %v412, %v1780
          %v1782 = vlaneseq
          %v1783 = vshrl.u32 %v1782, 7
          %v1784 = vsub.s32 0, %v1783
          %v1785 = vrot.slane %v413, %v1784
          %v1786 = vlaneseq
          %v1787 = vshrl.u32 %v1786, 7
          %v1788 = vsub.s32 0, %v1787
          %v1789 = vrot.slane %v414, %v1788
          %v1790 = vlaneseq
          %v1791 = vshrl.u32 %v1790, 7
          %v1792 = vsub.s32 0, %v1791
          %v1793 = vrot.slane %v415, %v1792
          %v1794 = vlaneseq
          %v1795 = vshrl.u32 %v1794, 7
          %v1796 = vsub.s32 0, %v1795
          %v1797 = vrot.slane %v416, %v1796
          %v1798 = vlaneseq
          %v1799 = vshrl.u32 %v1798, 7
          %v1800 = vsub.s32 0, %v1799
          %v1801 = vrot.slane %v417, %v1800
          %v1802 = vlaneseq
          %v1803 = vshrl.u32 %v1802, 7
          %v1804 = vsub.s32 0, %v1803
          %v1805 = vrot.slane %v418, %v1804
          %v1806 = vlaneseq
          %v1807 = vshrl.u32 %v1806, 7
          %v1808 = vsub.s32 0, %v1807
          %v1809 = vrot.slane %v419, %v1808
          %v1810 = vlaneseq
          %v1811 = vshrl.u32 %v1810, 7
          %v1812 = vsub.s32 0, %v1811
          %v1813 = vrot.slane %v420, %v1812
          %v1814 = vlaneseq
          %v1815 = vshrl.u32 %v1814, 7
          %v1816 = vsub.s32 0, %v1815
          %v1817 = vrot.slane %v421, %v1816
          %v1818 = vlaneseq
          %v1819 = vshrl.u32 %v1818, 7
          %v1820 = vsub.s32 0, %v1819
          %v1821 = vrot.slane %v422, %v1820
          %v1822 = vlaneseq
          %v1823 = vshrl.u32 %v1822, 7
          %v1824 = vsub.s32 0, %v1823
          %v1825 = vrot.slane %v423, %v1824
          %v1826 = vlaneseq
          %v1827 = vshrl.u32 %v1826, 7
          %v1828 = vsub.s32 0, %v1827
          %v1829 = vrot.slane %v424, %v1828
          %v1830 = vlaneseq
          %v1831 = vshrl.u32 %v1830, 7
          %v1832 = vsub.s32 0, %v1831
          %v1833 = vrot.slane %v425, %v1832
          %v1834 = vlaneseq
          %v1835 = vshrl.u32 %v1834, 7
          %v1836 = vsub.s32 0, %v1835
          %v1837 = vrot.slane %v426, %v1836
          %v1838 = vmul.f32 %v1225, %v1777
          %v1839 = vmul.f32 %v1227, %v1781
          %v1840 = vmul.f32 %v1302, %v1785
          %v1841 = vmul.f32 %v1304, %v1789
          %v1842 = vmul.f32 %v1379, %v1793
          %v1843 = vmul.f32 %v1381, %v1797
          %v1844 = vmul.f32 %v1456, %v1801
          %v1845 = vmul.f32 %v1458, %v1805
          %v1846 = vmul.f32 %v1533, %v1809
          %v1847 = vmul.f32 %v1535, %v1813
          %v1848 = vmul.f32 %v1610, %v1817
          %v1849 = vmul.f32 %v1612, %v1821
          %v1850 = vmul.f32 %v1687, %v1825
          %v1851 = vmul.f32 %v1689, %v1829
          %v1852 = vmul.f32 %v1764, %v1833
          %v1853 = vmul.f32 %v1766, %v1837
          %v1854 = vlaneseq
          %v1855 = vshrl.u32 %v1854, 7
          %v1856 = vsub.s32 1, %v1855
          %v1857 = vrot.slane %v411, %v1856
          %v1858 = vlaneseq
          %v1859 = vshrl.u32 %v1858, 7
          %v1860 = vsub.s32 1, %v1859
          %v1861 = vrot.slane %v412, %v1860
          %v1862 = vlaneseq
          %v1863 = vshrl.u32 %v1862, 7
          %v1864 = vsub.s32 1, %v1863
          %v1865 = vrot.slane %v413, %v1864
          %v1866 = vlaneseq
          %v1867 = vshrl.u32 %v1866, 7
          %v1868 = vsub.s32 1, %v1867
          %v1869 = vrot.slane %v414, %v1868
          %v1870 = vlaneseq
          %v1871 = vshrl.u32 %v1870, 7
          %v1872 = vsub.s32 1, %v1871
          %v1873 = vrot.slane %v415, %v1872
          %v1874 = vlaneseq
          %v1875 = vshrl.u32 %v1874, 7
          %v1876 = vsub.s32 1, %v1875
          %v1877 = vrot.slane %v416, %v1876
          %v1878 = vlaneseq
          %v1879 = vshrl.u32 %v1878, 7
          %v1880 = vsub.s32 1, %v1879
          %v1881 = vrot.slane %v417, %v1880
          %v1882 = vlaneseq
          %v1883 = vshrl.u32 %v1882, 7
          %v1884 = vsub.s32 1, %v1883
          %v1885 = vrot.slane %v418, %v1884
          %v1886 = vlaneseq
          %v1887 = vshrl.u32 %v1886, 7
          %v1888 = vsub.s32 1, %v1887
          %v1889 = vrot.slane %v419, %v1888
          %v1890 = vlaneseq
          %v1891 = vshrl.u32 %v1890, 7
          %v1892 = vsub.s32 1, %v1891
          %v1893 = vrot.slane %v420, %v1892
          %v1894 = vlaneseq
          %v1895 = vshrl.u32 %v1894, 7
          %v1896 = vsub.s32 1, %v1895
          %v1897 = vrot.slane %v421, %v1896
          %v1898 = vlaneseq
          %v1899 = vshrl.u32 %v1898, 7
          %v1900 = vsub.s32 1, %v1899
          %v1901 = vrot.slane %v422, %v1900
          %v1902 = vlaneseq
          %v1903 = vshrl.u32 %v1902, 7
          %v1904 = vsub.s32 1, %v1903
          %v1905 = vrot.slane %v423, %v1904
          %v1906 = vlaneseq
          %v1907 = vshrl.u32 %v1906, 7
          %v1908 = vsub.s32 1, %v1907
          %v1909 = vrot.slane %v424, %v1908
          %v1910 = vlaneseq
          %v1911 = vshrl.u32 %v1910, 7
          %v1912 = vsub.s32 1, %v1911
          %v1913 = vrot.slane %v425, %v1912
          %v1914 = vlaneseq
          %v1915 = vshrl.u32 %v1914, 7
          %v1916 = vsub.s32 1, %v1915
          %v1917 = vrot.slane %v426, %v1916
          %v1918 = vmul.f32 %v1225, %v1857
          %v1919 = vmul.f32 %v1227, %v1861
          %v1920 = vmul.f32 %v1302, %v1865
          %v1921 = vmul.f32 %v1304, %v1869
          %v1922 = vmul.f32 %v1379, %v1873
          %v1923 = vmul.f32 %v1381, %v1877
          %v1924 = vmul.f32 %v1456, %v1881
          %v1925 = vmul.f32 %v1458, %v1885
          %v1926 = vmul.f32 %v1533, %v1889
          %v1927 = vmul.f32 %v1535, %v1893
          %v1928 = vmul.f32 %v1610, %v1897
          %v1929 = vmul.f32 %v1612, %v1901
          %v1930 = vmul.f32 %v1687, %v1905
          %v1931 = vmul.f32 %v1689, %v1909
          %v1932 = vmul.f32 %v1764, %v1913
          %v1933 = vmul.f32 %v1766, %v1917
          %v1950 = vrot.slane %v1918, 2
          %v1951 = vrot.slane %v1919, 2
          %v1952 = vrot.slane %v1920, 2
          %v1953 = vrot.slane %v1921, 2
          %v1954 = vrot.slane %v1922, 2
          %v1955 = vrot.slane %v1923, 2
          %v1956 = vrot.slane %v1924, 2
          %v1957 = vrot.slane %v1925, 2
          %v1958 = vrot.slane %v1926, 2
          %v1959 = vrot.slane %v1927, 2
          %v1960 = vrot.slane %v1928, 2
          %v1961 = vrot.slane %v1929, 2
          %v1962 = vrot.slane %v1930, 2
          %v1963 = vrot.slane %v1931, 2
          %v1964 = vrot.slane %v1932, 2
          %v1965 = vrot.slane %v1933, 2
          %v1982 = vadd.f32 %v1838, %v1950
          %v1983 = vadd.f32 %v1839, %v1951
          %v1984 = vadd.f32 %v1840, %v1952
          %v1985 = vadd.f32 %v1841, %v1953
          %v1986 = vadd.f32 %v1842, %v1954
          %v1987 = vadd.f32 %v1843, %v1955
          %v1988 = vadd.f32 %v1844, %v1956
          %v1989 = vadd.f32 %v1845, %v1957
          %v1990 = vadd.f32 %v1846, %v1958
          %v1991 = vadd.f32 %v1847, %v1959
          %v1992 = vadd.f32 %v1848, %v1960
          %v1993 = vadd.f32 %v1849, %v1961
          %v1994 = vadd.f32 %v1850, %v1962
          %v1995 = vadd.f32 %v1851, %v1963
          %v1996 = vadd.f32 %v1852, %v1964
          %v1997 = vadd.f32 %v1853, %v1965
          %vm2030 = vcmask 1043456
          %v2031 = vrot.slane %v411, 4
          %v2032 = vrot.slane %v427, 4
          %v2033 = vsel %vm2030, %v2031, %v2032
          %v2034 = vrot.slane %v412, 4
          %v2035 = vrot.slane %v428, 4
          %v2036 = vsel %vm2030, %v2034, %v2035
          %v2037 = vrot.slane %v413, 4
          %v2038 = vrot.slane %v429, 4
          %v2039 = vsel %vm2030, %v2037, %v2038
          %v2040 = vrot.slane %v414, 4
          %v2041 = vrot.slane %v430, 4
          %v2042 = vsel %vm2030, %v2040, %v2041
          %v2043 = vrot.slane %v415, 4
          %v2044 = vrot.slane %v431, 4
          %v2045 = vsel %vm2030, %v2043, %v2044
          %v2046 = vrot.slane %v416, 4
          %v2047 = vrot.slane %v432, 4
          %v2048 = vsel %vm2030, %v2046, %v2047
          %v2049 = vrot.slane %v417, 4
          %v2050 = vrot.slane %v433, 4
          %v2051 = vsel %vm2030, %v2049, %v2050
          %v2052 = vrot.slane %v418, 4
          %v2053 = vrot.slane %v434, 4
          %v2054 = vsel %vm2030, %v2052, %v2053
          %v2055 = vrot.slane %v419, 4
          %v2056 = vrot.slane %v435, 4
          %v2057 = vsel %vm2030, %v2055, %v2056
          %v2058 = vrot.slane %v420, 4
          %v2059 = vrot.slane %v436, 4
          %v2060 = vsel %vm2030, %v2058, %v2059
          %v2061 = vrot.slane %v421, 4
          %v2062 = vrot.slane %v437, 4
          %v2063 = vsel %vm2030, %v2061, %v2062
          %v2064 = vrot.slane %v422, 4
          %v2065 = vrot.slane %v438, 4
          %v2066 = vsel %vm2030, %v2064, %v2065
          %v2067 = vrot.slane %v423, 4
          %v2068 = vrot.slane %v439, 4
          %v2069 = vsel %vm2030, %v2067, %v2068
          %v2070 = vrot.slane %v424, 4
          %v2071 = vrot.slane %v440, 4
          %v2072 = vsel %vm2030, %v2070, %v2071
          %v2073 = vrot.slane %v425, 4
          %v2074 = vrot.slane %v441, 4
          %v2075 = vsel %vm2030, %v2073, %v2074
          %v2076 = vrot.slane %v426, 4
          %v2077 = vrot.slane %v442, 4
          %v2078 = vsel %vm2030, %v2076, %v2077
          %v2095 = vmul.f32 %v411, %v2033
          %v2096 = vmul.f32 %v412, %v2036
          %v2097 = vmul.f32 %v413, %v2039
          %v2098 = vmul.f32 %v414, %v2042
          %v2099 = vmul.f32 %v415, %v2045
          %v2100 = vmul.f32 %v416, %v2048
          %v2101 = vmul.f32 %v417, %v2051
          %v2102 = vmul.f32 %v418, %v2054
          %v2103 = vmul.f32 %v419, %v2057
          %v2104 = vmul.f32 %v420, %v2060
          %v2105 = vmul.f32 %v421, %v2063
          %v2106 = vmul.f32 %v422, %v2066
          %v2107 = vmul.f32 %v423, %v2069
          %v2108 = vmul.f32 %v424, %v2072
          %v2109 = vmul.f32 %v425, %v2075
          %v2110 = vmul.f32 %v426, %v2078
          %v2127 = vrot.slane %v2095, 2
          %v2128 = vrot.slane %v2096, 2
          %v2129 = vrot.slane %v2097, 2
          %v2130 = vrot.slane %v2098, 2
          %v2131 = vrot.slane %v2099, 2
          %v2132 = vrot.slane %v2100, 2
          %v2133 = vrot.slane %v2101, 2
          %v2134 = vrot.slane %v2102, 2
          %v2135 = vrot.slane %v2103, 2
          %v2136 = vrot.slane %v2104, 2
          %v2137 = vrot.slane %v2105, 2
          %v2138 = vrot.slane %v2106, 2
          %v2139 = vrot.slane %v2107, 2
          %v2140 = vrot.slane %v2108, 2
          %v2141 = vrot.slane %v2109, 2
          %v2142 = vrot.slane %v2110, 2
          %vm2159 = vcmask 1042432
          %v2160 = vsel %vm2159, %v2127, 0.0
          %v2161 = vrot.slane %v2160, 4
          %v2162 = vadd.f32 %v2160, %v2161
          %v2163 = vrot.slane %v2162, 2
          %v2164 = vadd.f32 %v2162, %v2163
          %v2165 = vrot.slane %v2164, 1
          %v2166 = vadd.f32 %v2164, %v2165
          %v2167 = vsel %vm2159, %v2128, 0.0
          %v2168 = vrot.slane %v2167, 4
          %v2169 = vadd.f32 %v2167, %v2168
          %v2170 = vrot.slane %v2169, 2
          %v2171 = vadd.f32 %v2169, %v2170
          %v2172 = vrot.slane %v2171, 1
          %v2173 = vadd.f32 %v2171, %v2172
          %v2174 = vsel %vm2159, %v2129, 0.0
          %v2175 = vrot.slane %v2174, 4
          %v2176 = vadd.f32 %v2174, %v2175
          %v2177 = vrot.slane %v2176, 2
          %v2178 = vadd.f32 %v2176, %v2177
          %v2179 = vrot.slane %v2178, 1
          %v2180 = vadd.f32 %v2178, %v2179
          %v2181 = vsel %vm2159, %v2130, 0.0
          %v2182 = vrot.slane %v2181, 4
          %v2183 = vadd.f32 %v2181, %v2182
          %v2184 = vrot.slane %v2183, 2
          %v2185 = vadd.f32 %v2183, %v2184
          %v2186 = vrot.slane %v2185, 1
          %v2187 = vadd.f32 %v2185, %v2186
          %v2188 = vsel %vm2159, %v2131, 0.0
          %v2189 = vrot.slane %v2188, 4
          %v2190 = vadd.f32 %v2188, %v2189
          %v2191 = vrot.slane %v2190, 2
          %v2192 = vadd.f32 %v2190, %v2191
          %v2193 = vrot.slane %v2192, 1
          %v2194 = vadd.f32 %v2192, %v2193
          %v2195 = vsel %vm2159, %v2132, 0.0
          %v2196 = vrot.slane %v2195, 4
          %v2197 = vadd.f32 %v2195, %v2196
          %v2198 = vrot.slane %v2197, 2
          %v2199 = vadd.f32 %v2197, %v2198
          %v2200 = vrot.slane %v2199, 1
          %v2201 = vadd.f32 %v2199, %v2200
          %v2202 = vsel %vm2159, %v2133, 0.0
          %v2203 = vrot.slane %v2202, 4
          %v2204 = vadd.f32 %v2202, %v2203
          %v2205 = vrot.slane %v2204, 2
          %v2206 = vadd.f32 %v2204, %v2205
          %v2207 = vrot.slane %v2206, 1
          %v2208 = vadd.f32 %v2206, %v2207
          %v2209 = vsel %vm2159, %v2134, 0.0
          %v2210 = vrot.slane %v2209, 4
          %v2211 = vadd.f32 %v2209, %v2210
          %v2212 = vrot.slane %v2211, 2
          %v2213 = vadd.f32 %v2211, %v2212
          %v2214 = vrot.slane %v2213, 1
          %v2215 = vadd.f32 %v2213, %v2214
          %v2216 = vsel %vm2159, %v2135, 0.0
          %v2217 = vrot.slane %v2216, 4
          %v2218 = vadd.f32 %v2216, %v2217
          %v2219 = vrot.slane %v2218, 2
          %v2220 = vadd.f32 %v2218, %v2219
          %v2221 = vrot.slane %v2220, 1
          %v2222 = vadd.f32 %v2220, %v2221
          %v2223 = vsel %vm2159, %v2136, 0.0
          %v2224 = vrot.slane %v2223, 4
          %v2225 = vadd.f32 %v2223, %v2224
          %v2226 = vrot.slane %v2225, 2
          %v2227 = vadd.f32 %v2225, %v2226
          %v2228 = vrot.slane %v2227, 1
          %v2229 = vadd.f32 %v2227, %v2228
          %v2230 = vsel %vm2159, %v2137, 0.0
          %v2231 = vrot.slane %v2230, 4
          %v2232 = vadd.f32 %v2230, %v2231
          %v2233 = vrot.slane %v2232, 2
          %v2234 = vadd.f32 %v2232, %v2233
          %v2235 = vrot.slane %v2234, 1
          %v2236 = vadd.f32 %v2234, %v2235
          %v2237 = vsel %vm2159, %v2138, 0.0
          %v2238 = vrot.slane %v2237, 4
          %v2239 = vadd.f32 %v2237, %v2238
          %v2240 = vrot.slane %v2239, 2
          %v2241 = vadd.f32 %v2239, %v2240
          %v2242 = vrot.slane %v2241, 1
          %v2243 = vadd.f32 %v2241, %v2242
          %v2244 = vsel %vm2159, %v2139, 0.0
          %v2245 = vrot.slane %v2244, 4
          %v2246 = vadd.f32 %v2244, %v2245
          %v2247 = vrot.slane %v2246, 2
          %v2248 = vadd.f32 %v2246, %v2247
          %v2249 = vrot.slane %v2248, 1
          %v2250 = vadd.f32 %v2248, %v2249
          %v2251 = vsel %vm2159, %v2140, 0.0
          %v2252 = vrot.slane %v2251, 4
          %v2253 = vadd.f32 %v2251, %v2252
          %v2254 = vrot.slane %v2253, 2
          %v2255 = vadd.f32 %v2253, %v2254
          %v2256 = vrot.slane %v2255, 1
          %v2257 = vadd.f32 %v2255, %v2256
          %v2258 = vsel %vm2159, %v2141, 0.0
          %v2259 = vrot.slane %v2258, 4
          %v2260 = vadd.f32 %v2258, %v2259
          %v2261 = vrot.slane %v2260, 2
          %v2262 = vadd.f32 %v2260, %v2261
          %v2263 = vrot.slane %v2262, 1
          %v2264 = vadd.f32 %v2262, %v2263
          %v2265 = vsel %vm2159, %v2142, 0.0
          %v2266 = vrot.slane %v2265, 4
          %v2267 = vadd.f32 %v2265, %v2266
          %v2268 = vrot.slane %v2267, 2
          %v2269 = vadd.f32 %v2267, %v2268
          %v2270 = vrot.slane %v2269, 1
          %v2271 = vadd.f32 %v2269, %v2270
          %v2272 = vlaneseq
          %v2273 = vshrl.u32 %v2272, 7
          %v2274 = vsub.s32 5, %v2273
          %v2275 = vrot.slane %v411, %v2274
          %v2276 = vlaneseq
          %v2277 = vshrl.u32 %v2276, 7
          %v2278 = vsub.s32 5, %v2277
          %v2279 = vrot.slane %v412, %v2278
          %v2280 = vlaneseq
          %v2281 = vshrl.u32 %v2280, 7
          %v2282 = vsub.s32 5, %v2281
          %v2283 = vrot.slane %v413, %v2282
          %v2284 = vlaneseq
          %v2285 = vshrl.u32 %v2284, 7
          %v2286 = vsub.s32 5, %v2285
          %v2287 = vrot.slane %v414, %v2286
          %v2288 = vlaneseq
          %v2289 = vshrl.u32 %v2288, 7
          %v2290 = vsub.s32 5, %v2289
          %v2291 = vrot.slane %v415, %v2290
          %v2292 = vlaneseq
          %v2293 = vshrl.u32 %v2292, 7
          %v2294 = vsub.s32 5, %v2293
          %v2295 = vrot.slane %v416, %v2294
          %v2296 = vlaneseq
          %v2297 = vshrl.u32 %v2296, 7
          %v2298 = vsub.s32 5, %v2297
          %v2299 = vrot.slane %v417, %v2298
          %v2300 = vlaneseq
          %v2301 = vshrl.u32 %v2300, 7
          %v2302 = vsub.s32 5, %v2301
          %v2303 = vrot.slane %v418, %v2302
          %v2304 = vlaneseq
          %v2305 = vshrl.u32 %v2304, 7
          %v2306 = vsub.s32 5, %v2305
          %v2307 = vrot.slane %v419, %v2306
          %v2308 = vlaneseq
          %v2309 = vshrl.u32 %v2308, 7
          %v2310 = vsub.s32 5, %v2309
          %v2311 = vrot.slane %v420, %v2310
          %v2312 = vlaneseq
          %v2313 = vshrl.u32 %v2312, 7
          %v2314 = vsub.s32 5, %v2313
          %v2315 = vrot.slane %v421, %v2314
          %v2316 = vlaneseq
          %v2317 = vshrl.u32 %v2316, 7
          %v2318 = vsub.s32 5, %v2317
          %v2319 = vrot.slane %v422, %v2318
          %v2320 = vlaneseq
          %v2321 = vshrl.u32 %v2320, 7
          %v2322 = vsub.s32 5, %v2321
          %v2323 = vrot.slane %v423, %v2322
          %v2324 = vlaneseq
          %v2325 = vshrl.u32 %v2324, 7
          %v2326 = vsub.s32 5, %v2325
          %v2327 = vrot.slane %v424, %v2326
          %v2328 = vlaneseq
          %v2329 = vshrl.u32 %v2328, 7
          %v2330 = vsub.s32 5, %v2329
          %v2331 = vrot.slane %v425, %v2330
          %v2332 = vlaneseq
          %v2333 = vshrl.u32 %v2332, 7
          %v2334 = vsub.s32 5, %v2333
          %v2335 = vrot.slane %v426, %v2334
          %v2336 = vmul.f32 %v411, %v2275
          %v2337 = vmul.f32 %v412, %v2279
          %v2338 = vmul.f32 %v413, %v2283
          %v2339 = vmul.f32 %v414, %v2287
          %v2340 = vmul.f32 %v415, %v2291
          %v2341 = vmul.f32 %v416, %v2295
          %v2342 = vmul.f32 %v417, %v2299
          %v2343 = vmul.f32 %v418, %v2303
          %v2344 = vmul.f32 %v419, %v2307
          %v2345 = vmul.f32 %v420, %v2311
          %v2346 = vmul.f32 %v421, %v2315
          %v2347 = vmul.f32 %v422, %v2319
          %v2348 = vmul.f32 %v423, %v2323
          %v2349 = vmul.f32 %v424, %v2327
          %v2350 = vmul.f32 %v425, %v2331
          %v2351 = vmul.f32 %v426, %v2335
          %v2352 = vmul.f32 %v1982, %v2275
          %v2353 = vmul.f32 %v1983, %v2279
          %v2354 = vmul.f32 %v1984, %v2283
          %v2355 = vmul.f32 %v1985, %v2287
          %v2356 = vmul.f32 %v1986, %v2291
          %v2357 = vmul.f32 %v1987, %v2295
          %v2358 = vmul.f32 %v1988, %v2299
          %v2359 = vmul.f32 %v1989, %v2303
          %v2360 = vmul.f32 %v1990, %v2307
          %v2361 = vmul.f32 %v1991, %v2311
          %v2362 = vmul.f32 %v1992, %v2315
          %v2363 = vmul.f32 %v1993, %v2319
          %v2364 = vmul.f32 %v1994, %v2323
          %v2365 = vmul.f32 %v1995, %v2327
          %v2366 = vmul.f32 %v1996, %v2331
          %v2367 = vmul.f32 %v1997, %v2335
          %v2368 = vmul.f32 %v2352, 0.57735026
          %v2369 = vmul.f32 %v2353, 0.57735026
          %v2370 = vmul.f32 %v2354, 0.57735026
          %v2371 = vmul.f32 %v2355, 0.57735026
          %v2372 = vmul.f32 %v2356, 0.57735026
          %v2373 = vmul.f32 %v2357, 0.57735026
          %v2374 = vmul.f32 %v2358, 0.57735026
          %v2375 = vmul.f32 %v2359, 0.57735026
          %v2376 = vmul.f32 %v2360, 0.57735026
          %v2377 = vmul.f32 %v2361, 0.57735026
          %v2378 = vmul.f32 %v2362, 0.57735026
          %v2379 = vmul.f32 %v2363, 0.57735026
          %v2380 = vmul.f32 %v2364, 0.57735026
          %v2381 = vmul.f32 %v2365, 0.57735026
          %v2382 = vmul.f32 %v2366, 0.57735026
          %v2383 = vmul.f32 %v2367, 0.57735026
          %v2384 = vmul.f32 %v1231, %v2166
          %v2385 = vmul.f32 %v1233, %v2173
          %v2386 = vmul.f32 %v1308, %v2180
          %v2387 = vmul.f32 %v1310, %v2187
          %v2388 = vmul.f32 %v1385, %v2194
          %v2389 = vmul.f32 %v1387, %v2201
          %v2390 = vmul.f32 %v1462, %v2208
          %v2391 = vmul.f32 %v1464, %v2215
          %v2392 = vmul.f32 %v1539, %v2222
          %v2393 = vmul.f32 %v1541, %v2229
          %v2394 = vmul.f32 %v1616, %v2236
          %v2395 = vmul.f32 %v1618, %v2243
          %v2396 = vmul.f32 %v1693, %v2250
          %v2397 = vmul.f32 %v1695, %v2257
          %v2398 = vmul.f32 %v1770, %v2264
          %v2399 = vmul.f32 %v1772, %v2271
          %v2400 = vmul.f32 %v2384, 0.33333334
          %v2401 = vmul.f32 %v2385, 0.33333334
          %v2402 = vmul.f32 %v2386, 0.33333334
          %v2403 = vmul.f32 %v2387, 0.33333334
          %v2404 = vmul.f32 %v2388, 0.33333334
          %v2405 = vmul.f32 %v2389, 0.33333334
          %v2406 = vmul.f32 %v2390, 0.33333334
          %v2407 = vmul.f32 %v2391, 0.33333334
          %v2408 = vmul.f32 %v2392, 0.33333334
          %v2409 = vmul.f32 %v2393, 0.33333334
          %v2410 = vmul.f32 %v2394, 0.33333334
          %v2411 = vmul.f32 %v2395, 0.33333334
          %v2412 = vmul.f32 %v2396, 0.33333334
          %v2413 = vmul.f32 %v2397, 0.33333334
          %v2414 = vmul.f32 %v2398, 0.33333334
          %v2415 = vmul.f32 %v2399, 0.33333334
          %v2432 = vrot.slane %v2400, 2
          %v2433 = vrot.slane %v2401, 2
          %v2434 = vrot.slane %v2402, 2
          %v2435 = vrot.slane %v2403, 2
          %v2436 = vrot.slane %v2404, 2
          %v2437 = vrot.slane %v2405, 2
          %v2438 = vrot.slane %v2406, 2
          %v2439 = vrot.slane %v2407, 2
          %v2440 = vrot.slane %v2408, 2
          %v2441 = vrot.slane %v2409, 2
          %v2442 = vrot.slane %v2410, 2
          %v2443 = vrot.slane %v2411, 2
          %v2444 = vrot.slane %v2412, 2
          %v2445 = vrot.slane %v2413, 2
          %v2446 = vrot.slane %v2414, 2
          %v2447 = vrot.slane %v2415, 2
          %v2464 = vadd.f32 %v2368, %v2432
          %v2465 = vadd.f32 %v2369, %v2433
          %v2466 = vadd.f32 %v2370, %v2434
          %v2467 = vadd.f32 %v2371, %v2435
          %v2468 = vadd.f32 %v2372, %v2436
          %v2469 = vadd.f32 %v2373, %v2437
          %v2470 = vadd.f32 %v2374, %v2438
          %v2471 = vadd.f32 %v2375, %v2439
          %v2472 = vadd.f32 %v2376, %v2440
          %v2473 = vadd.f32 %v2377, %v2441
          %v2474 = vadd.f32 %v2378, %v2442
          %v2475 = vadd.f32 %v2379, %v2443
          %v2476 = vadd.f32 %v2380, %v2444
          %v2477 = vadd.f32 %v2381, %v2445
          %v2478 = vadd.f32 %v2382, %v2446
          %v2479 = vadd.f32 %v2383, %v2447
          %v2480 = vlaneseq
          %v2481 = vshrl.u32 %v2480, 7
          %v2482 = vsub.s32 4, %v2481
          %v2483 = vrot.slane %v1982, %v2482
          %v2484 = vlaneseq
          %v2485 = vshrl.u32 %v2484, 7
          %v2486 = vsub.s32 4, %v2485
          %v2487 = vrot.slane %v1983, %v2486
          %v2488 = vlaneseq
          %v2489 = vshrl.u32 %v2488, 7
          %v2490 = vsub.s32 4, %v2489
          %v2491 = vrot.slane %v1984, %v2490
          %v2492 = vlaneseq
          %v2493 = vshrl.u32 %v2492, 7
          %v2494 = vsub.s32 4, %v2493
          %v2495 = vrot.slane %v1985, %v2494
          %v2496 = vlaneseq
          %v2497 = vshrl.u32 %v2496, 7
          %v2498 = vsub.s32 4, %v2497
          %v2499 = vrot.slane %v1986, %v2498
          %v2500 = vlaneseq
          %v2501 = vshrl.u32 %v2500, 7
          %v2502 = vsub.s32 4, %v2501
          %v2503 = vrot.slane %v1987, %v2502
          %v2504 = vlaneseq
          %v2505 = vshrl.u32 %v2504, 7
          %v2506 = vsub.s32 4, %v2505
          %v2507 = vrot.slane %v1988, %v2506
          %v2508 = vlaneseq
          %v2509 = vshrl.u32 %v2508, 7
          %v2510 = vsub.s32 4, %v2509
          %v2511 = vrot.slane %v1989, %v2510
          %v2512 = vlaneseq
          %v2513 = vshrl.u32 %v2512, 7
          %v2514 = vsub.s32 4, %v2513
          %v2515 = vrot.slane %v1990, %v2514
          %v2516 = vlaneseq
          %v2517 = vshrl.u32 %v2516, 7
          %v2518 = vsub.s32 4, %v2517
          %v2519 = vrot.slane %v1991, %v2518
          %v2520 = vlaneseq
          %v2521 = vshrl.u32 %v2520, 7
          %v2522 = vsub.s32 4, %v2521
          %v2523 = vrot.slane %v1992, %v2522
          %v2524 = vlaneseq
          %v2525 = vshrl.u32 %v2524, 7
          %v2526 = vsub.s32 4, %v2525
          %v2527 = vrot.slane %v1993, %v2526
          %v2528 = vlaneseq
          %v2529 = vshrl.u32 %v2528, 7
          %v2530 = vsub.s32 4, %v2529
          %v2531 = vrot.slane %v1994, %v2530
          %v2532 = vlaneseq
          %v2533 = vshrl.u32 %v2532, 7
          %v2534 = vsub.s32 4, %v2533
          %v2535 = vrot.slane %v1995, %v2534
          %v2536 = vlaneseq
          %v2537 = vshrl.u32 %v2536, 7
          %v2538 = vsub.s32 4, %v2537
          %v2539 = vrot.slane %v1996, %v2538
          %v2540 = vlaneseq
          %v2541 = vshrl.u32 %v2540, 7
          %v2542 = vsub.s32 4, %v2541
          %v2543 = vrot.slane %v1997, %v2542
          %v2544 = vmul.f32 %v2483, %v411
          %v2545 = vmul.f32 %v2487, %v412
          %v2546 = vmul.f32 %v2491, %v413
          %v2547 = vmul.f32 %v2495, %v414
          %v2548 = vmul.f32 %v2499, %v415
          %v2549 = vmul.f32 %v2503, %v416
          %v2550 = vmul.f32 %v2507, %v417
          %v2551 = vmul.f32 %v2511, %v418
          %v2552 = vmul.f32 %v2515, %v419
          %v2553 = vmul.f32 %v2519, %v420
          %v2554 = vmul.f32 %v2523, %v421
          %v2555 = vmul.f32 %v2527, %v422
          %v2556 = vmul.f32 %v2531, %v423
          %v2557 = vmul.f32 %v2535, %v424
          %v2558 = vmul.f32 %v2539, %v425
          %v2559 = vmul.f32 %v2543, %v426
          %v2560 = vmul.f32 %v2483, %v427
          %v2561 = vmul.f32 %v2487, %v428
          %v2562 = vmul.f32 %v2491, %v429
          %v2563 = vmul.f32 %v2495, %v430
          %v2564 = vmul.f32 %v2499, %v431
          %v2565 = vmul.f32 %v2503, %v432
          %v2566 = vmul.f32 %v2507, %v433
          %v2567 = vmul.f32 %v2511, %v434
          %v2568 = vmul.f32 %v2515, %v435
          %v2569 = vmul.f32 %v2519, %v436
          %v2570 = vmul.f32 %v2523, %v437
          %v2571 = vmul.f32 %v2527, %v438
          %v2572 = vmul.f32 %v2531, %v439
          %v2573 = vmul.f32 %v2535, %v440
          %v2574 = vmul.f32 %v2539, %v441
          %v2575 = vmul.f32 %v2543, %v442
          %v2576 = vlaneseq
          %v2577 = vshrl.u32 %v2576, 7
          %v2578 = vsub.s32 0, %v2577
          %v2579 = vrot.slane %v1231, %v2578
          %v2580 = vlaneseq
          %v2581 = vshrl.u32 %v2580, 7
          %v2582 = vsub.s32 0, %v2581
          %v2583 = vrot.slane %v1233, %v2582
          %v2584 = vlaneseq
          %v2585 = vshrl.u32 %v2584, 7
          %v2586 = vsub.s32 0, %v2585
          %v2587 = vrot.slane %v1308, %v2586
          %v2588 = vlaneseq
          %v2589 = vshrl.u32 %v2588, 7
          %v2590 = vsub.s32 0, %v2589
          %v2591 = vrot.slane %v1310, %v2590
          %v2592 = vlaneseq
          %v2593 = vshrl.u32 %v2592, 7
          %v2594 = vsub.s32 0, %v2593
          %v2595 = vrot.slane %v1385, %v2594
          %v2596 = vlaneseq
          %v2597 = vshrl.u32 %v2596, 7
          %v2598 = vsub.s32 0, %v2597
          %v2599 = vrot.slane %v1387, %v2598
          %v2600 = vlaneseq
          %v2601 = vshrl.u32 %v2600, 7
          %v2602 = vsub.s32 0, %v2601
          %v2603 = vrot.slane %v1462, %v2602
          %v2604 = vlaneseq
          %v2605 = vshrl.u32 %v2604, 7
          %v2606 = vsub.s32 0, %v2605
          %v2607 = vrot.slane %v1464, %v2606
          %v2608 = vlaneseq
          %v2609 = vshrl.u32 %v2608, 7
          %v2610 = vsub.s32 0, %v2609
          %v2611 = vrot.slane %v1539, %v2610
          %v2612 = vlaneseq
          %v2613 = vshrl.u32 %v2612, 7
          %v2614 = vsub.s32 0, %v2613
          %v2615 = vrot.slane %v1541, %v2614
          %v2616 = vlaneseq
          %v2617 = vshrl.u32 %v2616, 7
          %v2618 = vsub.s32 0, %v2617
          %v2619 = vrot.slane %v1616, %v2618
          %v2620 = vlaneseq
          %v2621 = vshrl.u32 %v2620, 7
          %v2622 = vsub.s32 0, %v2621
          %v2623 = vrot.slane %v1618, %v2622
          %v2624 = vlaneseq
          %v2625 = vshrl.u32 %v2624, 7
          %v2626 = vsub.s32 0, %v2625
          %v2627 = vrot.slane %v1693, %v2626
          %v2628 = vlaneseq
          %v2629 = vshrl.u32 %v2628, 7
          %v2630 = vsub.s32 0, %v2629
          %v2631 = vrot.slane %v1695, %v2630
          %v2632 = vlaneseq
          %v2633 = vshrl.u32 %v2632, 7
          %v2634 = vsub.s32 0, %v2633
          %v2635 = vrot.slane %v1770, %v2634
          %v2636 = vlaneseq
          %v2637 = vshrl.u32 %v2636, 7
          %v2638 = vsub.s32 0, %v2637
          %v2639 = vrot.slane %v1772, %v2638
          %v2640 = vmul.f32 %v2579, %v2336
          %v2641 = vmul.f32 %v2583, %v2337
          %v2642 = vmul.f32 %v2587, %v2338
          %v2643 = vmul.f32 %v2591, %v2339
          %v2644 = vmul.f32 %v2595, %v2340
          %v2645 = vmul.f32 %v2599, %v2341
          %v2646 = vmul.f32 %v2603, %v2342
          %v2647 = vmul.f32 %v2607, %v2343
          %v2648 = vmul.f32 %v2611, %v2344
          %v2649 = vmul.f32 %v2615, %v2345
          %v2650 = vmul.f32 %v2619, %v2346
          %v2651 = vmul.f32 %v2623, %v2347
          %v2652 = vmul.f32 %v2627, %v2348
          %v2653 = vmul.f32 %v2631, %v2349
          %v2654 = vmul.f32 %v2635, %v2350
          %v2655 = vmul.f32 %v2639, %v2351
          %v2672 = vrot.slane %v2640, 4
          %v2673 = vrot.slane %v2641, 4
          %v2674 = vrot.slane %v2642, 4
          %v2675 = vrot.slane %v2643, 4
          %v2676 = vrot.slane %v2644, 4
          %v2677 = vrot.slane %v2645, 4
          %v2678 = vrot.slane %v2646, 4
          %v2679 = vrot.slane %v2647, 4
          %v2680 = vrot.slane %v2648, 4
          %v2681 = vrot.slane %v2649, 4
          %v2682 = vrot.slane %v2650, 4
          %v2683 = vrot.slane %v2651, 4
          %v2684 = vrot.slane %v2652, 4
          %v2685 = vrot.slane %v2653, 4
          %v2686 = vrot.slane %v2654, 4
          %v2687 = vrot.slane %v2655, 4
          %v2704 = vadd.f32 %v2544, %v2672
          %v2705 = vadd.f32 %v2545, %v2673
          %v2706 = vadd.f32 %v2546, %v2674
          %v2707 = vadd.f32 %v2547, %v2675
          %v2708 = vadd.f32 %v2548, %v2676
          %v2709 = vadd.f32 %v2549, %v2677
          %v2710 = vadd.f32 %v2550, %v2678
          %v2711 = vadd.f32 %v2551, %v2679
          %v2712 = vadd.f32 %v2552, %v2680
          %v2713 = vadd.f32 %v2553, %v2681
          %v2714 = vadd.f32 %v2554, %v2682
          %v2715 = vadd.f32 %v2555, %v2683
          %v2716 = vadd.f32 %v2556, %v2684
          %v2717 = vadd.f32 %v2557, %v2685
          %v2718 = vadd.f32 %v2558, %v2686
          %v2719 = vadd.f32 %v2559, %v2687
          %v2720 = vadd.f32 %v2560, %v2672
          %v2721 = vadd.f32 %v2561, %v2673
          %v2722 = vadd.f32 %v2562, %v2674
          %v2723 = vadd.f32 %v2563, %v2675
          %v2724 = vadd.f32 %v2564, %v2676
          %v2725 = vadd.f32 %v2565, %v2677
          %v2726 = vadd.f32 %v2566, %v2678
          %v2727 = vadd.f32 %v2567, %v2679
          %v2728 = vadd.f32 %v2568, %v2680
          %v2729 = vadd.f32 %v2569, %v2681
          %v2730 = vadd.f32 %v2570, %v2682
          %v2731 = vadd.f32 %v2571, %v2683
          %v2732 = vadd.f32 %v2572, %v2684
          %v2733 = vadd.f32 %v2573, %v2685
          %v2734 = vadd.f32 %v2574, %v2686
          %v2735 = vadd.f32 %v2575, %v2687
          %v2736 = vmul.f32 %v2704, 0.57735026
          %v2737 = vmul.f32 %v2705, 0.57735026
          %v2738 = vmul.f32 %v2706, 0.57735026
          %v2739 = vmul.f32 %v2707, 0.57735026
          %v2740 = vmul.f32 %v2708, 0.57735026
          %v2741 = vmul.f32 %v2709, 0.57735026
          %v2742 = vmul.f32 %v2710, 0.57735026
          %v2743 = vmul.f32 %v2711, 0.57735026
          %v2744 = vmul.f32 %v2712, 0.57735026
          %v2745 = vmul.f32 %v2713, 0.57735026
          %v2746 = vmul.f32 %v2714, 0.57735026
          %v2747 = vmul.f32 %v2715, 0.57735026
          %v2748 = vmul.f32 %v2716, 0.57735026
          %v2749 = vmul.f32 %v2717, 0.57735026
          %v2750 = vmul.f32 %v2718, 0.57735026
          %v2751 = vmul.f32 %v2719, 0.57735026
          %v2752 = vmul.f32 %v2720, 0.57735026
          %v2753 = vmul.f32 %v2721, 0.57735026
          %v2754 = vmul.f32 %v2722, 0.57735026
          %v2755 = vmul.f32 %v2723, 0.57735026
          %v2756 = vmul.f32 %v2724, 0.57735026
          %v2757 = vmul.f32 %v2725, 0.57735026
          %v2758 = vmul.f32 %v2726, 0.57735026
          %v2759 = vmul.f32 %v2727, 0.57735026
          %v2760 = vmul.f32 %v2728, 0.57735026
          %v2761 = vmul.f32 %v2729, 0.57735026
          %v2762 = vmul.f32 %v2730, 0.57735026
          %v2763 = vmul.f32 %v2731, 0.57735026
          %v2764 = vmul.f32 %v2732, 0.57735026
          %v2765 = vmul.f32 %v2733, 0.57735026
          %v2766 = vmul.f32 %v2734, 0.57735026
          %v2767 = vmul.f32 %v2735, 0.57735026
          %v2768 = vlaneseq
          %v2769 = vshrl.u32 %v2768, 7
          %v2770 = vsub.s32 5, %v2769
          %v2771 = vrot.slane %v1982, %v2770
          %v2772 = vlaneseq
          %v2773 = vshrl.u32 %v2772, 7
          %v2774 = vsub.s32 5, %v2773
          %v2775 = vrot.slane %v1983, %v2774
          %v2776 = vlaneseq
          %v2777 = vshrl.u32 %v2776, 7
          %v2778 = vsub.s32 5, %v2777
          %v2779 = vrot.slane %v1984, %v2778
          %v2780 = vlaneseq
          %v2781 = vshrl.u32 %v2780, 7
          %v2782 = vsub.s32 5, %v2781
          %v2783 = vrot.slane %v1985, %v2782
          %v2784 = vlaneseq
          %v2785 = vshrl.u32 %v2784, 7
          %v2786 = vsub.s32 5, %v2785
          %v2787 = vrot.slane %v1986, %v2786
          %v2788 = vlaneseq
          %v2789 = vshrl.u32 %v2788, 7
          %v2790 = vsub.s32 5, %v2789
          %v2791 = vrot.slane %v1987, %v2790
          %v2792 = vlaneseq
          %v2793 = vshrl.u32 %v2792, 7
          %v2794 = vsub.s32 5, %v2793
          %v2795 = vrot.slane %v1988, %v2794
          %v2796 = vlaneseq
          %v2797 = vshrl.u32 %v2796, 7
          %v2798 = vsub.s32 5, %v2797
          %v2799 = vrot.slane %v1989, %v2798
          %v2800 = vlaneseq
          %v2801 = vshrl.u32 %v2800, 7
          %v2802 = vsub.s32 5, %v2801
          %v2803 = vrot.slane %v1990, %v2802
          %v2804 = vlaneseq
          %v2805 = vshrl.u32 %v2804, 7
          %v2806 = vsub.s32 5, %v2805
          %v2807 = vrot.slane %v1991, %v2806
          %v2808 = vlaneseq
          %v2809 = vshrl.u32 %v2808, 7
          %v2810 = vsub.s32 5, %v2809
          %v2811 = vrot.slane %v1992, %v2810
          %v2812 = vlaneseq
          %v2813 = vshrl.u32 %v2812, 7
          %v2814 = vsub.s32 5, %v2813
          %v2815 = vrot.slane %v1993, %v2814
          %v2816 = vlaneseq
          %v2817 = vshrl.u32 %v2816, 7
          %v2818 = vsub.s32 5, %v2817
          %v2819 = vrot.slane %v1994, %v2818
          %v2820 = vlaneseq
          %v2821 = vshrl.u32 %v2820, 7
          %v2822 = vsub.s32 5, %v2821
          %v2823 = vrot.slane %v1995, %v2822
          %v2824 = vlaneseq
          %v2825 = vshrl.u32 %v2824, 7
          %v2826 = vsub.s32 5, %v2825
          %v2827 = vrot.slane %v1996, %v2826
          %v2828 = vlaneseq
          %v2829 = vshrl.u32 %v2828, 7
          %v2830 = vsub.s32 5, %v2829
          %v2831 = vrot.slane %v1997, %v2830
          %v2832 = vmul.f32 %v2771, %v411
          %v2833 = vmul.f32 %v2775, %v412
          %v2834 = vmul.f32 %v2779, %v413
          %v2835 = vmul.f32 %v2783, %v414
          %v2836 = vmul.f32 %v2787, %v415
          %v2837 = vmul.f32 %v2791, %v416
          %v2838 = vmul.f32 %v2795, %v417
          %v2839 = vmul.f32 %v2799, %v418
          %v2840 = vmul.f32 %v2803, %v419
          %v2841 = vmul.f32 %v2807, %v420
          %v2842 = vmul.f32 %v2811, %v421
          %v2843 = vmul.f32 %v2815, %v422
          %v2844 = vmul.f32 %v2819, %v423
          %v2845 = vmul.f32 %v2823, %v424
          %v2846 = vmul.f32 %v2827, %v425
          %v2847 = vmul.f32 %v2831, %v426
          %v2848 = vmul.f32 %v2771, %v427
          %v2849 = vmul.f32 %v2775, %v428
          %v2850 = vmul.f32 %v2779, %v429
          %v2851 = vmul.f32 %v2783, %v430
          %v2852 = vmul.f32 %v2787, %v431
          %v2853 = vmul.f32 %v2791, %v432
          %v2854 = vmul.f32 %v2795, %v433
          %v2855 = vmul.f32 %v2799, %v434
          %v2856 = vmul.f32 %v2803, %v435
          %v2857 = vmul.f32 %v2807, %v436
          %v2858 = vmul.f32 %v2811, %v437
          %v2859 = vmul.f32 %v2815, %v438
          %v2860 = vmul.f32 %v2819, %v439
          %v2861 = vmul.f32 %v2823, %v440
          %v2862 = vmul.f32 %v2827, %v441
          %v2863 = vmul.f32 %v2831, %v442
          %v2864 = vlaneseq
          %v2865 = vshrl.u32 %v2864, 7
          %v2866 = vsub.s32 1, %v2865
          %v2867 = vrot.slane %v1231, %v2866
          %v2868 = vlaneseq
          %v2869 = vshrl.u32 %v2868, 7
          %v2870 = vsub.s32 1, %v2869
          %v2871 = vrot.slane %v1233, %v2870
          %v2872 = vlaneseq
          %v2873 = vshrl.u32 %v2872, 7
          %v2874 = vsub.s32 1, %v2873
          %v2875 = vrot.slane %v1308, %v2874
          %v2876 = vlaneseq
          %v2877 = vshrl.u32 %v2876, 7
          %v2878 = vsub.s32 1, %v2877
          %v2879 = vrot.slane %v1310, %v2878
          %v2880 = vlaneseq
          %v2881 = vshrl.u32 %v2880, 7
          %v2882 = vsub.s32 1, %v2881
          %v2883 = vrot.slane %v1385, %v2882
          %v2884 = vlaneseq
          %v2885 = vshrl.u32 %v2884, 7
          %v2886 = vsub.s32 1, %v2885
          %v2887 = vrot.slane %v1387, %v2886
          %v2888 = vlaneseq
          %v2889 = vshrl.u32 %v2888, 7
          %v2890 = vsub.s32 1, %v2889
          %v2891 = vrot.slane %v1462, %v2890
          %v2892 = vlaneseq
          %v2893 = vshrl.u32 %v2892, 7
          %v2894 = vsub.s32 1, %v2893
          %v2895 = vrot.slane %v1464, %v2894
          %v2896 = vlaneseq
          %v2897 = vshrl.u32 %v2896, 7
          %v2898 = vsub.s32 1, %v2897
          %v2899 = vrot.slane %v1539, %v2898
          %v2900 = vlaneseq
          %v2901 = vshrl.u32 %v2900, 7
          %v2902 = vsub.s32 1, %v2901
          %v2903 = vrot.slane %v1541, %v2902
          %v2904 = vlaneseq
          %v2905 = vshrl.u32 %v2904, 7
          %v2906 = vsub.s32 1, %v2905
          %v2907 = vrot.slane %v1616, %v2906
          %v2908 = vlaneseq
          %v2909 = vshrl.u32 %v2908, 7
          %v2910 = vsub.s32 1, %v2909
          %v2911 = vrot.slane %v1618, %v2910
          %v2912 = vlaneseq
          %v2913 = vshrl.u32 %v2912, 7
          %v2914 = vsub.s32 1, %v2913
          %v2915 = vrot.slane %v1693, %v2914
          %v2916 = vlaneseq
          %v2917 = vshrl.u32 %v2916, 7
          %v2918 = vsub.s32 1, %v2917
          %v2919 = vrot.slane %v1695, %v2918
          %v2920 = vlaneseq
          %v2921 = vshrl.u32 %v2920, 7
          %v2922 = vsub.s32 1, %v2921
          %v2923 = vrot.slane %v1770, %v2922
          %v2924 = vlaneseq
          %v2925 = vshrl.u32 %v2924, 7
          %v2926 = vsub.s32 1, %v2925
          %v2927 = vrot.slane %v1772, %v2926
          %v2928 = vmul.f32 %v2867, %v2336
          %v2929 = vmul.f32 %v2871, %v2337
          %v2930 = vmul.f32 %v2875, %v2338
          %v2931 = vmul.f32 %v2879, %v2339
          %v2932 = vmul.f32 %v2883, %v2340
          %v2933 = vmul.f32 %v2887, %v2341
          %v2934 = vmul.f32 %v2891, %v2342
          %v2935 = vmul.f32 %v2895, %v2343
          %v2936 = vmul.f32 %v2899, %v2344
          %v2937 = vmul.f32 %v2903, %v2345
          %v2938 = vmul.f32 %v2907, %v2346
          %v2939 = vmul.f32 %v2911, %v2347
          %v2940 = vmul.f32 %v2915, %v2348
          %v2941 = vmul.f32 %v2919, %v2349
          %v2942 = vmul.f32 %v2923, %v2350
          %v2943 = vmul.f32 %v2927, %v2351
          %v2960 = vrot.slane %v2928, 4
          %v2961 = vrot.slane %v2929, 4
          %v2962 = vrot.slane %v2930, 4
          %v2963 = vrot.slane %v2931, 4
          %v2964 = vrot.slane %v2932, 4
          %v2965 = vrot.slane %v2933, 4
          %v2966 = vrot.slane %v2934, 4
          %v2967 = vrot.slane %v2935, 4
          %v2968 = vrot.slane %v2936, 4
          %v2969 = vrot.slane %v2937, 4
          %v2970 = vrot.slane %v2938, 4
          %v2971 = vrot.slane %v2939, 4
          %v2972 = vrot.slane %v2940, 4
          %v2973 = vrot.slane %v2941, 4
          %v2974 = vrot.slane %v2942, 4
          %v2975 = vrot.slane %v2943, 4
          %v2992 = vadd.f32 %v2832, %v2960
          %v2993 = vadd.f32 %v2833, %v2961
          %v2994 = vadd.f32 %v2834, %v2962
          %v2995 = vadd.f32 %v2835, %v2963
          %v2996 = vadd.f32 %v2836, %v2964
          %v2997 = vadd.f32 %v2837, %v2965
          %v2998 = vadd.f32 %v2838, %v2966
          %v2999 = vadd.f32 %v2839, %v2967
          %v3000 = vadd.f32 %v2840, %v2968
          %v3001 = vadd.f32 %v2841, %v2969
          %v3002 = vadd.f32 %v2842, %v2970
          %v3003 = vadd.f32 %v2843, %v2971
          %v3004 = vadd.f32 %v2844, %v2972
          %v3005 = vadd.f32 %v2845, %v2973
          %v3006 = vadd.f32 %v2846, %v2974
          %v3007 = vadd.f32 %v2847, %v2975
          %v3008 = vadd.f32 %v2848, %v2960
          %v3009 = vadd.f32 %v2849, %v2961
          %v3010 = vadd.f32 %v2850, %v2962
          %v3011 = vadd.f32 %v2851, %v2963
          %v3012 = vadd.f32 %v2852, %v2964
          %v3013 = vadd.f32 %v2853, %v2965
          %v3014 = vadd.f32 %v2854, %v2966
          %v3015 = vadd.f32 %v2855, %v2967
          %v3016 = vadd.f32 %v2856, %v2968
          %v3017 = vadd.f32 %v2857, %v2969
          %v3018 = vadd.f32 %v2858, %v2970
          %v3019 = vadd.f32 %v2859, %v2971
          %v3020 = vadd.f32 %v2860, %v2972
          %v3021 = vadd.f32 %v2861, %v2973
          %v3022 = vadd.f32 %v2862, %v2974
          %v3023 = vadd.f32 %v2863, %v2975
          %v3024 = vmul.f32 %v2992, 0.57735026
          %v3025 = vmul.f32 %v2993, 0.57735026
          %v3026 = vmul.f32 %v2994, 0.57735026
          %v3027 = vmul.f32 %v2995, 0.57735026
          %v3028 = vmul.f32 %v2996, 0.57735026
          %v3029 = vmul.f32 %v2997, 0.57735026
          %v3030 = vmul.f32 %v2998, 0.57735026
          %v3031 = vmul.f32 %v2999, 0.57735026
          %v3032 = vmul.f32 %v3000, 0.57735026
          %v3033 = vmul.f32 %v3001, 0.57735026
          %v3034 = vmul.f32 %v3002, 0.57735026
          %v3035 = vmul.f32 %v3003, 0.57735026
          %v3036 = vmul.f32 %v3004, 0.57735026
          %v3037 = vmul.f32 %v3005, 0.57735026
          %v3038 = vmul.f32 %v3006, 0.57735026
          %v3039 = vmul.f32 %v3007, 0.57735026
          %v3040 = vmul.f32 %v3008, 0.57735026
          %v3041 = vmul.f32 %v3009, 0.57735026
          %v3042 = vmul.f32 %v3010, 0.57735026
          %v3043 = vmul.f32 %v3011, 0.57735026
          %v3044 = vmul.f32 %v3012, 0.57735026
          %v3045 = vmul.f32 %v3013, 0.57735026
          %v3046 = vmul.f32 %v3014, 0.57735026
          %v3047 = vmul.f32 %v3015, 0.57735026
          %v3048 = vmul.f32 %v3016, 0.57735026
          %v3049 = vmul.f32 %v3017, 0.57735026
          %v3050 = vmul.f32 %v3018, 0.57735026
          %v3051 = vmul.f32 %v3019, 0.57735026
          %v3052 = vmul.f32 %v3020, 0.57735026
          %v3053 = vmul.f32 %v3021, 0.57735026
          %v3054 = vmul.f32 %v3022, 0.57735026
          %v3055 = vmul.f32 %v3023, 0.57735026
          %v3088 = vrot.slane %v2736, 4
          %v3089 = vrot.slane %v2752, 4
          %v3090 = vsel %vm2030, %v3088, %v3089
          %v3091 = vrot.slane %v2737, 4
          %v3092 = vrot.slane %v2753, 4
          %v3093 = vsel %vm2030, %v3091, %v3092
          %v3094 = vrot.slane %v2738, 4
          %v3095 = vrot.slane %v2754, 4
          %v3096 = vsel %vm2030, %v3094, %v3095
          %v3097 = vrot.slane %v2739, 4
          %v3098 = vrot.slane %v2755, 4
          %v3099 = vsel %vm2030, %v3097, %v3098
          %v3100 = vrot.slane %v2740, 4
          %v3101 = vrot.slane %v2756, 4
          %v3102 = vsel %vm2030, %v3100, %v3101
          %v3103 = vrot.slane %v2741, 4
          %v3104 = vrot.slane %v2757, 4
          %v3105 = vsel %vm2030, %v3103, %v3104
          %v3106 = vrot.slane %v2742, 4
          %v3107 = vrot.slane %v2758, 4
          %v3108 = vsel %vm2030, %v3106, %v3107
          %v3109 = vrot.slane %v2743, 4
          %v3110 = vrot.slane %v2759, 4
          %v3111 = vsel %vm2030, %v3109, %v3110
          %v3112 = vrot.slane %v2744, 4
          %v3113 = vrot.slane %v2760, 4
          %v3114 = vsel %vm2030, %v3112, %v3113
          %v3115 = vrot.slane %v2745, 4
          %v3116 = vrot.slane %v2761, 4
          %v3117 = vsel %vm2030, %v3115, %v3116
          %v3118 = vrot.slane %v2746, 4
          %v3119 = vrot.slane %v2762, 4
          %v3120 = vsel %vm2030, %v3118, %v3119
          %v3121 = vrot.slane %v2747, 4
          %v3122 = vrot.slane %v2763, 4
          %v3123 = vsel %vm2030, %v3121, %v3122
          %v3124 = vrot.slane %v2748, 4
          %v3125 = vrot.slane %v2764, 4
          %v3126 = vsel %vm2030, %v3124, %v3125
          %v3127 = vrot.slane %v2749, 4
          %v3128 = vrot.slane %v2765, 4
          %v3129 = vsel %vm2030, %v3127, %v3128
          %v3130 = vrot.slane %v2750, 4
          %v3131 = vrot.slane %v2766, 4
          %v3132 = vsel %vm2030, %v3130, %v3131
          %v3133 = vrot.slane %v2751, 4
          %v3134 = vrot.slane %v2767, 4
          %v3135 = vsel %vm2030, %v3133, %v3134
          %vm3184 = vcmask 1046528
          %v3185 = vrot.slane %v3024, 1
          %v3186 = vrot.slane %v3040, 1
          %v3187 = vsel %vm3184, %v3185, %v3186
          %v3188 = vrot.slane %v3025, 1
          %v3189 = vrot.slane %v3041, 1
          %v3190 = vsel %vm3184, %v3188, %v3189
          %v3191 = vrot.slane %v3026, 1
          %v3192 = vrot.slane %v3042, 1
          %v3193 = vsel %vm3184, %v3191, %v3192
          %v3194 = vrot.slane %v3027, 1
          %v3195 = vrot.slane %v3043, 1
          %v3196 = vsel %vm3184, %v3194, %v3195
          %v3197 = vrot.slane %v3028, 1
          %v3198 = vrot.slane %v3044, 1
          %v3199 = vsel %vm3184, %v3197, %v3198
          %v3200 = vrot.slane %v3029, 1
          %v3201 = vrot.slane %v3045, 1
          %v3202 = vsel %vm3184, %v3200, %v3201
          %v3203 = vrot.slane %v3030, 1
          %v3204 = vrot.slane %v3046, 1
          %v3205 = vsel %vm3184, %v3203, %v3204
          %v3206 = vrot.slane %v3031, 1
          %v3207 = vrot.slane %v3047, 1
          %v3208 = vsel %vm3184, %v3206, %v3207
          %v3209 = vrot.slane %v3032, 1
          %v3210 = vrot.slane %v3048, 1
          %v3211 = vsel %vm3184, %v3209, %v3210
          %v3212 = vrot.slane %v3033, 1
          %v3213 = vrot.slane %v3049, 1
          %v3214 = vsel %vm3184, %v3212, %v3213
          %v3215 = vrot.slane %v3034, 1
          %v3216 = vrot.slane %v3050, 1
          %v3217 = vsel %vm3184, %v3215, %v3216
          %v3218 = vrot.slane %v3035, 1
          %v3219 = vrot.slane %v3051, 1
          %v3220 = vsel %vm3184, %v3218, %v3219
          %v3221 = vrot.slane %v3036, 1
          %v3222 = vrot.slane %v3052, 1
          %v3223 = vsel %vm3184, %v3221, %v3222
          %v3224 = vrot.slane %v3037, 1
          %v3225 = vrot.slane %v3053, 1
          %v3226 = vsel %vm3184, %v3224, %v3225
          %v3227 = vrot.slane %v3038, 1
          %v3228 = vrot.slane %v3054, 1
          %v3229 = vsel %vm3184, %v3227, %v3228
          %v3230 = vrot.slane %v3039, 1
          %v3231 = vrot.slane %v3055, 1
          %v3232 = vsel %vm3184, %v3230, %v3231
          %vm3249 = vcmask 1041408
          %v3250 = vsel %vm3249, %v2464, %v3090
          %v3251 = vsel %vm3249, %v2465, %v3093
          %v3252 = vsel %vm3249, %v2466, %v3096
          %v3253 = vsel %vm3249, %v2467, %v3099
          %v3254 = vsel %vm3249, %v2468, %v3102
          %v3255 = vsel %vm3249, %v2469, %v3105
          %v3256 = vsel %vm3249, %v2470, %v3108
          %v3257 = vsel %vm3249, %v2471, %v3111
          %v3258 = vsel %vm3249, %v2472, %v3114
          %v3259 = vsel %vm3249, %v2473, %v3117
          %v3260 = vsel %vm3249, %v2474, %v3120
          %v3261 = vsel %vm3249, %v2475, %v3123
          %v3262 = vsel %vm3249, %v2476, %v3126
          %v3263 = vsel %vm3249, %v2477, %v3129
          %v3264 = vsel %vm3249, %v2478, %v3132
          %v3265 = vsel %vm3249, %v2479, %v3135
          %vm3266 = vcmask 1044480
          %v3267 = vsel %vm3266, %v3250, %v3187
          %v3268 = vsel %vm3266, %v3251, %v3190
          %v3269 = vsel %vm3266, %v3252, %v3193
          %v3270 = vsel %vm3266, %v3253, %v3196
          %v3271 = vsel %vm3266, %v3254, %v3199
          %v3272 = vsel %vm3266, %v3255, %v3202
          %v3273 = vsel %vm3266, %v3256, %v3205
          %v3274 = vsel %vm3266, %v3257, %v3208
          %v3275 = vsel %vm3266, %v3258, %v3211
          %v3276 = vsel %vm3266, %v3259, %v3214
          %v3277 = vsel %vm3266, %v3260, %v3217
          %v3278 = vsel %vm3266, %v3261, %v3220
          %v3279 = vsel %vm3266, %v3262, %v3223
          %v3280 = vsel %vm3266, %v3263, %v3226
          %v3281 = vsel %vm3266, %v3264, %v3229
          %v3282 = vsel %vm3266, %v3265, %v3232
          %v3287 = vlaneseq
          %v3288 = vshrl.u32 %v3287, 7
          %v3289 = vsub.s32 1, %v3288
          %v3290 = vrot.slane %v443, %v3289
          %v3291 = vlaneseq
          %v3292 = vshrl.u32 %v3291, 7
          %v3293 = vsub.s32 3, %v3292
          %v3294 = vrot.slane %v443, %v3293
          %v3295 = vlaneseq
          %v3296 = vshrl.u32 %v3295, 7
          %v3297 = vsub.s32 5, %v3296
          %v3298 = vrot.slane %v443, %v3297
          %v3299 = vlaneseq
          %v3300 = vshrl.u32 %v3299, 7
          %v3301 = vsub.s32 7, %v3300
          %v3302 = vrot.slane %v443, %v3301
          %v3303 = vlaneseq
          %v3304 = vshrl.u32 %v3303, 7
          %v3305 = vsub.s32 1, %v3304
          %v3306 = vrot.slane %v444, %v3305
          %v3307 = vlaneseq
          %v3308 = vshrl.u32 %v3307, 7
          %v3309 = vsub.s32 3, %v3308
          %v3310 = vrot.slane %v444, %v3309
          %v3311 = vlaneseq
          %v3312 = vshrl.u32 %v3311, 7
          %v3313 = vsub.s32 5, %v3312
          %v3314 = vrot.slane %v444, %v3313
          %v3315 = vlaneseq
          %v3316 = vshrl.u32 %v3315, 7
          %v3317 = vsub.s32 7, %v3316
          %v3318 = vrot.slane %v444, %v3317
          %v3319 = vlaneseq
          %v3320 = vshrl.u32 %v3319, 7
          %v3321 = vsub.s32 1, %v3320
          %v3322 = vrot.slane %v445, %v3321
          %v3323 = vlaneseq
          %v3324 = vshrl.u32 %v3323, 7
          %v3325 = vsub.s32 3, %v3324
          %v3326 = vrot.slane %v445, %v3325
          %v3327 = vlaneseq
          %v3328 = vshrl.u32 %v3327, 7
          %v3329 = vsub.s32 5, %v3328
          %v3330 = vrot.slane %v445, %v3329
          %v3331 = vlaneseq
          %v3332 = vshrl.u32 %v3331, 7
          %v3333 = vsub.s32 7, %v3332
          %v3334 = vrot.slane %v445, %v3333
          %v3335 = vlaneseq
          %v3336 = vshrl.u32 %v3335, 7
          %v3337 = vsub.s32 1, %v3336
          %v3338 = vrot.slane %v446, %v3337
          %v3339 = vlaneseq
          %v3340 = vshrl.u32 %v3339, 7
          %v3341 = vsub.s32 3, %v3340
          %v3342 = vrot.slane %v446, %v3341
          %v3343 = vlaneseq
          %v3344 = vshrl.u32 %v3343, 7
          %v3345 = vsub.s32 5, %v3344
          %v3346 = vrot.slane %v446, %v3345
          %v3347 = vlaneseq
          %v3348 = vshrl.u32 %v3347, 7
          %v3349 = vsub.s32 7, %v3348
          %v3350 = vrot.slane %v446, %v3349
          %v3367 = vlaneseq
          %v3368 = vshrl.u32 %v3367, 7
          %v3369 = vsub.s32 1, %v3368
          %v3370 = vrot.slane %v3290, %v3369
          %v3371 = vlaneseq
          %v3372 = vshrl.u32 %v3371, 7
          %v3373 = vsub.s32 1, %v3372
          %v3374 = vrot.slane %v3294, %v3373
          %v3375 = vlaneseq
          %v3376 = vshrl.u32 %v3375, 7
          %v3377 = vsub.s32 1, %v3376
          %v3378 = vrot.slane %v3298, %v3377
          %v3379 = vlaneseq
          %v3380 = vshrl.u32 %v3379, 7
          %v3381 = vsub.s32 1, %v3380
          %v3382 = vrot.slane %v3302, %v3381
          %v3383 = vlaneseq
          %v3384 = vshrl.u32 %v3383, 7
          %v3385 = vsub.s32 1, %v3384
          %v3386 = vrot.slane %v3306, %v3385
          %v3387 = vlaneseq
          %v3388 = vshrl.u32 %v3387, 7
          %v3389 = vsub.s32 1, %v3388
          %v3390 = vrot.slane %v3310, %v3389
          %v3391 = vlaneseq
          %v3392 = vshrl.u32 %v3391, 7
          %v3393 = vsub.s32 1, %v3392
          %v3394 = vrot.slane %v3314, %v3393
          %v3395 = vlaneseq
          %v3396 = vshrl.u32 %v3395, 7
          %v3397 = vsub.s32 1, %v3396
          %v3398 = vrot.slane %v3318, %v3397
          %v3399 = vlaneseq
          %v3400 = vshrl.u32 %v3399, 7
          %v3401 = vsub.s32 1, %v3400
          %v3402 = vrot.slane %v3322, %v3401
          %v3403 = vlaneseq
          %v3404 = vshrl.u32 %v3403, 7
          %v3405 = vsub.s32 1, %v3404
          %v3406 = vrot.slane %v3326, %v3405
          %v3407 = vlaneseq
          %v3408 = vshrl.u32 %v3407, 7
          %v3409 = vsub.s32 1, %v3408
          %v3410 = vrot.slane %v3330, %v3409
          %v3411 = vlaneseq
          %v3412 = vshrl.u32 %v3411, 7
          %v3413 = vsub.s32 1, %v3412
          %v3414 = vrot.slane %v3334, %v3413
          %v3415 = vlaneseq
          %v3416 = vshrl.u32 %v3415, 7
          %v3417 = vsub.s32 1, %v3416
          %v3418 = vrot.slane %v3338, %v3417
          %v3419 = vlaneseq
          %v3420 = vshrl.u32 %v3419, 7
          %v3421 = vsub.s32 1, %v3420
          %v3422 = vrot.slane %v3342, %v3421
          %v3423 = vlaneseq
          %v3424 = vshrl.u32 %v3423, 7
          %v3425 = vsub.s32 1, %v3424
          %v3426 = vrot.slane %v3346, %v3425
          %v3427 = vlaneseq
          %v3428 = vshrl.u32 %v3427, 7
          %v3429 = vsub.s32 1, %v3428
          %v3430 = vrot.slane %v3350, %v3429
          %v3431 = vmul.f32 %v3267, %v3370
          %v3432 = vmul.f32 %v3268, %v3374
          %v3433 = vmul.f32 %v3269, %v3378
          %v3434 = vmul.f32 %v3270, %v3382
          %v3435 = vmul.f32 %v3271, %v3386
          %v3436 = vmul.f32 %v3272, %v3390
          %v3437 = vmul.f32 %v3273, %v3394
          %v3438 = vmul.f32 %v3274, %v3398
          %v3439 = vmul.f32 %v3275, %v3402
          %v3440 = vmul.f32 %v3276, %v3406
          %v3441 = vmul.f32 %v3277, %v3410
          %v3442 = vmul.f32 %v3278, %v3414
          %v3443 = vmul.f32 %v3279, %v3418
          %v3444 = vmul.f32 %v3280, %v3422
          %v3445 = vmul.f32 %v3281, %v3426
          %v3446 = vmul.f32 %v3282, %v3430
          %v3447 = vcvt.f32.s32.to.zero.pseudo %v443
          %v3448 = vcvt.f32.s32.to.zero.pseudo %v444
          %v3449 = vcvt.f32.s32.to.zero.pseudo %v445
          %v3450 = vcvt.f32.s32.to.zero.pseudo %v446
          %s3451 = smul.u32 %s39, 128
          %v3452 = vstv %s3451
          %v3453 = vsub.s32 %v3447, %v3452
          %v3454 = vsub.s32 %v3448, %v3452
          %v3455 = vsub.s32 %v3449, %v3452
          %v3456 = vsub.s32 %v3450, %v3452
          %v3457 = vlaneseq
          %v3458 = vshrl.u32 %v3457, 7
          %v3459 = vadd.s32 %v3458, 8
          %v3460 = vadd.s32 %v3458, 16
          %v3461 = vadd.s32 %v3458, 24
          %v3462 = vadd.s32 %v3458, 32
          %v3463 = vadd.s32 %v3458, 40
          %v3464 = vadd.s32 %v3458, 48
          %v3465 = vadd.s32 %v3458, 56
          %v3466 = vadd.s32 %v3458, 64
          %v3467 = vadd.s32 %v3458, 72
          %v3468 = vadd.s32 %v3458, 80
          %v3469 = vadd.s32 %v3458, 88
          %v3470 = vadd.s32 %v3458, 96
          %v3471 = vadd.s32 %v3458, 104
          %v3472 = vadd.s32 %v3458, 112
          %v3473 = vadd.s32 %v3458, 120
          %v3474 = vlaneseq
          %v3475 = vshrl.u32 %v3474, 7
          %v3476 = vsub.s32 0, %v3475
          %v3477 = vrot.slane %v3453, %v3476
          %v3478 = vlaneseq
          %v3479 = vshrl.u32 %v3478, 7
          %v3480 = vsub.s32 2, %v3479
          %v3481 = vrot.slane %v3453, %v3480
          %v3482 = vlaneseq
          %v3483 = vshrl.u32 %v3482, 7
          %v3484 = vsub.s32 4, %v3483
          %v3485 = vrot.slane %v3453, %v3484
          %v3486 = vlaneseq
          %v3487 = vshrl.u32 %v3486, 7
          %v3488 = vsub.s32 6, %v3487
          %v3489 = vrot.slane %v3453, %v3488
          %v3490 = vlaneseq
          %v3491 = vshrl.u32 %v3490, 7
          %v3492 = vsub.s32 0, %v3491
          %v3493 = vrot.slane %v3454, %v3492
          %v3494 = vlaneseq
          %v3495 = vshrl.u32 %v3494, 7
          %v3496 = vsub.s32 2, %v3495
          %v3497 = vrot.slane %v3454, %v3496
          %v3498 = vlaneseq
          %v3499 = vshrl.u32 %v3498, 7
          %v3500 = vsub.s32 4, %v3499
          %v3501 = vrot.slane %v3454, %v3500
          %v3502 = vlaneseq
          %v3503 = vshrl.u32 %v3502, 7
          %v3504 = vsub.s32 6, %v3503
          %v3505 = vrot.slane %v3454, %v3504
          %v3506 = vlaneseq
          %v3507 = vshrl.u32 %v3506, 7
          %v3508 = vsub.s32 0, %v3507
          %v3509 = vrot.slane %v3455, %v3508
          %v3510 = vlaneseq
          %v3511 = vshrl.u32 %v3510, 7
          %v3512 = vsub.s32 2, %v3511
          %v3513 = vrot.slane %v3455, %v3512
          %v3514 = vlaneseq
          %v3515 = vshrl.u32 %v3514, 7
          %v3516 = vsub.s32 4, %v3515
          %v3517 = vrot.slane %v3455, %v3516
          %v3518 = vlaneseq
          %v3519 = vshrl.u32 %v3518, 7
          %v3520 = vsub.s32 6, %v3519
          %v3521 = vrot.slane %v3455, %v3520
          %v3522 = vlaneseq
          %v3523 = vshrl.u32 %v3522, 7
          %v3524 = vsub.s32 0, %v3523
          %v3525 = vrot.slane %v3456, %v3524
          %v3526 = vlaneseq
          %v3527 = vshrl.u32 %v3526, 7
          %v3528 = vsub.s32 2, %v3527
          %v3529 = vrot.slane %v3456, %v3528
          %v3530 = vlaneseq
          %v3531 = vshrl.u32 %v3530, 7
          %v3532 = vsub.s32 4, %v3531
          %v3533 = vrot.slane %v3456, %v3532
          %v3534 = vlaneseq
          %v3535 = vshrl.u32 %v3534, 7
          %v3536 = vsub.s32 6, %v3535
          %v3537 = vrot.slane %v3456, %v3536
          %v3538 = vlaneseq
          %v3539 = vshrl.u32 %v3538, 7
          %v3540 = vsub.s32 0, %v3539
          %v3541 = vrot.slane %v3477, %v3540
          %v3542 = vlaneseq
          %v3543 = vshrl.u32 %v3542, 7
          %v3544 = vsub.s32 0, %v3543
          %v3545 = vrot.slane %v3481, %v3544
          %v3546 = vlaneseq
          %v3547 = vshrl.u32 %v3546, 7
          %v3548 = vsub.s32 0, %v3547
          %v3549 = vrot.slane %v3485, %v3548
          %v3550 = vlaneseq
          %v3551 = vshrl.u32 %v3550, 7
          %v3552 = vsub.s32 0, %v3551
          %v3553 = vrot.slane %v3489, %v3552
          %v3554 = vlaneseq
          %v3555 = vshrl.u32 %v3554, 7
          %v3556 = vsub.s32 0, %v3555
          %v3557 = vrot.slane %v3493, %v3556
          %v3558 = vlaneseq
          %v3559 = vshrl.u32 %v3558, 7
          %v3560 = vsub.s32 0, %v3559
          %v3561 = vrot.slane %v3497, %v3560
          %v3562 = vlaneseq
          %v3563 = vshrl.u32 %v3562, 7
          %v3564 = vsub.s32 0, %v3563
          %v3565 = vrot.slane %v3501, %v3564
          %v3566 = vlaneseq
          %v3567 = vshrl.u32 %v3566, 7
          %v3568 = vsub.s32 0, %v3567
          %v3569 = vrot.slane %v3505, %v3568
          %v3570 = vlaneseq
          %v3571 = vshrl.u32 %v3570, 7
          %v3572 = vsub.s32 0, %v3571
          %v3573 = vrot.slane %v3509, %v3572
          %v3574 = vlaneseq
          %v3575 = vshrl.u32 %v3574, 7
          %v3576 = vsub.s32 0, %v3575
          %v3577 = vrot.slane %v3513, %v3576
          %v3578 = vlaneseq
          %v3579 = vshrl.u32 %v3578, 7
          %v3580 = vsub.s32 0, %v3579
          %v3581 = vrot.slane %v3517, %v3580
          %v3582 = vlaneseq
          %v3583 = vshrl.u32 %v3582, 7
          %v3584 = vsub.s32 0, %v3583
          %v3585 = vrot.slane %v3521, %v3584
          %v3586 = vlaneseq
          %v3587 = vshrl.u32 %v3586, 7
          %v3588 = vsub.s32 0, %v3587
          %v3589 = vrot.slane %v3525, %v3588
          %v3590 = vlaneseq
          %v3591 = vshrl.u32 %v3590, 7
          %v3592 = vsub.s32 0, %v3591
          %v3593 = vrot.slane %v3529, %v3592
          %v3594 = vlaneseq
          %v3595 = vshrl.u32 %v3594, 7
          %v3596 = vsub.s32 0, %v3595
          %v3597 = vrot.slane %v3533, %v3596
          %v3598 = vlaneseq
          %v3599 = vshrl.u32 %v3598, 7
          %v3600 = vsub.s32 0, %v3599
          %v3601 = vrot.slane %v3537, %v3600
          %vm3602 = vcmp.eq.s32.totalorder %v3458, %v3541
          %vm3603 = vcmp.eq.s32.totalorder %v3458, %v3545
          %vm3604 = vcmp.eq.s32.totalorder %v3458, %v3549
          %vm3605 = vcmp.eq.s32.totalorder %v3458, %v3553
          %vm3606 = vcmp.eq.s32.totalorder %v3458, %v3557
          %vm3607 = vcmp.eq.s32.totalorder %v3458, %v3561
          %vm3608 = vcmp.eq.s32.totalorder %v3458, %v3565
          %vm3609 = vcmp.eq.s32.totalorder %v3458, %v3569
          %vm3610 = vcmp.eq.s32.totalorder %v3458, %v3573
          %vm3611 = vcmp.eq.s32.totalorder %v3458, %v3577
          %vm3612 = vcmp.eq.s32.totalorder %v3458, %v3581
          %vm3613 = vcmp.eq.s32.totalorder %v3458, %v3585
          %vm3614 = vcmp.eq.s32.totalorder %v3458, %v3589
          %vm3615 = vcmp.eq.s32.totalorder %v3458, %v3593
          %vm3616 = vcmp.eq.s32.totalorder %v3458, %v3597
          %vm3617 = vcmp.eq.s32.totalorder %v3458, %v3601
          %vm3618 = vcmp.eq.s32.totalorder %v3459, %v3541
          %vm3619 = vcmp.eq.s32.totalorder %v3459, %v3545
          %vm3620 = vcmp.eq.s32.totalorder %v3459, %v3549
          %vm3621 = vcmp.eq.s32.totalorder %v3459, %v3553
          %vm3622 = vcmp.eq.s32.totalorder %v3459, %v3557
          %vm3623 = vcmp.eq.s32.totalorder %v3459, %v3561
          %vm3624 = vcmp.eq.s32.totalorder %v3459, %v3565
          %vm3625 = vcmp.eq.s32.totalorder %v3459, %v3569
          %vm3626 = vcmp.eq.s32.totalorder %v3459, %v3573
          %vm3627 = vcmp.eq.s32.totalorder %v3459, %v3577
          %vm3628 = vcmp.eq.s32.totalorder %v3459, %v3581
          %vm3629 = vcmp.eq.s32.totalorder %v3459, %v3585
          %vm3630 = vcmp.eq.s32.totalorder %v3459, %v3589
          %vm3631 = vcmp.eq.s32.totalorder %v3459, %v3593
          %vm3632 = vcmp.eq.s32.totalorder %v3459, %v3597
          %vm3633 = vcmp.eq.s32.totalorder %v3459, %v3601
          %vm3634 = vcmp.eq.s32.totalorder %v3460, %v3541
          %vm3635 = vcmp.eq.s32.totalorder %v3460, %v3545
          %vm3636 = vcmp.eq.s32.totalorder %v3460, %v3549
          %vm3637 = vcmp.eq.s32.totalorder %v3460, %v3553
          %vm3638 = vcmp.eq.s32.totalorder %v3460, %v3557
          %vm3639 = vcmp.eq.s32.totalorder %v3460, %v3561
          %vm3640 = vcmp.eq.s32.totalorder %v3460, %v3565
          %vm3641 = vcmp.eq.s32.totalorder %v3460, %v3569
          %vm3642 = vcmp.eq.s32.totalorder %v3460, %v3573
          %vm3643 = vcmp.eq.s32.totalorder %v3460, %v3577
          %vm3644 = vcmp.eq.s32.totalorder %v3460, %v3581
          %vm3645 = vcmp.eq.s32.totalorder %v3460, %v3585
          %vm3646 = vcmp.eq.s32.totalorder %v3460, %v3589
          %vm3647 = vcmp.eq.s32.totalorder %v3460, %v3593
          %vm3648 = vcmp.eq.s32.totalorder %v3460, %v3597
          %vm3649 = vcmp.eq.s32.totalorder %v3460, %v3601
          %vm3650 = vcmp.eq.s32.totalorder %v3461, %v3541
          %vm3651 = vcmp.eq.s32.totalorder %v3461, %v3545
          %vm3652 = vcmp.eq.s32.totalorder %v3461, %v3549
          %vm3653 = vcmp.eq.s32.totalorder %v3461, %v3553
          %vm3654 = vcmp.eq.s32.totalorder %v3461, %v3557
          %vm3655 = vcmp.eq.s32.totalorder %v3461, %v3561
          %vm3656 = vcmp.eq.s32.totalorder %v3461, %v3565
          %vm3657 = vcmp.eq.s32.totalorder %v3461, %v3569
          %vm3658 = vcmp.eq.s32.totalorder %v3461, %v3573
          %vm3659 = vcmp.eq.s32.totalorder %v3461, %v3577
          %vm3660 = vcmp.eq.s32.totalorder %v3461, %v3581
          %vm3661 = vcmp.eq.s32.totalorder %v3461, %v3585
          %vm3662 = vcmp.eq.s32.totalorder %v3461, %v3589
          %vm3663 = vcmp.eq.s32.totalorder %v3461, %v3593
          %vm3664 = vcmp.eq.s32.totalorder %v3461, %v3597
          %vm3665 = vcmp.eq.s32.totalorder %v3461, %v3601
          %vm3666 = vcmp.eq.s32.totalorder %v3462, %v3541
          %vm3667 = vcmp.eq.s32.totalorder %v3462, %v3545
          %vm3668 = vcmp.eq.s32.totalorder %v3462, %v3549
          %vm3669 = vcmp.eq.s32.totalorder %v3462, %v3553
          %vm3670 = vcmp.eq.s32.totalorder %v3462, %v3557
          %vm3671 = vcmp.eq.s32.totalorder %v3462, %v3561
          %vm3672 = vcmp.eq.s32.totalorder %v3462, %v3565
          %vm3673 = vcmp.eq.s32.totalorder %v3462, %v3569
          %vm3674 = vcmp.eq.s32.totalorder %v3462, %v3573
          %vm3675 = vcmp.eq.s32.totalorder %v3462, %v3577
          %vm3676 = vcmp.eq.s32.totalorder %v3462, %v3581
          %vm3677 = vcmp.eq.s32.totalorder %v3462, %v3585
          %vm3678 = vcmp.eq.s32.totalorder %v3462, %v3589
          %vm3679 = vcmp.eq.s32.totalorder %v3462, %v3593
          %vm3680 = vcmp.eq.s32.totalorder %v3462, %v3597
          %vm3681 = vcmp.eq.s32.totalorder %v3462, %v3601
          %vm3682 = vcmp.eq.s32.totalorder %v3463, %v3541
          %vm3683 = vcmp.eq.s32.totalorder %v3463, %v3545
          %vm3684 = vcmp.eq.s32.totalorder %v3463, %v3549
          %vm3685 = vcmp.eq.s32.totalorder %v3463, %v3553
          %vm3686 = vcmp.eq.s32.totalorder %v3463, %v3557
          %vm3687 = vcmp.eq.s32.totalorder %v3463, %v3561
          %vm3688 = vcmp.eq.s32.totalorder %v3463, %v3565
          %vm3689 = vcmp.eq.s32.totalorder %v3463, %v3569
          %vm3690 = vcmp.eq.s32.totalorder %v3463, %v3573
          %vm3691 = vcmp.eq.s32.totalorder %v3463, %v3577
          %vm3692 = vcmp.eq.s32.totalorder %v3463, %v3581
          %vm3693 = vcmp.eq.s32.totalorder %v3463, %v3585
          %vm3694 = vcmp.eq.s32.totalorder %v3463, %v3589
          %vm3695 = vcmp.eq.s32.totalorder %v3463, %v3593
          %vm3696 = vcmp.eq.s32.totalorder %v3463, %v3597
          %vm3697 = vcmp.eq.s32.totalorder %v3463, %v3601
          %vm3698 = vcmp.eq.s32.totalorder %v3464, %v3541
          %vm3699 = vcmp.eq.s32.totalorder %v3464, %v3545
          %vm3700 = vcmp.eq.s32.totalorder %v3464, %v3549
          %vm3701 = vcmp.eq.s32.totalorder %v3464, %v3553
          %vm3702 = vcmp.eq.s32.totalorder %v3464, %v3557
          %vm3703 = vcmp.eq.s32.totalorder %v3464, %v3561
          %vm3704 = vcmp.eq.s32.totalorder %v3464, %v3565
          %vm3705 = vcmp.eq.s32.totalorder %v3464, %v3569
          %vm3706 = vcmp.eq.s32.totalorder %v3464, %v3573
          %vm3707 = vcmp.eq.s32.totalorder %v3464, %v3577
          %vm3708 = vcmp.eq.s32.totalorder %v3464, %v3581
          %vm3709 = vcmp.eq.s32.totalorder %v3464, %v3585
          %vm3710 = vcmp.eq.s32.totalorder %v3464, %v3589
          %vm3711 = vcmp.eq.s32.totalorder %v3464, %v3593
          %vm3712 = vcmp.eq.s32.totalorder %v3464, %v3597
          %vm3713 = vcmp.eq.s32.totalorder %v3464, %v3601
          %vm3714 = vcmp.eq.s32.totalorder %v3465, %v3541
          %vm3715 = vcmp.eq.s32.totalorder %v3465, %v3545
          %vm3716 = vcmp.eq.s32.totalorder %v3465, %v3549
          %vm3717 = vcmp.eq.s32.totalorder %v3465, %v3553
          %vm3718 = vcmp.eq.s32.totalorder %v3465, %v3557
          %vm3719 = vcmp.eq.s32.totalorder %v3465, %v3561
          %vm3720 = vcmp.eq.s32.totalorder %v3465, %v3565
          %vm3721 = vcmp.eq.s32.totalorder %v3465, %v3569
          %vm3722 = vcmp.eq.s32.totalorder %v3465, %v3573
          %vm3723 = vcmp.eq.s32.totalorder %v3465, %v3577
          %vm3724 = vcmp.eq.s32.totalorder %v3465, %v3581
          %vm3725 = vcmp.eq.s32.totalorder %v3465, %v3585
          %vm3726 = vcmp.eq.s32.totalorder %v3465, %v3589
          %vm3727 = vcmp.eq.s32.totalorder %v3465, %v3593
          %vm3728 = vcmp.eq.s32.totalorder %v3465, %v3597
          %vm3729 = vcmp.eq.s32.totalorder %v3465, %v3601
          %vm3730 = vcmp.eq.s32.totalorder %v3466, %v3541
          %vm3731 = vcmp.eq.s32.totalorder %v3466, %v3545
          %vm3732 = vcmp.eq.s32.totalorder %v3466, %v3549
          %vm3733 = vcmp.eq.s32.totalorder %v3466, %v3553
          %vm3734 = vcmp.eq.s32.totalorder %v3466, %v3557
          %vm3735 = vcmp.eq.s32.totalorder %v3466, %v3561
          %vm3736 = vcmp.eq.s32.totalorder %v3466, %v3565
          %vm3737 = vcmp.eq.s32.totalorder %v3466, %v3569
          %vm3738 = vcmp.eq.s32.totalorder %v3466, %v3573
          %vm3739 = vcmp.eq.s32.totalorder %v3466, %v3577
          %vm3740 = vcmp.eq.s32.totalorder %v3466, %v3581
          %vm3741 = vcmp.eq.s32.totalorder %v3466, %v3585
          %vm3742 = vcmp.eq.s32.totalorder %v3466, %v3589
          %vm3743 = vcmp.eq.s32.totalorder %v3466, %v3593
          %vm3744 = vcmp.eq.s32.totalorder %v3466, %v3597
          %vm3745 = vcmp.eq.s32.totalorder %v3466, %v3601
          %vm3746 = vcmp.eq.s32.totalorder %v3467, %v3541
          %vm3747 = vcmp.eq.s32.totalorder %v3467, %v3545
          %vm3748 = vcmp.eq.s32.totalorder %v3467, %v3549
          %vm3749 = vcmp.eq.s32.totalorder %v3467, %v3553
          %vm3750 = vcmp.eq.s32.totalorder %v3467, %v3557
          %vm3751 = vcmp.eq.s32.totalorder %v3467, %v3561
          %vm3752 = vcmp.eq.s32.totalorder %v3467, %v3565
          %vm3753 = vcmp.eq.s32.totalorder %v3467, %v3569
          %vm3754 = vcmp.eq.s32.totalorder %v3467, %v3573
          %vm3755 = vcmp.eq.s32.totalorder %v3467, %v3577
          %vm3756 = vcmp.eq.s32.totalorder %v3467, %v3581
          %vm3757 = vcmp.eq.s32.totalorder %v3467, %v3585
          %vm3758 = vcmp.eq.s32.totalorder %v3467, %v3589
          %vm3759 = vcmp.eq.s32.totalorder %v3467, %v3593
          %vm3760 = vcmp.eq.s32.totalorder %v3467, %v3597
          %vm3761 = vcmp.eq.s32.totalorder %v3467, %v3601
          %vm3762 = vcmp.eq.s32.totalorder %v3468, %v3541
          %vm3763 = vcmp.eq.s32.totalorder %v3468, %v3545
          %vm3764 = vcmp.eq.s32.totalorder %v3468, %v3549
          %vm3765 = vcmp.eq.s32.totalorder %v3468, %v3553
          %vm3766 = vcmp.eq.s32.totalorder %v3468, %v3557
          %vm3767 = vcmp.eq.s32.totalorder %v3468, %v3561
          %vm3768 = vcmp.eq.s32.totalorder %v3468, %v3565
          %vm3769 = vcmp.eq.s32.totalorder %v3468, %v3569
          %vm3770 = vcmp.eq.s32.totalorder %v3468, %v3573
          %vm3771 = vcmp.eq.s32.totalorder %v3468, %v3577
          %vm3772 = vcmp.eq.s32.totalorder %v3468, %v3581
          %vm3773 = vcmp.eq.s32.totalorder %v3468, %v3585
          %vm3774 = vcmp.eq.s32.totalorder %v3468, %v3589
          %vm3775 = vcmp.eq.s32.totalorder %v3468, %v3593
          %vm3776 = vcmp.eq.s32.totalorder %v3468, %v3597
          %vm3777 = vcmp.eq.s32.totalorder %v3468, %v3601
          %vm3778 = vcmp.eq.s32.totalorder %v3469, %v3541
          %vm3779 = vcmp.eq.s32.totalorder %v3469, %v3545
          %vm3780 = vcmp.eq.s32.totalorder %v3469, %v3549
          %vm3781 = vcmp.eq.s32.totalorder %v3469, %v3553
          %vm3782 = vcmp.eq.s32.totalorder %v3469, %v3557
          %vm3783 = vcmp.eq.s32.totalorder %v3469, %v3561
          %vm3784 = vcmp.eq.s32.totalorder %v3469, %v3565
          %vm3785 = vcmp.eq.s32.totalorder %v3469, %v3569
          %vm3786 = vcmp.eq.s32.totalorder %v3469, %v3573
          %vm3787 = vcmp.eq.s32.totalorder %v3469, %v3577
          %vm3788 = vcmp.eq.s32.totalorder %v3469, %v3581
          %vm3789 = vcmp.eq.s32.totalorder %v3469, %v3585
          %vm3790 = vcmp.eq.s32.totalorder %v3469, %v3589
          %vm3791 = vcmp.eq.s32.totalorder %v3469, %v3593
          %vm3792 = vcmp.eq.s32.totalorder %v3469, %v3597
          %vm3793 = vcmp.eq.s32.totalorder %v3469, %v3601
          %vm3794 = vcmp.eq.s32.totalorder %v3470, %v3541
          %vm3795 = vcmp.eq.s32.totalorder %v3470, %v3545
          %vm3796 = vcmp.eq.s32.totalorder %v3470, %v3549
          %vm3797 = vcmp.eq.s32.totalorder %v3470, %v3553
          %vm3798 = vcmp.eq.s32.totalorder %v3470, %v3557
          %vm3799 = vcmp.eq.s32.totalorder %v3470, %v3561
          %vm3800 = vcmp.eq.s32.totalorder %v3470, %v3565
          %vm3801 = vcmp.eq.s32.totalorder %v3470, %v3569
          %vm3802 = vcmp.eq.s32.totalorder %v3470, %v3573
          %vm3803 = vcmp.eq.s32.totalorder %v3470, %v3577
          %vm3804 = vcmp.eq.s32.totalorder %v3470, %v3581
          %vm3805 = vcmp.eq.s32.totalorder %v3470, %v3585
          %vm3806 = vcmp.eq.s32.totalorder %v3470, %v3589
          %vm3807 = vcmp.eq.s32.totalorder %v3470, %v3593
          %vm3808 = vcmp.eq.s32.totalorder %v3470, %v3597
          %vm3809 = vcmp.eq.s32.totalorder %v3470, %v3601
          %vm3810 = vcmp.eq.s32.totalorder %v3471, %v3541
          %vm3811 = vcmp.eq.s32.totalorder %v3471, %v3545
          %vm3812 = vcmp.eq.s32.totalorder %v3471, %v3549
          %vm3813 = vcmp.eq.s32.totalorder %v3471, %v3553
          %vm3814 = vcmp.eq.s32.totalorder %v3471, %v3557
          %vm3815 = vcmp.eq.s32.totalorder %v3471, %v3561
          %vm3816 = vcmp.eq.s32.totalorder %v3471, %v3565
          %vm3817 = vcmp.eq.s32.totalorder %v3471, %v3569
          %vm3818 = vcmp.eq.s32.totalorder %v3471, %v3573
          %vm3819 = vcmp.eq.s32.totalorder %v3471, %v3577
          %vm3820 = vcmp.eq.s32.totalorder %v3471, %v3581
          %vm3821 = vcmp.eq.s32.totalorder %v3471, %v3585
          %vm3822 = vcmp.eq.s32.totalorder %v3471, %v3589
          %vm3823 = vcmp.eq.s32.totalorder %v3471, %v3593
          %vm3824 = vcmp.eq.s32.totalorder %v3471, %v3597
          %vm3825 = vcmp.eq.s32.totalorder %v3471, %v3601
          %vm3826 = vcmp.eq.s32.totalorder %v3472, %v3541
          %vm3827 = vcmp.eq.s32.totalorder %v3472, %v3545
          %vm3828 = vcmp.eq.s32.totalorder %v3472, %v3549
          %vm3829 = vcmp.eq.s32.totalorder %v3472, %v3553
          %vm3830 = vcmp.eq.s32.totalorder %v3472, %v3557
          %vm3831 = vcmp.eq.s32.totalorder %v3472, %v3561
          %vm3832 = vcmp.eq.s32.totalorder %v3472, %v3565
          %vm3833 = vcmp.eq.s32.totalorder %v3472, %v3569
          %vm3834 = vcmp.eq.s32.totalorder %v3472, %v3573
          %vm3835 = vcmp.eq.s32.totalorder %v3472, %v3577
          %vm3836 = vcmp.eq.s32.totalorder %v3472, %v3581
          %vm3837 = vcmp.eq.s32.totalorder %v3472, %v3585
          %vm3838 = vcmp.eq.s32.totalorder %v3472, %v3589
          %vm3839 = vcmp.eq.s32.totalorder %v3472, %v3593
          %vm3840 = vcmp.eq.s32.totalorder %v3472, %v3597
          %vm3841 = vcmp.eq.s32.totalorder %v3472, %v3601
          %vm3842 = vcmp.eq.s32.totalorder %v3473, %v3541
          %vm3843 = vcmp.eq.s32.totalorder %v3473, %v3545
          %vm3844 = vcmp.eq.s32.totalorder %v3473, %v3549
          %vm3845 = vcmp.eq.s32.totalorder %v3473, %v3553
          %vm3846 = vcmp.eq.s32.totalorder %v3473, %v3557
          %vm3847 = vcmp.eq.s32.totalorder %v3473, %v3561
          %vm3848 = vcmp.eq.s32.totalorder %v3473, %v3565
          %vm3849 = vcmp.eq.s32.totalorder %v3473, %v3569
          %vm3850 = vcmp.eq.s32.totalorder %v3473, %v3573
          %vm3851 = vcmp.eq.s32.totalorder %v3473, %v3577
          %vm3852 = vcmp.eq.s32.totalorder %v3473, %v3581
          %vm3853 = vcmp.eq.s32.totalorder %v3473, %v3585
          %vm3854 = vcmp.eq.s32.totalorder %v3473, %v3589
          %vm3855 = vcmp.eq.s32.totalorder %v3473, %v3593
          %vm3856 = vcmp.eq.s32.totalorder %v3473, %v3597
          %vm3857 = vcmp.eq.s32.totalorder %v3473, %v3601
          %v3858 = vsel %vm3602, 1, 0
          %v3859 = vsel %vm3603, 1, 0
          %v3860 = vsel %vm3604, 1, 0
          %v3861 = vsel %vm3605, 1, 0
          %v3862 = vsel %vm3606, 1, 0
          %v3863 = vsel %vm3607, 1, 0
          %v3864 = vsel %vm3608, 1, 0
          %v3865 = vsel %vm3609, 1, 0
          %v3866 = vsel %vm3610, 1, 0
          %v3867 = vsel %vm3611, 1, 0
          %v3868 = vsel %vm3612, 1, 0
          %v3869 = vsel %vm3613, 1, 0
          %v3870 = vsel %vm3614, 1, 0
          %v3871 = vsel %vm3615, 1, 0
          %v3872 = vsel %vm3616, 1, 0
          %v3873 = vsel %vm3617, 1, 0
          %v3874 = vsel %vm3618, 1, 0
          %v3875 = vsel %vm3619, 1, 0
          %v3876 = vsel %vm3620, 1, 0
          %v3877 = vsel %vm3621, 1, 0
          %v3878 = vsel %vm3622, 1, 0
          %v3879 = vsel %vm3623, 1, 0
          %v3880 = vsel %vm3624, 1, 0
          %v3881 = vsel %vm3625, 1, 0
          %v3882 = vsel %vm3626, 1, 0
          %v3883 = vsel %vm3627, 1, 0
          %v3884 = vsel %vm3628, 1, 0
          %v3885 = vsel %vm3629, 1, 0
          %v3886 = vsel %vm3630, 1, 0
          %v3887 = vsel %vm3631, 1, 0
          %v3888 = vsel %vm3632, 1, 0
          %v3889 = vsel %vm3633, 1, 0
          %v3890 = vsel %vm3634, 1, 0
          %v3891 = vsel %vm3635, 1, 0
          %v3892 = vsel %vm3636, 1, 0
          %v3893 = vsel %vm3637, 1, 0
          %v3894 = vsel %vm3638, 1, 0
          %v3895 = vsel %vm3639, 1, 0
          %v3896 = vsel %vm3640, 1, 0
          %v3897 = vsel %vm3641, 1, 0
          %v3898 = vsel %vm3642, 1, 0
          %v3899 = vsel %vm3643, 1, 0
          %v3900 = vsel %vm3644, 1, 0
          %v3901 = vsel %vm3645, 1, 0
          %v3902 = vsel %vm3646, 1, 0
          %v3903 = vsel %vm3647, 1, 0
          %v3904 = vsel %vm3648, 1, 0
          %v3905 = vsel %vm3649, 1, 0
          %v3906 = vsel %vm3650, 1, 0
          %v3907 = vsel %vm3651, 1, 0
          %v3908 = vsel %vm3652, 1, 0
          %v3909 = vsel %vm3653, 1, 0
          %v3910 = vsel %vm3654, 1, 0
          %v3911 = vsel %vm3655, 1, 0
          %v3912 = vsel %vm3656, 1, 0
          %v3913 = vsel %vm3657, 1, 0
          %v3914 = vsel %vm3658, 1, 0
          %v3915 = vsel %vm3659, 1, 0
          %v3916 = vsel %vm3660, 1, 0
          %v3917 = vsel %vm3661, 1, 0
          %v3918 = vsel %vm3662, 1, 0
          %v3919 = vsel %vm3663, 1, 0
          %v3920 = vsel %vm3664, 1, 0
          %v3921 = vsel %vm3665, 1, 0
          %v3922 = vsel %vm3666, 1, 0
          %v3923 = vsel %vm3667, 1, 0
          %v3924 = vsel %vm3668, 1, 0
          %v3925 = vsel %vm3669, 1, 0
          %v3926 = vsel %vm3670, 1, 0
          %v3927 = vsel %vm3671, 1, 0
          %v3928 = vsel %vm3672, 1, 0
          %v3929 = vsel %vm3673, 1, 0
          %v3930 = vsel %vm3674, 1, 0
          %v3931 = vsel %vm3675, 1, 0
          %v3932 = vsel %vm3676, 1, 0
          %v3933 = vsel %vm3677, 1, 0
          %v3934 = vsel %vm3678, 1, 0
          %v3935 = vsel %vm3679, 1, 0
          %v3936 = vsel %vm3680, 1, 0
          %v3937 = vsel %vm3681, 1, 0
          %v3938 = vsel %vm3682, 1, 0
          %v3939 = vsel %vm3683, 1, 0
          %v3940 = vsel %vm3684, 1, 0
          %v3941 = vsel %vm3685, 1, 0
          %v3942 = vsel %vm3686, 1, 0
          %v3943 = vsel %vm3687, 1, 0
          %v3944 = vsel %vm3688, 1, 0
          %v3945 = vsel %vm3689, 1, 0
          %v3946 = vsel %vm3690, 1, 0
          %v3947 = vsel %vm3691, 1, 0
          %v3948 = vsel %vm3692, 1, 0
          %v3949 = vsel %vm3693, 1, 0
          %v3950 = vsel %vm3694, 1, 0
          %v3951 = vsel %vm3695, 1, 0
          %v3952 = vsel %vm3696, 1, 0
          %v3953 = vsel %vm3697, 1, 0
          %v3954 = vsel %vm3698, 1, 0
          %v3955 = vsel %vm3699, 1, 0
          %v3956 = vsel %vm3700, 1, 0
          %v3957 = vsel %vm3701, 1, 0
          %v3958 = vsel %vm3702, 1, 0
          %v3959 = vsel %vm3703, 1, 0
          %v3960 = vsel %vm3704, 1, 0
          %v3961 = vsel %vm3705, 1, 0
          %v3962 = vsel %vm3706, 1, 0
          %v3963 = vsel %vm3707, 1, 0
          %v3964 = vsel %vm3708, 1, 0
          %v3965 = vsel %vm3709, 1, 0
          %v3966 = vsel %vm3710, 1, 0
          %v3967 = vsel %vm3711, 1, 0
          %v3968 = vsel %vm3712, 1, 0
          %v3969 = vsel %vm3713, 1, 0
          %v3970 = vsel %vm3714, 1, 0
          %v3971 = vsel %vm3715, 1, 0
          %v3972 = vsel %vm3716, 1, 0
          %v3973 = vsel %vm3717, 1, 0
          %v3974 = vsel %vm3718, 1, 0
          %v3975 = vsel %vm3719, 1, 0
          %v3976 = vsel %vm3720, 1, 0
          %v3977 = vsel %vm3721, 1, 0
          %v3978 = vsel %vm3722, 1, 0
          %v3979 = vsel %vm3723, 1, 0
          %v3980 = vsel %vm3724, 1, 0
          %v3981 = vsel %vm3725, 1, 0
          %v3982 = vsel %vm3726, 1, 0
          %v3983 = vsel %vm3727, 1, 0
          %v3984 = vsel %vm3728, 1, 0
          %v3985 = vsel %vm3729, 1, 0
          %v3986 = vsel %vm3730, 1, 0
          %v3987 = vsel %vm3731, 1, 0
          %v3988 = vsel %vm3732, 1, 0
          %v3989 = vsel %vm3733, 1, 0
          %v3990 = vsel %vm3734, 1, 0
          %v3991 = vsel %vm3735, 1, 0
          %v3992 = vsel %vm3736, 1, 0
          %v3993 = vsel %vm3737, 1, 0
          %v3994 = vsel %vm3738, 1, 0
          %v3995 = vsel %vm3739, 1, 0
          %v3996 = vsel %vm3740, 1, 0
          %v3997 = vsel %vm3741, 1, 0
          %v3998 = vsel %vm3742, 1, 0
          %v3999 = vsel %vm3743, 1, 0
          %v4000 = vsel %vm3744, 1, 0
          %v4001 = vsel %vm3745, 1, 0
          %v4002 = vsel %vm3746, 1, 0
          %v4003 = vsel %vm3747, 1, 0
          %v4004 = vsel %vm3748, 1, 0
          %v4005 = vsel %vm3749, 1, 0
          %v4006 = vsel %vm3750, 1, 0
          %v4007 = vsel %vm3751, 1, 0
          %v4008 = vsel %vm3752, 1, 0
          %v4009 = vsel %vm3753, 1, 0
          %v4010 = vsel %vm3754, 1, 0
          %v4011 = vsel %vm3755, 1, 0
          %v4012 = vsel %vm3756, 1, 0
          %v4013 = vsel %vm3757, 1, 0
          %v4014 = vsel %vm3758, 1, 0
          %v4015 = vsel %vm3759, 1, 0
          %v4016 = vsel %vm3760, 1, 0
          %v4017 = vsel %vm3761, 1, 0
          %v4018 = vsel %vm3762, 1, 0
          %v4019 = vsel %vm3763, 1, 0
          %v4020 = vsel %vm3764, 1, 0
          %v4021 = vsel %vm3765, 1, 0
          %v4022 = vsel %vm3766, 1, 0
          %v4023 = vsel %vm3767, 1, 0
          %v4024 = vsel %vm3768, 1, 0
          %v4025 = vsel %vm3769, 1, 0
          %v4026 = vsel %vm3770, 1, 0
          %v4027 = vsel %vm3771, 1, 0
          %v4028 = vsel %vm3772, 1, 0
          %v4029 = vsel %vm3773, 1, 0
          %v4030 = vsel %vm3774, 1, 0
          %v4031 = vsel %vm3775, 1, 0
          %v4032 = vsel %vm3776, 1, 0
          %v4033 = vsel %vm3777, 1, 0
          %v4034 = vsel %vm3778, 1, 0
          %v4035 = vsel %vm3779, 1, 0
          %v4036 = vsel %vm3780, 1, 0
          %v4037 = vsel %vm3781, 1, 0
          %v4038 = vsel %vm3782, 1, 0
          %v4039 = vsel %vm3783, 1, 0
          %v4040 = vsel %vm3784, 1, 0
          %v4041 = vsel %vm3785, 1, 0
          %v4042 = vsel %vm3786, 1, 0
          %v4043 = vsel %vm3787, 1, 0
          %v4044 = vsel %vm3788, 1, 0
          %v4045 = vsel %vm3789, 1, 0
          %v4046 = vsel %vm3790, 1, 0
          %v4047 = vsel %vm3791, 1, 0
          %v4048 = vsel %vm3792, 1, 0
          %v4049 = vsel %vm3793, 1, 0
          %v4050 = vsel %vm3794, 1, 0
          %v4051 = vsel %vm3795, 1, 0
          %v4052 = vsel %vm3796, 1, 0
          %v4053 = vsel %vm3797, 1, 0
          %v4054 = vsel %vm3798, 1, 0
          %v4055 = vsel %vm3799, 1, 0
          %v4056 = vsel %vm3800, 1, 0
          %v4057 = vsel %vm3801, 1, 0
          %v4058 = vsel %vm3802, 1, 0
          %v4059 = vsel %vm3803, 1, 0
          %v4060 = vsel %vm3804, 1, 0
          %v4061 = vsel %vm3805, 1, 0
          %v4062 = vsel %vm3806, 1, 0
          %v4063 = vsel %vm3807, 1, 0
          %v4064 = vsel %vm3808, 1, 0
          %v4065 = vsel %vm3809, 1, 0
          %v4066 = vsel %vm3810, 1, 0
          %v4067 = vsel %vm3811, 1, 0
          %v4068 = vsel %vm3812, 1, 0
          %v4069 = vsel %vm3813, 1, 0
          %v4070 = vsel %vm3814, 1, 0
          %v4071 = vsel %vm3815, 1, 0
          %v4072 = vsel %vm3816, 1, 0
          %v4073 = vsel %vm3817, 1, 0
          %v4074 = vsel %vm3818, 1, 0
          %v4075 = vsel %vm3819, 1, 0
          %v4076 = vsel %vm3820, 1, 0
          %v4077 = vsel %vm3821, 1, 0
          %v4078 = vsel %vm3822, 1, 0
          %v4079 = vsel %vm3823, 1, 0
          %v4080 = vsel %vm3824, 1, 0
          %v4081 = vsel %vm3825, 1, 0
          %v4082 = vsel %vm3826, 1, 0
          %v4083 = vsel %vm3827, 1, 0
          %v4084 = vsel %vm3828, 1, 0
          %v4085 = vsel %vm3829, 1, 0
          %v4086 = vsel %vm3830, 1, 0
          %v4087 = vsel %vm3831, 1, 0
          %v4088 = vsel %vm3832, 1, 0
          %v4089 = vsel %vm3833, 1, 0
          %v4090 = vsel %vm3834, 1, 0
          %v4091 = vsel %vm3835, 1, 0
          %v4092 = vsel %vm3836, 1, 0
          %v4093 = vsel %vm3837, 1, 0
          %v4094 = vsel %vm3838, 1, 0
          %v4095 = vsel %vm3839, 1, 0
          %v4096 = vsel %vm3840, 1, 0
          %v4097 = vsel %vm3841, 1, 0
          %v4098 = vsel %vm3842, 1, 0
          %v4099 = vsel %vm3843, 1, 0
          %v4100 = vsel %vm3844, 1, 0
          %v4101 = vsel %vm3845, 1, 0
          %v4102 = vsel %vm3846, 1, 0
          %v4103 = vsel %vm3847, 1, 0
          %v4104 = vsel %vm3848, 1, 0
          %v4105 = vsel %vm3849, 1, 0
          %v4106 = vsel %vm3850, 1, 0
          %v4107 = vsel %vm3851, 1, 0
          %v4108 = vsel %vm3852, 1, 0
          %v4109 = vsel %vm3853, 1, 0
          %v4110 = vsel %vm3854, 1, 0
          %v4111 = vsel %vm3855, 1, 0
          %v4112 = vsel %vm3856, 1, 0
          %v4113 = vsel %vm3857, 1, 0
          %v4114 = vcvt.s32.f32 %v3858
          %v4115 = vcvt.s32.f32 %v3859
          %v4116 = vcvt.s32.f32 %v3860
          %v4117 = vcvt.s32.f32 %v3861
          %v4118 = vcvt.s32.f32 %v3862
          %v4119 = vcvt.s32.f32 %v3863
          %v4120 = vcvt.s32.f32 %v3864
          %v4121 = vcvt.s32.f32 %v3865
          %v4122 = vcvt.s32.f32 %v3866
          %v4123 = vcvt.s32.f32 %v3867
          %v4124 = vcvt.s32.f32 %v3868
          %v4125 = vcvt.s32.f32 %v3869
          %v4126 = vcvt.s32.f32 %v3870
          %v4127 = vcvt.s32.f32 %v3871
          %v4128 = vcvt.s32.f32 %v3872
          %v4129 = vcvt.s32.f32 %v3873
          %v4130 = vcvt.s32.f32 %v3874
          %v4131 = vcvt.s32.f32 %v3875
          %v4132 = vcvt.s32.f32 %v3876
          %v4133 = vcvt.s32.f32 %v3877
          %v4134 = vcvt.s32.f32 %v3878
          %v4135 = vcvt.s32.f32 %v3879
          %v4136 = vcvt.s32.f32 %v3880
          %v4137 = vcvt.s32.f32 %v3881
          %v4138 = vcvt.s32.f32 %v3882
          %v4139 = vcvt.s32.f32 %v3883
          %v4140 = vcvt.s32.f32 %v3884
          %v4141 = vcvt.s32.f32 %v3885
          %v4142 = vcvt.s32.f32 %v3886
          %v4143 = vcvt.s32.f32 %v3887
          %v4144 = vcvt.s32.f32 %v3888
          %v4145 = vcvt.s32.f32 %v3889
          %v4146 = vcvt.s32.f32 %v3890
          %v4147 = vcvt.s32.f32 %v3891
          %v4148 = vcvt.s32.f32 %v3892
          %v4149 = vcvt.s32.f32 %v3893
          %v4150 = vcvt.s32.f32 %v3894
          %v4151 = vcvt.s32.f32 %v3895
          %v4152 = vcvt.s32.f32 %v3896
          %v4153 = vcvt.s32.f32 %v3897
          %v4154 = vcvt.s32.f32 %v3898
          %v4155 = vcvt.s32.f32 %v3899
          %v4156 = vcvt.s32.f32 %v3900
          %v4157 = vcvt.s32.f32 %v3901
          %v4158 = vcvt.s32.f32 %v3902
          %v4159 = vcvt.s32.f32 %v3903
          %v4160 = vcvt.s32.f32 %v3904
          %v4161 = vcvt.s32.f32 %v3905
          %v4162 = vcvt.s32.f32 %v3906
          %v4163 = vcvt.s32.f32 %v3907
          %v4164 = vcvt.s32.f32 %v3908
          %v4165 = vcvt.s32.f32 %v3909
          %v4166 = vcvt.s32.f32 %v3910
          %v4167 = vcvt.s32.f32 %v3911
          %v4168 = vcvt.s32.f32 %v3912
          %v4169 = vcvt.s32.f32 %v3913
          %v4170 = vcvt.s32.f32 %v3914
          %v4171 = vcvt.s32.f32 %v3915
          %v4172 = vcvt.s32.f32 %v3916
          %v4173 = vcvt.s32.f32 %v3917
          %v4174 = vcvt.s32.f32 %v3918
          %v4175 = vcvt.s32.f32 %v3919
          %v4176 = vcvt.s32.f32 %v3920
          %v4177 = vcvt.s32.f32 %v3921
          %v4178 = vcvt.s32.f32 %v3922
          %v4179 = vcvt.s32.f32 %v3923
          %v4180 = vcvt.s32.f32 %v3924
          %v4181 = vcvt.s32.f32 %v3925
          %v4182 = vcvt.s32.f32 %v3926
          %v4183 = vcvt.s32.f32 %v3927
          %v4184 = vcvt.s32.f32 %v3928
          %v4185 = vcvt.s32.f32 %v3929
          %v4186 = vcvt.s32.f32 %v3930
          %v4187 = vcvt.s32.f32 %v3931
          %v4188 = vcvt.s32.f32 %v3932
          %v4189 = vcvt.s32.f32 %v3933
          %v4190 = vcvt.s32.f32 %v3934
          %v4191 = vcvt.s32.f32 %v3935
          %v4192 = vcvt.s32.f32 %v3936
          %v4193 = vcvt.s32.f32 %v3937
          %v4194 = vcvt.s32.f32 %v3938
          %v4195 = vcvt.s32.f32 %v3939
          %v4196 = vcvt.s32.f32 %v3940
          %v4197 = vcvt.s32.f32 %v3941
          %v4198 = vcvt.s32.f32 %v3942
          %v4199 = vcvt.s32.f32 %v3943
          %v4200 = vcvt.s32.f32 %v3944
          %v4201 = vcvt.s32.f32 %v3945
          %v4202 = vcvt.s32.f32 %v3946
          %v4203 = vcvt.s32.f32 %v3947
          %v4204 = vcvt.s32.f32 %v3948
          %v4205 = vcvt.s32.f32 %v3949
          %v4206 = vcvt.s32.f32 %v3950
          %v4207 = vcvt.s32.f32 %v3951
          %v4208 = vcvt.s32.f32 %v3952
          %v4209 = vcvt.s32.f32 %v3953
          %v4210 = vcvt.s32.f32 %v3954
          %v4211 = vcvt.s32.f32 %v3955
          %v4212 = vcvt.s32.f32 %v3956
          %v4213 = vcvt.s32.f32 %v3957
          %v4214 = vcvt.s32.f32 %v3958
          %v4215 = vcvt.s32.f32 %v3959
          %v4216 = vcvt.s32.f32 %v3960
          %v4217 = vcvt.s32.f32 %v3961
          %v4218 = vcvt.s32.f32 %v3962
          %v4219 = vcvt.s32.f32 %v3963
          %v4220 = vcvt.s32.f32 %v3964
          %v4221 = vcvt.s32.f32 %v3965
          %v4222 = vcvt.s32.f32 %v3966
          %v4223 = vcvt.s32.f32 %v3967
          %v4224 = vcvt.s32.f32 %v3968
          %v4225 = vcvt.s32.f32 %v3969
          %v4226 = vcvt.s32.f32 %v3970
          %v4227 = vcvt.s32.f32 %v3971
          %v4228 = vcvt.s32.f32 %v3972
          %v4229 = vcvt.s32.f32 %v3973
          %v4230 = vcvt.s32.f32 %v3974
          %v4231 = vcvt.s32.f32 %v3975
          %v4232 = vcvt.s32.f32 %v3976
          %v4233 = vcvt.s32.f32 %v3977
          %v4234 = vcvt.s32.f32 %v3978
          %v4235 = vcvt.s32.f32 %v3979
          %v4236 = vcvt.s32.f32 %v3980
          %v4237 = vcvt.s32.f32 %v3981
          %v4238 = vcvt.s32.f32 %v3982
          %v4239 = vcvt.s32.f32 %v3983
          %v4240 = vcvt.s32.f32 %v3984
          %v4241 = vcvt.s32.f32 %v3985
          %v4242 = vcvt.s32.f32 %v3986
          %v4243 = vcvt.s32.f32 %v3987
          %v4244 = vcvt.s32.f32 %v3988
          %v4245 = vcvt.s32.f32 %v3989
          %v4246 = vcvt.s32.f32 %v3990
          %v4247 = vcvt.s32.f32 %v3991
          %v4248 = vcvt.s32.f32 %v3992
          %v4249 = vcvt.s32.f32 %v3993
          %v4250 = vcvt.s32.f32 %v3994
          %v4251 = vcvt.s32.f32 %v3995
          %v4252 = vcvt.s32.f32 %v3996
          %v4253 = vcvt.s32.f32 %v3997
          %v4254 = vcvt.s32.f32 %v3998
          %v4255 = vcvt.s32.f32 %v3999
          %v4256 = vcvt.s32.f32 %v4000
          %v4257 = vcvt.s32.f32 %v4001
          %v4258 = vcvt.s32.f32 %v4002
          %v4259 = vcvt.s32.f32 %v4003
          %v4260 = vcvt.s32.f32 %v4004
          %v4261 = vcvt.s32.f32 %v4005
          %v4262 = vcvt.s32.f32 %v4006
          %v4263 = vcvt.s32.f32 %v4007
          %v4264 = vcvt.s32.f32 %v4008
          %v4265 = vcvt.s32.f32 %v4009
          %v4266 = vcvt.s32.f32 %v4010
          %v4267 = vcvt.s32.f32 %v4011
          %v4268 = vcvt.s32.f32 %v4012
          %v4269 = vcvt.s32.f32 %v4013
          %v4270 = vcvt.s32.f32 %v4014
          %v4271 = vcvt.s32.f32 %v4015
          %v4272 = vcvt.s32.f32 %v4016
          %v4273 = vcvt.s32.f32 %v4017
          %v4274 = vcvt.s32.f32 %v4018
          %v4275 = vcvt.s32.f32 %v4019
          %v4276 = vcvt.s32.f32 %v4020
          %v4277 = vcvt.s32.f32 %v4021
          %v4278 = vcvt.s32.f32 %v4022
          %v4279 = vcvt.s32.f32 %v4023
          %v4280 = vcvt.s32.f32 %v4024
          %v4281 = vcvt.s32.f32 %v4025
          %v4282 = vcvt.s32.f32 %v4026
          %v4283 = vcvt.s32.f32 %v4027
          %v4284 = vcvt.s32.f32 %v4028
          %v4285 = vcvt.s32.f32 %v4029
          %v4286 = vcvt.s32.f32 %v4030
          %v4287 = vcvt.s32.f32 %v4031
          %v4288 = vcvt.s32.f32 %v4032
          %v4289 = vcvt.s32.f32 %v4033
          %v4290 = vcvt.s32.f32 %v4034
          %v4291 = vcvt.s32.f32 %v4035
          %v4292 = vcvt.s32.f32 %v4036
          %v4293 = vcvt.s32.f32 %v4037
          %v4294 = vcvt.s32.f32 %v4038
          %v4295 = vcvt.s32.f32 %v4039
          %v4296 = vcvt.s32.f32 %v4040
          %v4297 = vcvt.s32.f32 %v4041
          %v4298 = vcvt.s32.f32 %v4042
          %v4299 = vcvt.s32.f32 %v4043
          %v4300 = vcvt.s32.f32 %v4044
          %v4301 = vcvt.s32.f32 %v4045
          %v4302 = vcvt.s32.f32 %v4046
          %v4303 = vcvt.s32.f32 %v4047
          %v4304 = vcvt.s32.f32 %v4048
          %v4305 = vcvt.s32.f32 %v4049
          %v4306 = vcvt.s32.f32 %v4050
          %v4307 = vcvt.s32.f32 %v4051
          %v4308 = vcvt.s32.f32 %v4052
          %v4309 = vcvt.s32.f32 %v4053
          %v4310 = vcvt.s32.f32 %v4054
          %v4311 = vcvt.s32.f32 %v4055
          %v4312 = vcvt.s32.f32 %v4056
          %v4313 = vcvt.s32.f32 %v4057
          %v4314 = vcvt.s32.f32 %v4058
          %v4315 = vcvt.s32.f32 %v4059
          %v4316 = vcvt.s32.f32 %v4060
          %v4317 = vcvt.s32.f32 %v4061
          %v4318 = vcvt.s32.f32 %v4062
          %v4319 = vcvt.s32.f32 %v4063
          %v4320 = vcvt.s32.f32 %v4064
          %v4321 = vcvt.s32.f32 %v4065
          %v4322 = vcvt.s32.f32 %v4066
          %v4323 = vcvt.s32.f32 %v4067
          %v4324 = vcvt.s32.f32 %v4068
          %v4325 = vcvt.s32.f32 %v4069
          %v4326 = vcvt.s32.f32 %v4070
          %v4327 = vcvt.s32.f32 %v4071
          %v4328 = vcvt.s32.f32 %v4072
          %v4329 = vcvt.s32.f32 %v4073
          %v4330 = vcvt.s32.f32 %v4074
          %v4331 = vcvt.s32.f32 %v4075
          %v4332 = vcvt.s32.f32 %v4076
          %v4333 = vcvt.s32.f32 %v4077
          %v4334 = vcvt.s32.f32 %v4078
          %v4335 = vcvt.s32.f32 %v4079
          %v4336 = vcvt.s32.f32 %v4080
          %v4337 = vcvt.s32.f32 %v4081
          %v4338 = vcvt.s32.f32 %v4082
          %v4339 = vcvt.s32.f32 %v4083
          %v4340 = vcvt.s32.f32 %v4084
          %v4341 = vcvt.s32.f32 %v4085
          %v4342 = vcvt.s32.f32 %v4086
          %v4343 = vcvt.s32.f32 %v4087
          %v4344 = vcvt.s32.f32 %v4088
          %v4345 = vcvt.s32.f32 %v4089
          %v4346 = vcvt.s32.f32 %v4090
          %v4347 = vcvt.s32.f32 %v4091
          %v4348 = vcvt.s32.f32 %v4092
          %v4349 = vcvt.s32.f32 %v4093
          %v4350 = vcvt.s32.f32 %v4094
          %v4351 = vcvt.s32.f32 %v4095
          %v4352 = vcvt.s32.f32 %v4096
          %v4353 = vcvt.s32.f32 %v4097
          %v4354 = vcvt.s32.f32 %v4098
          %v4355 = vcvt.s32.f32 %v4099
          %v4356 = vcvt.s32.f32 %v4100
          %v4357 = vcvt.s32.f32 %v4101
          %v4358 = vcvt.s32.f32 %v4102
          %v4359 = vcvt.s32.f32 %v4103
          %v4360 = vcvt.s32.f32 %v4104
          %v4361 = vcvt.s32.f32 %v4105
          %v4362 = vcvt.s32.f32 %v4106
          %v4363 = vcvt.s32.f32 %v4107
          %v4364 = vcvt.s32.f32 %v4108
          %v4365 = vcvt.s32.f32 %v4109
          %v4366 = vcvt.s32.f32 %v4110
          %v4367 = vcvt.s32.f32 %v4111
          %v4368 = vcvt.s32.f32 %v4112
          %v4369 = vcvt.s32.f32 %v4113
          %v4370 = vld [vmem:[%s341] sm:$0xff]
          %4371 = vmatprep.subr.mxu0 %v4115
          %4372 = vmatpush1.xpose.msra.mxu0 %v4114
          %4373 = vmatprep.subr.mxu0 %v4131
          %4374 = vmatpush1.xpose.msra.mxu0 %v4130
          %4375 = vmatprep.subr.mxu0 %v4147
          %4376 = vmatpush1.xpose.msra.mxu0 %v4146
          %4377 = vmatprep.subr.mxu0 %v4163
          %4378 = vmatpush1.xpose.msra.mxu0 %v4162
          %4379 = vmatprep.subr.mxu0 %v4179
          %4380 = vmatpush1.xpose.msra.mxu0 %v4178
          %4381 = vmatprep.subr.mxu0 %v4195
          %4382 = vmatpush1.xpose.msra.mxu0 %v4194
          %4383 = vmatprep.subr.mxu0 %v4211
          %4384 = vmatpush1.xpose.msra.mxu0 %v4210
          %4385 = vmatprep.subr.mxu0 %v4227
          %4386 = vmatpush1.xpose.msra.mxu0 %v4226
          %4387 = vmatprep.subr.mxu0 %v4243
          %4388 = vmatpush1.xpose.msra.mxu0 %v4242
          %4389 = vmatprep.subr.mxu0 %v4259
          %4390 = vmatpush1.xpose.msra.mxu0 %v4258
          %4391 = vmatprep.subr.mxu0 %v4275
          %4392 = vmatpush1.xpose.msra.mxu0 %v4274
          %4393 = vmatprep.subr.mxu0 %v4291
          %4394 = vmatpush1.xpose.msra.mxu0 %v4290
          %4395 = vmatprep.subr.mxu0 %v4307
          %4396 = vmatpush1.xpose.msra.mxu0 %v4306
          %4397 = vmatprep.subr.mxu0 %v4323
          %4398 = vmatpush1.xpose.msra.mxu0 %v4322
          %4399 = vmatprep.subr.mxu0 %v4339
          %4400 = vmatpush1.xpose.msra.mxu0 %v4338
          %4401 = vmatprep.subr.mxu0 %v4355
          %4402 = vmatpush1.xpose.msra.mxu0 %v4354
          %4403 = vmatprep.subr.mxu0 0.0
          %4404 = vmatpush1.xpose.msra.mxu0 0.0
          %4405 = vmatprep.subr.mxu0 0.0
          %4406 = vmatpush1.xpose.msra.mxu0 0.0
          %4407 = vmatprep.subr.mxu0 0.0
          %4408 = vmatpush1.xpose.msra.mxu0 0.0
          %4409 = vmatprep.subr.mxu0 0.0
          %4410 = vmatpush1.xpose.msra.mxu0 0.0
          %4411 = vmatprep.subr.mxu0 0.0
          %4412 = vmatpush1.xpose.msra.mxu0 0.0
          %4413 = vmatprep.subr.mxu0 0.0
          %4414 = vmatpush1.xpose.msra.mxu0 0.0
          %4415 = vmatprep.subr.mxu0 0.0
          %4416 = vmatpush1.xpose.msra.mxu0 0.0
          %4417 = vmatprep.subr.mxu0 0.0
          %4418 = vmatpush1.xpose.msra.mxu0 0.0
          %4419 = vmatprep.subr.mxu0 0.0
          %4420 = vmatpush1.xpose.msra.mxu0 0.0
          %4421 = vmatprep.subr.mxu0 0.0
          %4422 = vmatpush1.xpose.msra.mxu0 0.0
          %4423 = vmatprep.subr.mxu0 0.0
          %4424 = vmatpush1.xpose.msra.mxu0 0.0
          %4425 = vmatprep.subr.mxu0 0.0
          %4426 = vmatpush1.xpose.msra.mxu0 0.0
          %4427 = vmatprep.subr.mxu0 0.0
          %4428 = vmatpush1.xpose.msra.mxu0 0.0
          %4429 = vmatprep.subr.mxu0 0.0
          %4430 = vmatpush1.xpose.msra.mxu0 0.0
          %4431 = vmatprep.subr.mxu0 0.0
          %4432 = vmatpush1.xpose.msra.mxu0 0.0
          %4433 = vmatprep.subr.mxu0 0.0
          %4434 = vmatpush1.xpose.msra.mxu0 0.0
          %4435 = vmatprep.mubr.f32.mxu0 %v3432
          %4436 = vmatmul.mubr.f32.gmra.mrb[0].mxu0 %v3431
          %v4437 = vpop.f32.mrb[0].mxu0
          %v4438 = vadd.f32 0.0, %v4437
          %v4439 = vpop.f32.mrb[0].mxu0
          %4440 = vdwg.mxu0
          %4441 = vmatprep.subr.mxu0 %v4117
          %4442 = vmatpush1.xpose.msra.mxu0 %v4116
          %4443 = vmatprep.subr.mxu0 %v4133
          %4444 = vmatpush1.xpose.msra.mxu0 %v4132
          %4445 = vmatprep.subr.mxu0 %v4149
          %4446 = vmatpush1.xpose.msra.mxu0 %v4148
          %4447 = vmatprep.subr.mxu0 %v4165
          %4448 = vmatpush1.xpose.msra.mxu0 %v4164
          %4449 = vmatprep.subr.mxu0 %v4181
          %4450 = vmatpush1.xpose.msra.mxu0 %v4180
          %4451 = vmatprep.subr.mxu0 %v4197
          %4452 = vmatpush1.xpose.msra.mxu0 %v4196
          %4453 = vmatprep.subr.mxu0 %v4213
          %4454 = vmatpush1.xpose.msra.mxu0 %v4212
          %4455 = vmatprep.subr.mxu0 %v4229
          %4456 = vmatpush1.xpose.msra.mxu0 %v4228
          %4457 = vmatprep.subr.mxu0 %v4245
          %4458 = vmatpush1.xpose.msra.mxu0 %v4244
          %4459 = vmatprep.subr.mxu0 %v4261
          %4460 = vmatpush1.xpose.msra.mxu0 %v4260
          %4461 = vmatprep.subr.mxu0 %v4277
          %4462 = vmatpush1.xpose.msra.mxu0 %v4276
          %4463 = vmatprep.subr.mxu0 %v4293
          %4464 = vmatpush1.xpose.msra.mxu0 %v4292
          %4465 = vmatprep.subr.mxu0 %v4309
          %4466 = vmatpush1.xpose.msra.mxu0 %v4308
          %4467 = vmatprep.subr.mxu0 %v4325
          %4468 = vmatpush1.xpose.msra.mxu0 %v4324
          %4469 = vmatprep.subr.mxu0 %v4341
          %4470 = vmatpush1.xpose.msra.mxu0 %v4340
          %4471 = vmatprep.subr.mxu0 %v4357
          %4472 = vmatpush1.xpose.msra.mxu0 %v4356
          %4473 = vmatprep.subr.mxu0 0.0
          %4474 = vmatpush1.xpose.msra.mxu0 0.0
          %4475 = vmatprep.subr.mxu0 0.0
          %4476 = vmatpush1.xpose.msra.mxu0 0.0
          %4477 = vmatprep.subr.mxu0 0.0
          %4478 = vmatpush1.xpose.msra.mxu0 0.0
          %4479 = vmatprep.subr.mxu0 0.0
          %4480 = vmatpush1.xpose.msra.mxu0 0.0
          %4481 = vmatprep.subr.mxu0 0.0
          %4482 = vmatpush1.xpose.msra.mxu0 0.0
          %4483 = vmatprep.subr.mxu0 0.0
          %4484 = vmatpush1.xpose.msra.mxu0 0.0
          %4485 = vmatprep.subr.mxu0 0.0
          %4486 = vmatpush1.xpose.msra.mxu0 0.0
          %4487 = vmatprep.subr.mxu0 0.0
          %4488 = vmatpush1.xpose.msra.mxu0 0.0
          %4489 = vmatprep.subr.mxu0 0.0
          %4490 = vmatpush1.xpose.msra.mxu0 0.0
          %4491 = vmatprep.subr.mxu0 0.0
          %4492 = vmatpush1.xpose.msra.mxu0 0.0
          %4493 = vmatprep.subr.mxu0 0.0
          %4494 = vmatpush1.xpose.msra.mxu0 0.0
          %4495 = vmatprep.subr.mxu0 0.0
          %4496 = vmatpush1.xpose.msra.mxu0 0.0
          %4497 = vmatprep.subr.mxu0 0.0
          %4498 = vmatpush1.xpose.msra.mxu0 0.0
          %4499 = vmatprep.subr.mxu0 0.0
          %4500 = vmatpush1.xpose.msra.mxu0 0.0
          %4501 = vmatprep.subr.mxu0 0.0
          %4502 = vmatpush1.xpose.msra.mxu0 0.0
          %4503 = vmatprep.subr.mxu0 0.0
          %4504 = vmatpush1.xpose.msra.mxu0 0.0
          %4505 = vmatprep.mubr.f32.mxu0 %v3434
          %4506 = vmatmul.mubr.f32.gmra.mrb[0].mxu0 %v3433
          %v4507 = vpop.f32.mrb[0].mxu0
          %v4508 = vadd.f32 %v4438, %v4507
          %v4509 = vpop.f32.mrb[0].mxu0
          %4510 = vdwg.mxu0
          %4511 = vmatprep.subr.mxu0 %v4119
          %4512 = vmatpush1.xpose.msra.mxu0 %v4118
          %4513 = vmatprep.subr.mxu0 %v4135
          %4514 = vmatpush1.xpose.msra.mxu0 %v4134
          %4515 = vmatprep.subr.mxu0 %v4151
          %4516 = vmatpush1.xpose.msra.mxu0 %v4150
          %4517 = vmatprep.subr.mxu0 %v4167
          %4518 = vmatpush1.xpose.msra.mxu0 %v4166
          %4519 = vmatprep.subr.mxu0 %v4183
          %4520 = vmatpush1.xpose.msra.mxu0 %v4182
          %4521 = vmatprep.subr.mxu0 %v4199
          %4522 = vmatpush1.xpose.msra.mxu0 %v4198
          %4523 = vmatprep.subr.mxu0 %v4215
          %4524 = vmatpush1.xpose.msra.mxu0 %v4214
          %4525 = vmatprep.subr.mxu0 %v4231
          %4526 = vmatpush1.xpose.msra.mxu0 %v4230
          %4527 = vmatprep.subr.mxu0 %v4247
          %4528 = vmatpush1.xpose.msra.mxu0 %v4246
          %4529 = vmatprep.subr.mxu0 %v4263
          %4530 = vmatpush1.xpose.msra.mxu0 %v4262
          %4531 = vmatprep.subr.mxu0 %v4279
          %4532 = vmatpush1.xpose.msra.mxu0 %v4278
          %4533 = vmatprep.subr.mxu0 %v4295
          %4534 = vmatpush1.xpose.msra.mxu0 %v4294
          %4535 = vmatprep.subr.mxu0 %v4311
          %4536 = vmatpush1.xpose.msra.mxu0 %v4310
          %4537 = vmatprep.subr.mxu0 %v4327
          %4538 = vmatpush1.xpose.msra.mxu0 %v4326
          %4539 = vmatprep.subr.mxu0 %v4343
          %4540 = vmatpush1.xpose.msra.mxu0 %v4342
          %4541 = vmatprep.subr.mxu0 %v4359
          %4542 = vmatpush1.xpose.msra.mxu0 %v4358
          %4543 = vmatprep.subr.mxu0 0.0
          %4544 = vmatpush1.xpose.msra.mxu0 0.0
          %4545 = vmatprep.subr.mxu0 0.0
          %4546 = vmatpush1.xpose.msra.mxu0 0.0
          %4547 = vmatprep.subr.mxu0 0.0
          %4548 = vmatpush1.xpose.msra.mxu0 0.0
          %4549 = vmatprep.subr.mxu0 0.0
          %4550 = vmatpush1.xpose.msra.mxu0 0.0
          %4551 = vmatprep.subr.mxu0 0.0
          %4552 = vmatpush1.xpose.msra.mxu0 0.0
          %4553 = vmatprep.subr.mxu0 0.0
          %4554 = vmatpush1.xpose.msra.mxu0 0.0
          %4555 = vmatprep.subr.mxu0 0.0
          %4556 = vmatpush1.xpose.msra.mxu0 0.0
          %4557 = vmatprep.subr.mxu0 0.0
          %4558 = vmatpush1.xpose.msra.mxu0 0.0
          %4559 = vmatprep.subr.mxu0 0.0
          %4560 = vmatpush1.xpose.msra.mxu0 0.0
          %4561 = vmatprep.subr.mxu0 0.0
          %4562 = vmatpush1.xpose.msra.mxu0 0.0
          %4563 = vmatprep.subr.mxu0 0.0
          %4564 = vmatpush1.xpose.msra.mxu0 0.0
          %4565 = vmatprep.subr.mxu0 0.0
          %4566 = vmatpush1.xpose.msra.mxu0 0.0
          %4567 = vmatprep.subr.mxu0 0.0
          %4568 = vmatpush1.xpose.msra.mxu0 0.0
          %4569 = vmatprep.subr.mxu0 0.0
          %4570 = vmatpush1.xpose.msra.mxu0 0.0
          %4571 = vmatprep.subr.mxu0 0.0
          %4572 = vmatpush1.xpose.msra.mxu0 0.0
          %4573 = vmatprep.subr.mxu0 0.0
          %4574 = vmatpush1.xpose.msra.mxu0 0.0
          %4575 = vmatprep.mubr.f32.mxu0 %v3436
          %4576 = vmatmul.mubr.f32.gmra.mrb[0].mxu0 %v3435
          %v4577 = vpop.f32.mrb[0].mxu0
          %v4578 = vadd.f32 %v4508, %v4577
          %v4579 = vpop.f32.mrb[0].mxu0
          %4580 = vdwg.mxu0
          %4581 = vmatprep.subr.mxu0 %v4121
          %4582 = vmatpush1.xpose.msra.mxu0 %v4120
          %4583 = vmatprep.subr.mxu0 %v4137
          %4584 = vmatpush1.xpose.msra.mxu0 %v4136
          %4585 = vmatprep.subr.mxu0 %v4153
          %4586 = vmatpush1.xpose.msra.mxu0 %v4152
          %4587 = vmatprep.subr.mxu0 %v4169
          %4588 = vmatpush1.xpose.msra.mxu0 %v4168
          %4589 = vmatprep.subr.mxu0 %v4185
          %4590 = vmatpush1.xpose.msra.mxu0 %v4184
          %4591 = vmatprep.subr.mxu0 %v4201
          %4592 = vmatpush1.xpose.msra.mxu0 %v4200
          %4593 = vmatprep.subr.mxu0 %v4217
          %4594 = vmatpush1.xpose.msra.mxu0 %v4216
          %4595 = vmatprep.subr.mxu0 %v4233
          %4596 = vmatpush1.xpose.msra.mxu0 %v4232
          %4597 = vmatprep.subr.mxu0 %v4249
          %4598 = vmatpush1.xpose.msra.mxu0 %v4248
          %4599 = vmatprep.subr.mxu0 %v4265
          %4600 = vmatpush1.xpose.msra.mxu0 %v4264
          %4601 = vmatprep.subr.mxu0 %v4281
          %4602 = vmatpush1.xpose.msra.mxu0 %v4280
          %4603 = vmatprep.subr.mxu0 %v4297
          %4604 = vmatpush1.xpose.msra.mxu0 %v4296
          %4605 = vmatprep.subr.mxu0 %v4313
          %4606 = vmatpush1.xpose.msra.mxu0 %v4312
          %4607 = vmatprep.subr.mxu0 %v4329
          %4608 = vmatpush1.xpose.msra.mxu0 %v4328
          %4609 = vmatprep.subr.mxu0 %v4345
          %4610 = vmatpush1.xpose.msra.mxu0 %v4344
          %4611 = vmatprep.subr.mxu0 %v4361
          %4612 = vmatpush1.xpose.msra.mxu0 %v4360
          %4613 = vmatprep.subr.mxu0 0.0
          %4614 = vmatpush1.xpose.msra.mxu0 0.0
          %4615 = vmatprep.subr.mxu0 0.0
          %4616 = vmatpush1.xpose.msra.mxu0 0.0
          %4617 = vmatprep.subr.mxu0 0.0
          %4618 = vmatpush1.xpose.msra.mxu0 0.0
          %4619 = vmatprep.subr.mxu0 0.0
          %4620 = vmatpush1.xpose.msra.mxu0 0.0
          %4621 = vmatprep.subr.mxu0 0.0
          %4622 = vmatpush1.xpose.msra.mxu0 0.0
          %4623 = vmatprep.subr.mxu0 0.0
          %4624 = vmatpush1.xpose.msra.mxu0 0.0
          %4625 = vmatprep.subr.mxu0 0.0
          %4626 = vmatpush1.xpose.msra.mxu0 0.0
          %4627 = vmatprep.subr.mxu0 0.0
          %4628 = vmatpush1.xpose.msra.mxu0 0.0
          %4629 = vmatprep.subr.mxu0 0.0
          %4630 = vmatpush1.xpose.msra.mxu0 0.0
          %4631 = vmatprep.subr.mxu0 0.0
          %4632 = vmatpush1.xpose.msra.mxu0 0.0
          %4633 = vmatprep.subr.mxu0 0.0
          %4634 = vmatpush1.xpose.msra.mxu0 0.0
          %4635 = vmatprep.subr.mxu0 0.0
          %4636 = vmatpush1.xpose.msra.mxu0 0.0
          %4637 = vmatprep.subr.mxu0 0.0
          %4638 = vmatpush1.xpose.msra.mxu0 0.0
          %4639 = vmatprep.subr.mxu0 0.0
          %4640 = vmatpush1.xpose.msra.mxu0 0.0
          %4641 = vmatprep.subr.mxu0 0.0
          %4642 = vmatpush1.xpose.msra.mxu0 0.0
          %4643 = vmatprep.subr.mxu0 0.0
          %4644 = vmatpush1.xpose.msra.mxu0 0.0
          %4645 = vmatprep.mubr.f32.mxu0 %v3438
          %4646 = vmatmul.mubr.f32.gmra.mrb[0].mxu0 %v3437
          %v4647 = vpop.f32.mrb[0].mxu0
          %v4648 = vadd.f32 %v4578, %v4647
          %v4649 = vpop.f32.mrb[0].mxu0
          %4650 = vdwg.mxu0
          %4651 = vmatprep.subr.mxu0 %v4123
          %4652 = vmatpush1.xpose.msra.mxu0 %v4122
          %4653 = vmatprep.subr.mxu0 %v4139
          %4654 = vmatpush1.xpose.msra.mxu0 %v4138
          %4655 = vmatprep.subr.mxu0 %v4155
          %4656 = vmatpush1.xpose.msra.mxu0 %v4154
          %4657 = vmatprep.subr.mxu0 %v4171
          %4658 = vmatpush1.xpose.msra.mxu0 %v4170
          %4659 = vmatprep.subr.mxu0 %v4187
          %4660 = vmatpush1.xpose.msra.mxu0 %v4186
          %4661 = vmatprep.subr.mxu0 %v4203
          %4662 = vmatpush1.xpose.msra.mxu0 %v4202
          %4663 = vmatprep.subr.mxu0 %v4219
          %4664 = vmatpush1.xpose.msra.mxu0 %v4218
          %4665 = vmatprep.subr.mxu0 %v4235
          %4666 = vmatpush1.xpose.msra.mxu0 %v4234
          %4667 = vmatprep.subr.mxu0 %v4251
          %4668 = vmatpush1.xpose.msra.mxu0 %v4250
          %4669 = vmatprep.subr.mxu0 %v4267
          %4670 = vmatpush1.xpose.msra.mxu0 %v4266
          %4671 = vmatprep.subr.mxu0 %v4283
          %4672 = vmatpush1.xpose.msra.mxu0 %v4282
          %4673 = vmatprep.subr.mxu0 %v4299
          %4674 = vmatpush1.xpose.msra.mxu0 %v4298
          %4675 = vmatprep.subr.mxu0 %v4315
          %4676 = vmatpush1.xpose.msra.mxu0 %v4314
          %4677 = vmatprep.subr.mxu0 %v4331
          %4678 = vmatpush1.xpose.msra.mxu0 %v4330
          %4679 = vmatprep.subr.mxu0 %v4347
          %4680 = vmatpush1.xpose.msra.mxu0 %v4346
          %4681 = vmatprep.subr.mxu0 %v4363
          %4682 = vmatpush1.xpose.msra.mxu0 %v4362
          %4683 = vmatprep.subr.mxu0 0.0
          %4684 = vmatpush1.xpose.msra.mxu0 0.0
          %4685 = vmatprep.subr.mxu0 0.0
          %4686 = vmatpush1.xpose.msra.mxu0 0.0
          %4687 = vmatprep.subr.mxu0 0.0
          %4688 = vmatpush1.xpose.msra.mxu0 0.0
          %4689 = vmatprep.subr.mxu0 0.0
          %4690 = vmatpush1.xpose.msra.mxu0 0.0
          %4691 = vmatprep.subr.mxu0 0.0
          %4692 = vmatpush1.xpose.msra.mxu0 0.0
          %4693 = vmatprep.subr.mxu0 0.0
          %4694 = vmatpush1.xpose.msra.mxu0 0.0
          %4695 = vmatprep.subr.mxu0 0.0
          %4696 = vmatpush1.xpose.msra.mxu0 0.0
          %4697 = vmatprep.subr.mxu0 0.0
          %4698 = vmatpush1.xpose.msra.mxu0 0.0
          %4699 = vmatprep.subr.mxu0 0.0
          %4700 = vmatpush1.xpose.msra.mxu0 0.0
          %4701 = vmatprep.subr.mxu0 0.0
          %4702 = vmatpush1.xpose.msra.mxu0 0.0
          %4703 = vmatprep.subr.mxu0 0.0
          %4704 = vmatpush1.xpose.msra.mxu0 0.0
          %4705 = vmatprep.subr.mxu0 0.0
          %4706 = vmatpush1.xpose.msra.mxu0 0.0
          %4707 = vmatprep.subr.mxu0 0.0
          %4708 = vmatpush1.xpose.msra.mxu0 0.0
          %4709 = vmatprep.subr.mxu0 0.0
          %4710 = vmatpush1.xpose.msra.mxu0 0.0
          %4711 = vmatprep.subr.mxu0 0.0
          %4712 = vmatpush1.xpose.msra.mxu0 0.0
          %4713 = vmatprep.subr.mxu0 0.0
          %4714 = vmatpush1.xpose.msra.mxu0 0.0
          %4715 = vmatprep.mubr.f32.mxu0 %v3440
          %4716 = vmatmul.mubr.f32.gmra.mrb[0].mxu0 %v3439
          %v4717 = vpop.f32.mrb[0].mxu0
          %v4718 = vadd.f32 %v4648, %v4717
          %v4719 = vpop.f32.mrb[0].mxu0
          %4720 = vdwg.mxu0
          %4721 = vmatprep.subr.mxu0 %v4125
          %4722 = vmatpush1.xpose.msra.mxu0 %v4124
          %4723 = vmatprep.subr.mxu0 %v4141
          %4724 = vmatpush1.xpose.msra.mxu0 %v4140
          %4725 = vmatprep.subr.mxu0 %v4157
          %4726 = vmatpush1.xpose.msra.mxu0 %v4156
          %4727 = vmatprep.subr.mxu0 %v4173
          %4728 = vmatpush1.xpose.msra.mxu0 %v4172
          %4729 = vmatprep.subr.mxu0 %v4189
          %4730 = vmatpush1.xpose.msra.mxu0 %v4188
          %4731 = vmatprep.subr.mxu0 %v4205
          %4732 = vmatpush1.xpose.msra.mxu0 %v4204
          %4733 = vmatprep.subr.mxu0 %v4221
          %4734 = vmatpush1.xpose.msra.mxu0 %v4220
          %4735 = vmatprep.subr.mxu0 %v4237
          %4736 = vmatpush1.xpose.msra.mxu0 %v4236
          %4737 = vmatprep.subr.mxu0 %v4253
          %4738 = vmatpush1.xpose.msra.mxu0 %v4252
          %4739 = vmatprep.subr.mxu0 %v4269
          %4740 = vmatpush1.xpose.msra.mxu0 %v4268
          %4741 = vmatprep.subr.mxu0 %v4285
          %4742 = vmatpush1.xpose.msra.mxu0 %v4284
          %4743 = vmatprep.subr.mxu0 %v4301
          %4744 = vmatpush1.xpose.msra.mxu0 %v4300
          %4745 = vmatprep.subr.mxu0 %v4317
          %4746 = vmatpush1.xpose.msra.mxu0 %v4316
          %4747 = vmatprep.subr.mxu0 %v4333
          %4748 = vmatpush1.xpose.msra.mxu0 %v4332
          %4749 = vmatprep.subr.mxu0 %v4349
          %4750 = vmatpush1.xpose.msra.mxu0 %v4348
          %4751 = vmatprep.subr.mxu0 %v4365
          %4752 = vmatpush1.xpose.msra.mxu0 %v4364
          %4753 = vmatprep.subr.mxu0 0.0
          %4754 = vmatpush1.xpose.msra.mxu0 0.0
          %4755 = vmatprep.subr.mxu0 0.0
          %4756 = vmatpush1.xpose.msra.mxu0 0.0
          %4757 = vmatprep.subr.mxu0 0.0
          %4758 = vmatpush1.xpose.msra.mxu0 0.0
          %4759 = vmatprep.subr.mxu0 0.0
          %4760 = vmatpush1.xpose.msra.mxu0 0.0
          %4761 = vmatprep.subr.mxu0 0.0
          %4762 = vmatpush1.xpose.msra.mxu0 0.0
          %4763 = vmatprep.subr.mxu0 0.0
          %4764 = vmatpush1.xpose.msra.mxu0 0.0
          %4765 = vmatprep.subr.mxu0 0.0
          %4766 = vmatpush1.xpose.msra.mxu0 0.0
          %4767 = vmatprep.subr.mxu0 0.0
          %4768 = vmatpush1.xpose.msra.mxu0 0.0
          %4769 = vmatprep.subr.mxu0 0.0
          %4770 = vmatpush1.xpose.msra.mxu0 0.0
          %4771 = vmatprep.subr.mxu0 0.0
          %4772 = vmatpush1.xpose.msra.mxu0 0.0
          %4773 = vmatprep.subr.mxu0 0.0
          %4774 = vmatpush1.xpose.msra.mxu0 0.0
          %4775 = vmatprep.subr.mxu0 0.0
          %4776 = vmatpush1.xpose.msra.mxu0 0.0
          %4777 = vmatprep.subr.mxu0 0.0
          %4778 = vmatpush1.xpose.msra.mxu0 0.0
          %4779 = vmatprep.subr.mxu0 0.0
          %4780 = vmatpush1.xpose.msra.mxu0 0.0
          %4781 = vmatprep.subr.mxu0 0.0
          %4782 = vmatpush1.xpose.msra.mxu0 0.0
          %4783 = vmatprep.subr.mxu0 0.0
          %4784 = vmatpush1.xpose.msra.mxu0 0.0
          %4785 = vmatprep.mubr.f32.mxu0 %v3442
          %4786 = vmatmul.mubr.f32.gmra.mrb[0].mxu0 %v3441
          %v4787 = vpop.f32.mrb[0].mxu0
          %v4788 = vadd.f32 %v4718, %v4787
          %v4789 = vpop.f32.mrb[0].mxu0
          %4790 = vdwg.mxu0
          %4791 = vmatprep.subr.mxu0 %v4127
          %4792 = vmatpush1.xpose.msra.mxu0 %v4126
          %4793 = vmatprep.subr.mxu0 %v4143
          %4794 = vmatpush1.xpose.msra.mxu0 %v4142
          %4795 = vmatprep.subr.mxu0 %v4159
          %4796 = vmatpush1.xpose.msra.mxu0 %v4158
          %4797 = vmatprep.subr.mxu0 %v4175
          %4798 = vmatpush1.xpose.msra.mxu0 %v4174
          %4799 = vmatprep.subr.mxu0 %v4191
          %4800 = vmatpush1.xpose.msra.mxu0 %v4190
          %4801 = vmatprep.subr.mxu0 %v4207
          %4802 = vmatpush1.xpose.msra.mxu0 %v4206
          %4803 = vmatprep.subr.mxu0 %v4223
          %4804 = vmatpush1.xpose.msra.mxu0 %v4222
          %4805 = vmatprep.subr.mxu0 %v4239
          %4806 = vmatpush1.xpose.msra.mxu0 %v4238
          %4807 = vmatprep.subr.mxu0 %v4255
          %4808 = vmatpush1.xpose.msra.mxu0 %v4254
          %4809 = vmatprep.subr.mxu0 %v4271
          %4810 = vmatpush1.xpose.msra.mxu0 %v4270
          %4811 = vmatprep.subr.mxu0 %v4287
          %4812 = vmatpush1.xpose.msra.mxu0 %v4286
          %4813 = vmatprep.subr.mxu0 %v4303
          %4814 = vmatpush1.xpose.msra.mxu0 %v4302
          %4815 = vmatprep.subr.mxu0 %v4319
          %4816 = vmatpush1.xpose.msra.mxu0 %v4318
          %4817 = vmatprep.subr.mxu0 %v4335
          %4818 = vmatpush1.xpose.msra.mxu0 %v4334
          %4819 = vmatprep.subr.mxu0 %v4351
          %4820 = vmatpush1.xpose.msra.mxu0 %v4350
          %4821 = vmatprep.subr.mxu0 %v4367
          %4822 = vmatpush1.xpose.msra.mxu0 %v4366
          %4823 = vmatprep.subr.mxu0 0.0
          %4824 = vmatpush1.xpose.msra.mxu0 0.0
          %4825 = vmatprep.subr.mxu0 0.0
          %4826 = vmatpush1.xpose.msra.mxu0 0.0
          %4827 = vmatprep.subr.mxu0 0.0
          %4828 = vmatpush1.xpose.msra.mxu0 0.0
          %4829 = vmatprep.subr.mxu0 0.0
          %4830 = vmatpush1.xpose.msra.mxu0 0.0
          %4831 = vmatprep.subr.mxu0 0.0
          %4832 = vmatpush1.xpose.msra.mxu0 0.0
          %4833 = vmatprep.subr.mxu0 0.0
          %4834 = vmatpush1.xpose.msra.mxu0 0.0
          %4835 = vmatprep.subr.mxu0 0.0
          %4836 = vmatpush1.xpose.msra.mxu0 0.0
          %4837 = vmatprep.subr.mxu0 0.0
          %4838 = vmatpush1.xpose.msra.mxu0 0.0
          %4839 = vmatprep.subr.mxu0 0.0
          %4840 = vmatpush1.xpose.msra.mxu0 0.0
          %4841 = vmatprep.subr.mxu0 0.0
          %4842 = vmatpush1.xpose.msra.mxu0 0.0
          %4843 = vmatprep.subr.mxu0 0.0
          %4844 = vmatpush1.xpose.msra.mxu0 0.0
          %4845 = vmatprep.subr.mxu0 0.0
          %4846 = vmatpush1.xpose.msra.mxu0 0.0
          %4847 = vmatprep.subr.mxu0 0.0
          %4848 = vmatpush1.xpose.msra.mxu0 0.0
          %4849 = vmatprep.subr.mxu0 0.0
          %4850 = vmatpush1.xpose.msra.mxu0 0.0
          %4851 = vmatprep.subr.mxu0 0.0
          %4852 = vmatpush1.xpose.msra.mxu0 0.0
          %4853 = vmatprep.subr.mxu0 0.0
          %4854 = vmatpush1.xpose.msra.mxu0 0.0
          %4855 = vmatprep.mubr.f32.mxu0 %v3444
          %4856 = vmatmul.mubr.f32.gmra.mrb[0].mxu0 %v3443
          %v4857 = vpop.f32.mrb[0].mxu0
          %v4858 = vadd.f32 %v4788, %v4857
          %v4859 = vpop.f32.mrb[0].mxu0
          %4860 = vdwg.mxu0
          %4861 = vmatprep.subr.mxu0 %v4129
          %4862 = vmatpush1.xpose.msra.mxu0 %v4128
          %4863 = vmatprep.subr.mxu0 %v4145
          %4864 = vmatpush1.xpose.msra.mxu0 %v4144
          %4865 = vmatprep.subr.mxu0 %v4161
          %4866 = vmatpush1.xpose.msra.mxu0 %v4160
          %4867 = vmatprep.subr.mxu0 %v4177
          %4868 = vmatpush1.xpose.msra.mxu0 %v4176
          %4869 = vmatprep.subr.mxu0 %v4193
          %4870 = vmatpush1.xpose.msra.mxu0 %v4192
          %4871 = vmatprep.subr.mxu0 %v4209
          %4872 = vmatpush1.xpose.msra.mxu0 %v4208
          %4873 = vmatprep.subr.mxu0 %v4225
          %4874 = vmatpush1.xpose.msra.mxu0 %v4224
          %4875 = vmatprep.subr.mxu0 %v4241
          %4876 = vmatpush1.xpose.msra.mxu0 %v4240
          %4877 = vmatprep.subr.mxu0 %v4257
          %4878 = vmatpush1.xpose.msra.mxu0 %v4256
          %4879 = vmatprep.subr.mxu0 %v4273
          %4880 = vmatpush1.xpose.msra.mxu0 %v4272
          %4881 = vmatprep.subr.mxu0 %v4289
          %4882 = vmatpush1.xpose.msra.mxu0 %v4288
          %4883 = vmatprep.subr.mxu0 %v4305
          %4884 = vmatpush1.xpose.msra.mxu0 %v4304
          %4885 = vmatprep.subr.mxu0 %v4321
          %4886 = vmatpush1.xpose.msra.mxu0 %v4320
          %4887 = vmatprep.subr.mxu0 %v4337
          %4888 = vmatpush1.xpose.msra.mxu0 %v4336
          %4889 = vmatprep.subr.mxu0 %v4353
          %4890 = vmatpush1.xpose.msra.mxu0 %v4352
          %4891 = vmatprep.subr.mxu0 %v4369
          %4892 = vmatpush1.xpose.msra.mxu0 %v4368
          %4893 = vmatprep.subr.mxu0 0.0
          %4894 = vmatpush1.xpose.msra.mxu0 0.0
          %4895 = vmatprep.subr.mxu0 0.0
          %4896 = vmatpush1.xpose.msra.mxu0 0.0
          %4897 = vmatprep.subr.mxu0 0.0
          %4898 = vmatpush1.xpose.msra.mxu0 0.0
          %4899 = vmatprep.subr.mxu0 0.0
          %4900 = vmatpush1.xpose.msra.mxu0 0.0
          %4901 = vmatprep.subr.mxu0 0.0
          %4902 = vmatpush1.xpose.msra.mxu0 0.0
          %4903 = vmatprep.subr.mxu0 0.0
          %4904 = vmatpush1.xpose.msra.mxu0 0.0
          %4905 = vmatprep.subr.mxu0 0.0
          %4906 = vmatpush1.xpose.msra.mxu0 0.0
          %4907 = vmatprep.subr.mxu0 0.0
          %4908 = vmatpush1.xpose.msra.mxu0 0.0
          %4909 = vmatprep.subr.mxu0 0.0
          %4910 = vmatpush1.xpose.msra.mxu0 0.0
          %4911 = vmatprep.subr.mxu0 0.0
          %4912 = vmatpush1.xpose.msra.mxu0 0.0
          %4913 = vmatprep.subr.mxu0 0.0
          %4914 = vmatpush1.xpose.msra.mxu0 0.0
          %4915 = vmatprep.subr.mxu0 0.0
          %4916 = vmatpush1.xpose.msra.mxu0 0.0
          %4917 = vmatprep.subr.mxu0 0.0
          %4918 = vmatpush1.xpose.msra.mxu0 0.0
          %4919 = vmatprep.subr.mxu0 0.0
          %4920 = vmatpush1.xpose.msra.mxu0 0.0
          %4921 = vmatprep.subr.mxu0 0.0
          %4922 = vmatpush1.xpose.msra.mxu0 0.0
          %4923 = vmatprep.subr.mxu0 0.0
          %4924 = vmatpush1.xpose.msra.mxu0 0.0
          %4925 = vmatprep.mubr.f32.mxu0 %v3446
          %4926 = vmatmul.mubr.f32.gmra.mrb[0].mxu0 %v3445
          %v4927 = vpop.f32.mrb[0].mxu0
          %v4928 = vadd.f32 %v4858, %v4927
          %v4929 = vpop.f32.mrb[0].mxu0
          %4930 = vdwg.mxu0
          %v4931 = vadd.f32 %v4370, %v4928
          %4932 = vst [vmem:[%s341] sm:$0xff] %v4931
        $region56: #{tpu_custom_call.1} parent=43 // pred_fallthru
          _
        %s4933 = sand.u32 %s207, 1
        %s4934 = scalar_lea.sflag [#allocation7], %s4933
        %s4935 = sand.u32 %s207, 1
        %s4936 = smul.addr %s4935, 8
        %s4937 = scalar_lea.vmem [#allocation8], %s4936
        // Predicated region
        $region57: #{tpu_custom_call.1} parent=43 // pred_check
          %p4938 = pneg %p217
        $region58: #{tpu_custom_call.1} parent=43 // pred_check_branch
          %4940 = sbr.rel (%p4938) target = $region60
        $region59: #{tpu_custom_call.1} parent=43 // pred_region
          %s4942 = ssub.s32 128, 128
          %4943 = vsyncadd %s4934, %s4942
          %s4944 = smul.addr %s39, 128
          %s4945 = scalar_lea.hbm %s8, %s4944
          %s4947 = sshll.u32 %s4937, 4
          %s4948 = int_to_ptr.vmem [resolvable:$true] %s4947
          %4950 = dma.vmem_to_hbm [thread:$0]  %s4948, 128, %s4945, %s4934
        $region60: #{tpu_custom_call.1} parent=43 // pred_fallthru
          _
      $region44: #{tpu_custom_call.1} parent=5 // pred_fallthru
        _
      %p4951 = scmp.le.s32.totalorder 2, %s30
      // Predicated region
      $region61: #{tpu_custom_call.1} parent=5 // pred_check
        %p4952 = pneg %p4951
      $region62: #{tpu_custom_call.1} parent=5 // pred_check_branch
        %4954 = sbr.rel (%p4952) target = $region64
      $region63: #{tpu_custom_call.1} parent=5 // pred_region
        %s4955 = ssub.s32 %s30, 2
        // Predicated region
        $region65: #{tpu_custom_call.1} parent=63 // pred_check
          %p4956 = pneg %p223
        $region66: #{tpu_custom_call.1} parent=63 // pred_check_branch
          %4958 = sbr.rel (%p4956) target = $region68
        $region67: #{tpu_custom_call.1} parent=63 // pred_region
          %s4959 = sand.u32 %s208, 1
          %s4960 = scalar_lea.sflag [#allocation7], %s4959
          %s4961 = sand.u32 %s208, 1
          %s4962 = smul.addr %s4961, 8
          %s4963 = scalar_lea.vmem [#allocation8], %s4962
          %4964 = dma.done %s4960, 128
        $region68: #{tpu_custom_call.1} parent=63 // pred_fallthru
          _
      $region64: #{tpu_custom_call.1} parent=5 // pred_fallthru
        _
    $region6: #{tpu_custom_call.1} parent=1 // loop_footer
      %s34 = sadd.s32 1, %s30
    $region7: #{tpu_custom_call.1} parent=1 // loop_footer_branch
      %29 = sbr.rel target = $region3
    $region8: #{tpu_custom_call.1} parent=1 // loop_exit
      _
    %4965 = vsyncpa [#allocation6], 1
    %s4966 = scalar_lea.sflag [#allocation6], 1
    %4967 = vsyncpa %s4966, 1
    %4968 = vsyncpa [#allocation7], 1
    %s4969 = scalar_lea.sflag [#allocation7], 1
    %4970 = vsyncpa %s4969, 1

</llo_original>
